<compile_context>
chip_gen: v5e
topology: v5e:2x2
jax: 0.10.0
libtpu: 0.0.40
codegen_flags: <defaults>
</compile_context>

<pallas_src>
import functools

import jax
import jax.numpy as jnp
import numpy as np
from jax.experimental import pallas as pl
from jax.experimental.pallas import tpu as pltpu


def _round_up(v, m):
    return ((v + m - 1) // m) * m


def _pad2(w, rows, cols):
    return jnp.pad(w, ((0, rows - w.shape[0]), (0, cols - w.shape[1])))


def _fuse_kernel(
    xi_ref, xj_ref, ai_ref, aj_ref, x_ref,          # per-edge / per-node streams
    w1_ref, w2_ref, w3_ref, wa_ref, wb_ref, wl1_ref,  # padded weight matrices
    rows_ref,                                        # packed (8, H_pad) f32 bias / wl2 rows
    sc_ref,                                          # SMEM (3,): wf1, wf2, folded bias
    out_ref,
    acc_ref,                                         # VMEM (edge_tile, C_pad) f32 scratch
    *, c_idx,
):
    f32 = jnp.float32
    k = pl.program_id(1)

    @pl.when(k == 0)
    def _():
        acc_ref[...] = jnp.zeros_like(acc_ref)

    # common-neighbor rows for this N tile; one MXU matmul gives both cn@x and cn_score
    # (x has an all-ones column at index c_idx).
    cn = ai_ref[...] * aj_ref[...]                                   # (ET, NT)
    acc_ref[...] += jnp.dot(cn, x_ref[...], preferred_element_type=f32)

    @pl.when(k == pl.num_programs(1) - 1)
    def _():
        relu = lambda v: jnp.maximum(v, 0.0)

        def dense(v, w_ref, bias_row):
            return jnp.dot(v.astype(w_ref.dtype), w_ref[...],
                           preferred_element_type=f32) + bias_row

        rows = rows_ref[...]                                         # (8, H_pad) f32
        cnx = acc_ref[...]                                           # (ET, C_pad) f32
        cn_score = cnx[:, c_idx:c_idx + 1]                           # (ET, 1)

        # xcnlin([cn @ x, cn_score])  — beta already folded into W3 / b3
        h = relu(dense(cnx, w1_ref, rows[0:1]))
        h = relu(dense(h, w2_ref, rows[1:2]))
        a = dense(h, w3_ref, rows[2:3])

        # xijlin(xi * xj)
        xij = xi_ref[...] * xj_ref[...]                              # (ET, C_pad)
        xij_score = jnp.sum(xij.astype(f32), axis=1, keepdims=True)  # (ET, 1)
        g = relu(dense(xij, wa_ref, rows[3:4]))
        b = dense(g, wb_ref, rows[4:5])

        # lin(a + b): H->H relu, then H->1 as a lane reduction (lin W2 * final_w[0] folded)
        z = relu(dense(a + b, wl1_ref, rows[5:6]))
        xs = jnp.sum(z * rows[6:7], axis=1, keepdims=True)           # (ET, 1)

        # final_lin([xs, xij_score, cn_score]); lin_b2/final_b folded into sc_ref[2]
        out = xs + xij_score * sc_ref[0] + cn_score * sc_ref[1] + sc_ref[2]
        out_ref[...] = out.astype(out_ref.dtype)


def fuse_link_predictor(x, adj, tar_ei, params, *, edge_tile=256, n_tile=256,
                        compute_dtype=jnp.float32):
    """Pallas forward pass.  Edges are padded internally; output is (E, 1) float32."""
    N, C = x.shape
    H = params["xcn_w2"].shape[0]
    E = tar_ei.shape[1]
    f32 = jnp.float32
    cd = compute_dtype

    C_pad = _round_up(C + 1, 128)          # +1: all-ones column at index C (cn_score)
    H_pad = _round_up(H, 128)
    N_pad = _round_up(N, n_tile)
    E_pad = _round_up(E, edge_tile)

    # ---- node features: zero pad, plus the ones column streamed for cn @ [x | 1] ----
    x_pad = jnp.zeros((N_pad, C_pad), f32).at[:N, :C].set(x)
    x_ext = x_pad.at[:N, C].set(1.0)

    # ---- per-edge gathers (padded edges reuse node 0; their rows are sliced off) ----
    pad_e = E_pad - E
    src = jnp.concatenate([tar_ei[0], jnp.zeros((pad_e,), tar_ei.dtype)])
    dst = jnp.concatenate([tar_ei[1], jnp.zeros((pad_e,), tar_ei.dtype)])
    xi = x_pad[src]                                   # (E_pad, C_pad), zero ones-column
    xj = x_pad[dst]
    adj_cols = jnp.pad(adj, ((0, 0), (0, N_pad - N)))
    # TODO(synk): move this gather into the kernel (scalar prefetch + manual DMA) to avoid
    #             the extra HBM write/read of the (E, N) adjacency streams.
    adj_i = adj_cols[src]
    adj_j = adj_cols[dst]

    # ---- weights: pad to lane-aligned shapes, fold beta / lin_w2 / final_lin ----
    beta = params["beta"][0]
    w1 = _pad2(params["xcn_w1"], C_pad, H_pad)        # row C multiplies cn_score
    w2 = _pad2(params["xcn_w2"], H_pad, H_pad)
    w3 = _pad2(params["xcn_w3"] * beta, H_pad, H_pad)
    wa = _pad2(params["xij_w1"], C_pad, H_pad)
    wb = _pad2(params["xij_w2"], H_pad, H_pad)
    wl1 = _pad2(params["lin_w1"], H_pad, H_pad)

    fw, fb = params["final_w"], params["final_b"]
    rows = jnp.zeros((8, H_pad), f32)
    rows = rows.at[0, :H].set(params["xcn_b1"])
    rows = rows.at[1, :H].set(params["xcn_b2"])
    rows = rows.at[2, :H].set(params["xcn_b3"] * beta)
    rows = rows.at[3, :H].set(params["xij_b1"])
    rows = rows.at[4, :H].set(params["xij_b2"])
    rows = rows.at[5, :H].set(params["lin_b1"])
    rows = rows.at[6, :H].set(params["lin_w2"][:, 0] * fw[0])        # lin W2 * wf0
    scalars = jnp.stack([fw[1], fw[2], fb[0] + params["lin_b2"][0] * fw[0]]).astype(f32)

    # ---- dtype casts: heavy streams + weights in compute_dtype; f32 accumulation ----
    xi, xj = xi.astype(cd), xj.astype(cd)
    adj_i, adj_j, x_ext = adj_i.astype(cd), adj_j.astype(cd), x_ext.astype(cd)
    w1, w2, w3, wa, wb, wl1 = (w.astype(cd) for w in (w1, w2, w3, wa, wb, wl1))

    grid = (E_pad // edge_tile, N_pad // n_tile)
    edge_map = lambda i, k: (i, 0)
    adj_map = lambda i, k: (i, k)
    x_map = lambda i, k: (k, 0)
    fixed = lambda i, k: (0, 0)
    smem = pl.BlockSpec(memory_space=pltpu.MemorySpace.SMEM)

    kernel = functools.partial(_fuse_kernel, c_idx=C)

    out = pl.pallas_call(
        kernel,
        out_shape=jax.ShapeDtypeStruct((E_pad, 1), jnp.float32),
        grid_spec=pltpu.PrefetchScalarGridSpec(
            num_scalar_prefetch=0,
            grid=grid,
            in_specs=[
                pl.BlockSpec((edge_tile, C_pad), edge_map),   # xi
                pl.BlockSpec((edge_tile, C_pad), edge_map),   # xj
                pl.BlockSpec((edge_tile, n_tile), adj_map),   # adj rows (src)
                pl.BlockSpec((edge_tile, n_tile), adj_map),   # adj rows (dst)
                pl.BlockSpec((n_tile, C_pad), x_map),         # [x | 1]
                pl.BlockSpec((C_pad, H_pad), fixed),          # xcn W1 (incl. cn_score row)
                pl.BlockSpec((H_pad, H_pad), fixed),          # xcn W2
                pl.BlockSpec((H_pad, H_pad), fixed),          # xcn W3 * beta
                pl.BlockSpec((C_pad, H_pad), fixed),          # xij W1
                pl.BlockSpec((H_pad, H_pad), fixed),          # xij W2
                pl.BlockSpec((H_pad, H_pad), fixed),          # lin W1
                pl.BlockSpec((8, H_pad), fixed),              # packed biases / wl2 row (f32)
                smem,                                         # (wf1, wf2, folded bias)
            ],
            out_specs=pl.BlockSpec((edge_tile, 1), edge_map),
            scratch_shapes=[pltpu.VMEM((edge_tile, C_pad), jnp.float32)],
        ),
        compiler_params=pltpu.CompilerParams(
            dimension_semantics=("parallel", "arbitrary"),
            vmem_limit_bytes=48 * 1024 * 1024,
        ),
    )(xi, xj, adj_i, adj_j, x_ext, w1, w2, w3, wa, wb, wl1, rows, scalars)

    return out[:E]


def reference(x, adj, tar_ei, p):
    """Pure-JAX reference mirroring the PyTorch multidomainforward (eval mode)."""
    xi, xj = x[tar_ei[0]], x[tar_ei[1]]
    cn = adj[tar_ei[0]] * adj[tar_ei[1]]
    cn_score = cn.sum(1, keepdims=True)
    xij = xi * xj
    xij_score = xij.sum(1, keepdims=True)
    xcns = jnp.concatenate([cn @ x, cn_score], axis=-1)

    a = jax.nn.relu(xcns @ p["xcn_w1"] + p["xcn_b1"])
    a = jax.nn.relu(a @ p["xcn_w2"] + p["xcn_b2"])
    a = a @ p["xcn_w3"] + p["xcn_b3"]

    b = jax.nn.relu(xij @ p["xij_w1"] + p["xij_b1"])
    b = b @ p["xij_w2"] + p["xij_b2"]

    z = a * p["beta"][0] + b
    z = jax.nn.relu(z @ p["lin_w1"] + p["lin_b1"])
    xs = z @ p["lin_w2"] + p["lin_b2"]

    final = jnp.concatenate([xs, xij_score, cn_score], axis=-1)
    return final @ p["final_w"].reshape(3, 1) + p["final_b"]


def init_params(key, in_channels, hidden_channels, out_channels=1):
    C, H = in_channels, hidden_channels
    assert out_channels == 1, "final_lin is Linear(3, 1) -> out_channels must be 1"
    ks = jax.random.split(key, 12)

    def lin(k, fan_in, fan_out):
        s = 1.0 / np.sqrt(fan_in)
        kw, kb = jax.random.split(k)
        w = jax.random.uniform(kw, (fan_in, fan_out), jnp.float32, -s, s)
        b = jax.random.uniform(kb, (fan_out,), jnp.float32, -s, s)
        return w, b

    p = {}
    p["xcn_w1"], p["xcn_b1"] = lin(ks[0], C + 1, H)
    p["xcn_w2"], p["xcn_b2"] = lin(ks[1], H, H)
    p["xcn_w3"], p["xcn_b3"] = lin(ks[2], H, H)
    p["xij_w1"], p["xij_b1"] = lin(ks[3], C, H)
    p["xij_w2"], p["xij_b2"] = lin(ks[4], H, H)
    p["lin_w1"], p["lin_b1"] = lin(ks[5], H, H)
    p["lin_w2"], p["lin_b2"] = lin(ks[6], H, out_channels)
    fw, fb = lin(ks[7], 3, 1)
    p["final_w"] = fw.reshape(3)
    p["final_b"] = fb.reshape(1)
    p["beta"] = jnp.ones((1,), jnp.float32)          # nn.Parameter(beta * ones(1)), beta=1.0
    return p


if __name__ == "__main__":
    key = jax.random.PRNGKey(0)
    k_x, k_adj, k_ei, k_p = jax.random.split(key, 4)

    # nodes, in_channels, hidden_channels, edges — sized so the grid has multiple
    # edge tiles (parallel axis) and multiple N tiles (reduction axis).
    N, C, H, E = 600, 20, 48, 300
    x = jax.random.normal(k_x, (N, C), jnp.float32) * 0.5
    adj = (jax.random.uniform(k_adj, (N, N)) < 0.1).astype(jnp.float32)
    adj = jnp.maximum(adj, adj.T)                    # symmetric binary adjacency
    adj = adj * (1.0 - jnp.eye(N, dtype=jnp.float32))
    tar_ei = jax.random.randint(k_ei, (2, E), 0, N, jnp.int32)

    params = init_params(k_p, C, H, out_channels=1)
    ref = reference(x, adj, tar_ei, params)

    # f32 path: strict numerical check against the reference.
    out_f32 = fuse_link_predictor(x, adj, tar_ei, params,
                                  edge_tile=256, n_tile=256,
                                  compute_dtype=jnp.float32)
    out_f32 = jax.block_until_ready(out_f32)
    np.testing.assert_allclose(np.asarray(out_f32), np.asarray(ref), rtol=1e-3, atol=1e-3)

    # bf16 operand path (v6e/v7x recommendation): f32 accumulation, loose check.
    out_bf16 = fuse_link_predictor(x, adj, tar_ei, params,
                                   edge_tile=256, n_tile=256,
                                   compute_dtype=jnp.bfloat16)
    out_bf16 = jax.block_until_ready(out_bf16)
    np.testing.assert_allclose(np.asarray(out_bf16), np.asarray(ref), rtol=5e-2, atol=0.25)

    print("KERNEL_OK")
</pallas_src>

<mosaic_0001>
module attributes {stable_mosaic.version = 11 : i64} {
  func.func @_fuse_kernel(%arg0: i32, %arg1: i32, %arg2: memref<256x128xf32, #tpu.memory_space<vmem>>, %arg3: memref<256x128xf32, #tpu.memory_space<vmem>>, %arg4: memref<256x256xf32, #tpu.memory_space<vmem>>, %arg5: memref<256x256xf32, #tpu.memory_space<vmem>>, %arg6: memref<256x128xf32, #tpu.memory_space<vmem>>, %arg7: memref<128x128xf32, #tpu.memory_space<vmem>>, %arg8: memref<128x128xf32, #tpu.memory_space<vmem>>, %arg9: memref<128x128xf32, #tpu.memory_space<vmem>>, %arg10: memref<128x128xf32, #tpu.memory_space<vmem>>, %arg11: memref<128x128xf32, #tpu.memory_space<vmem>>, %arg12: memref<128x128xf32, #tpu.memory_space<vmem>>, %arg13: memref<8x128xf32, #tpu.memory_space<vmem>>, %arg14: memref<3xf32, #tpu.memory_space<smem>>, %arg15: memref<256x1xf32, #tpu.memory_space<vmem>>, %arg16: memref<256x128xf32, #tpu.memory_space<vmem>>) attributes {dimension_semantics = [#tpu.dimension_semantics<parallel>, #tpu.dimension_semantics<arbitrary>], iteration_bounds = array<i64: 2, 3>, scalar_prefetch = 0 : i64, scratch_operands = 1 : i64, tpu.core_type = #tpu.core_type<tc>, window_params = [{transform_indices = @transform_0, window_bounds = array<i64: 256, 128>}, {transform_indices = @transform_1, window_bounds = array<i64: 256, 128>}, {transform_indices = @transform_2, window_bounds = array<i64: 256, 256>}, {transform_indices = @transform_3, window_bounds = array<i64: 256, 256>}, {transform_indices = @transform_4, window_bounds = array<i64: 256, 128>}, {pipeline_mode = #tpu.pipeline_mode<synchronous>, transform_indices = @transform_5, window_bounds = array<i64: 128, 128>}, {pipeline_mode = #tpu.pipeline_mode<synchronous>, transform_indices = @transform_6, window_bounds = array<i64: 128, 128>}, {pipeline_mode = #tpu.pipeline_mode<synchronous>, transform_indices = @transform_7, window_bounds = array<i64: 128, 128>}, {pipeline_mode = #tpu.pipeline_mode<synchronous>, transform_indices = @transform_8, window_bounds = array<i64: 128, 128>}, {pipeline_mode = #tpu.pipeline_mode<synchronous>, transform_indices = @transform_9, window_bounds = array<i64: 128, 128>}, {pipeline_mode = #tpu.pipeline_mode<synchronous>, transform_indices = @transform_10, window_bounds = array<i64: 128, 128>}, {pipeline_mode = #tpu.pipeline_mode<synchronous>, transform_indices = @transform_11, window_bounds = array<i64: 8, 128>}, {transform_indices = @transform_12, window_bounds = array<i64: 3>}, {transform_indices = @transform_13, window_bounds = array<i64: 256, 1>}]} {
    %c0_i32 = arith.constant 0 : i32
    %0 = arith.cmpi eq, %arg1, %c0_i32 : i32
    %1 = arith.extui %0 : i1 to i32
    %c0_i32_0 = arith.constant 0 : i32
    %2 = arith.cmpi ne, %1, %c0_i32_0 : i32
    scf.if %2 {
      %cst_11 = arith.constant 0.000000e+00 : f32
      %14 = vector.broadcast %cst_11 : f32 to vector<256x128xf32>
      %c0_12 = arith.constant 0 : index
      %c0_13 = arith.constant 0 : index
      %15 = vector.load %arg16[%c0_12, %c0_13] : memref<256x128xf32, #tpu.memory_space<vmem>>, vector<256x128xf32>
      tpu.vector_store %arg16[%c0_12, %c0_13], %14 {strides = array<i32>} : memref<256x128xf32, #tpu.memory_space<vmem>>, vector<256x128xf32>,
    } else {
    }
    %c0 = arith.constant 0 : index
    %c0_1 = arith.constant 0 : index
    %3 = vector.load %arg4[%c0, %c0_1] : memref<256x256xf32, #tpu.memory_space<vmem>>, vector<256x256xf32>
    %c0_2 = arith.constant 0 : index
    %c0_3 = arith.constant 0 : index
    %4 = vector.load %arg5[%c0_2, %c0_3] : memref<256x256xf32, #tpu.memory_space<vmem>>, vector<256x256xf32>
    %5 = arith.mulf %3, %4 : vector<256x256xf32>
    %c0_4 = arith.constant 0 : index
    %c0_5 = arith.constant 0 : index
    %6 = vector.load %arg16[%c0_4, %c0_5] : memref<256x128xf32, #tpu.memory_space<vmem>>, vector<256x128xf32>
    %c0_6 = arith.constant 0 : index
    %c0_7 = arith.constant 0 : index
    %7 = vector.load %arg6[%c0_6, %c0_7] : memref<256x128xf32, #tpu.memory_space<vmem>>, vector<256x128xf32>
    %cst = arith.constant dense<0.000000e+00> : vector<256x128xf32>
    %8 = tpu.matmul %5, %7, %cst {dimension_numbers = #tpu.dot_dimension_numbers<[1], [0], [0], [1], [0, 0, 1, 1], [], []>} : vector<256x256xf32>, vector<256x128xf32>, vector<256x128xf32> -> vector<256x128xf32>
    %9 = arith.addf %6, %8 : vector<256x128xf32>
    %c0_8 = arith.constant 0 : index
    %c0_9 = arith.constant 0 : index
    %10 = vector.load %arg16[%c0_8, %c0_9] : memref<256x128xf32, #tpu.memory_space<vmem>>, vector<256x128xf32>
    tpu.vector_store %arg16[%c0_8, %c0_9], %9 {strides = array<i32>} : memref<256x128xf32, #tpu.memory_space<vmem>>, vector<256x128xf32>,
    %c2_i32 = arith.constant 2 : i32
    %11 = arith.cmpi eq, %arg1, %c2_i32 : i32
    %12 = arith.extui %11 : i1 to i32
    %c0_i32_10 = arith.constant 0 : i32
    %13 = arith.cmpi ne, %12, %c0_i32_10 : i32
    scf.if %13 {
      %c0_11 = arith.constant 0 : index
      %c0_12 = arith.constant 0 : index
      %14 = vector.load %arg13[%c0_11, %c0_12] : memref<8x128xf32, #tpu.memory_space<vmem>>, vector<8x128xf32>
      %c0_13 = arith.constant 0 : index
      %c0_14 = arith.constant 0 : index
      %15 = vector.load %arg16[%c0_13, %c0_14] : memref<256x128xf32, #tpu.memory_space<vmem>>, vector<256x128xf32>
      %16 = vector.extract_strided_slice %15 {offsets = [0, 20], sizes = [256, 1], strides = [1, 1]} : vector<256x128xf32> to vector<256x1xf32>
      %17 = vector.extract_strided_slice %14 {offsets = [0, 0], sizes = [1, 128], strides = [1, 1]} : vector<8x128xf32> to vector<1x128xf32>
      %c0_15 = arith.constant 0 : index
      %c0_16 = arith.constant 0 : index
      %18 = vector.load %arg7[%c0_15, %c0_16] : memref<128x128xf32, #tpu.memory_space<vmem>>, vector<128x128xf32>
      %cst_17 = arith.constant dense<0.000000e+00> : vector<256x128xf32>
      %19 = tpu.matmul %15, %18, %cst_17 {dimension_numbers = #tpu.dot_dimension_numbers<[1], [0], [0], [1], [0, 0, 1, 1], [], []>} : vector<256x128xf32>, vector<128x128xf32>, vector<256x128xf32> -> vector<256x128xf32>
      %20 = vector.broadcast %17 : vector<1x128xf32> to vector<256x128xf32>
      %21 = arith.addf %19, %20 : vector<256x128xf32>
      %cst_18 = arith.constant 0.000000e+00 : f32
      %22 = vector.broadcast %cst_18 : f32 to vector<256x128xf32>
      %23 = arith.maximumf %21, %22 : vector<256x128xf32>
      %24 = vector.extract_strided_slice %14 {offsets = [1, 0], sizes = [1, 128], strides = [1, 1]} : vector<8x128xf32> to vector<1x128xf32>
      %c0_19 = arith.constant 0 : index
      %c0_20 = arith.constant 0 : index
      %25 = vector.load %arg8[%c0_19, %c0_20] : memref<128x128xf32, #tpu.memory_space<vmem>>, vector<128x128xf32>
      %cst_21 = arith.constant dense<0.000000e+00> : vector<256x128xf32>
      %26 = tpu.matmul %23, %25, %cst_21 {dimension_numbers = #tpu.dot_dimension_numbers<[1], [0], [0], [1], [0, 0, 1, 1], [], []>} : vector<256x128xf32>, vector<128x128xf32>, vector<256x128xf32> -> vector<256x128xf32>
      %27 = vector.broadcast %24 : vector<1x128xf32> to vector<256x128xf32>
      %28 = arith.addf %26, %27 : vector<256x128xf32>
      %cst_22 = arith.constant 0.000000e+00 : f32
      %29 = vector.broadcast %cst_22 : f32 to vector<256x128xf32>
      %30 = arith.maximumf %28, %29 : vector<256x128xf32>
      %31 = vector.extract_strided_slice %14 {offsets = [2, 0], sizes = [1, 128], strides = [1, 1]} : vector<8x128xf32> to vector<1x128xf32>
      %c0_23 = arith.constant 0 : index
      %c0_24 = arith.constant 0 : index
      %32 = vector.load %arg9[%c0_23, %c0_24] : memref<128x128xf32, #tpu.memory_space<vmem>>, vector<128x128xf32>
      %cst_25 = arith.constant dense<0.000000e+00> : vector<256x128xf32>
      %33 = tpu.matmul %30, %32, %cst_25 {dimension_numbers = #tpu.dot_dimension_numbers<[1], [0], [0], [1], [0, 0, 1, 1], [], []>} : vector<256x128xf32>, vector<128x128xf32>, vector<256x128xf32> -> vector<256x128xf32>
      %34 = vector.broadcast %31 : vector<1x128xf32> to vector<256x128xf32>
      %35 = arith.addf %33, %34 : vector<256x128xf32>
      %c0_26 = arith.constant 0 : index
      %c0_27 = arith.constant 0 : index
      %36 = vector.load %arg2[%c0_26, %c0_27] : memref<256x128xf32, #tpu.memory_space<vmem>>, vector<256x128xf32>
      %c0_28 = arith.constant 0 : index
      %c0_29 = arith.constant 0 : index
      %37 = vector.load %arg3[%c0_28, %c0_29] : memref<256x128xf32, #tpu.memory_space<vmem>>, vector<256x128xf32>
      %38 = arith.mulf %36, %37 : vector<256x128xf32>
      %cst_30 = arith.constant dense<0.000000e+00> : vector<256xf32>
      %39 = vector.multi_reduction <add>, %38, %cst_30 [1] : vector<256x128xf32> to vector<256xf32>
      %40 = vector.shape_cast %39 : vector<256xf32> to vector<256x1xf32>
      %41 = vector.extract_strided_slice %14 {offsets = [3, 0], sizes = [1, 128], strides = [1, 1]} : vector<8x128xf32> to vector<1x128xf32>
      %c0_31 = arith.constant 0 : index
      %c0_32 = arith.constant 0 : index
      %42 = vector.load %arg10[%c0_31, %c0_32] : memref<128x128xf32, #tpu.memory_space<vmem>>, vector<128x128xf32>
      %cst_33 = arith.constant dense<0.000000e+00> : vector<256x128xf32>
      %43 = tpu.matmul %38, %42, %cst_33 {dimension_numbers = #tpu.dot_dimension_numbers<[1], [0], [0], [1], [0, 0, 1, 1], [], []>} : vector<256x128xf32>, vector<128x128xf32>, vector<256x128xf32> -> vector<256x128xf32>
      %44 = vector.broadcast %41 : vector<1x128xf32> to vector<256x128xf32>
      %45 = arith.addf %43, %44 : vector<256x128xf32>
      %cst_34 = arith.constant 0.000000e+00 : f32
      %46 = vector.broadcast %cst_34 : f32 to vector<256x128xf32>
      %47 = arith.maximumf %45, %46 : vector<256x128xf32>
      %48 = vector.extract_strided_slice %14 {offsets = [4, 0], sizes = [1, 128], strides = [1, 1]} : vector<8x128xf32> to vector<1x128xf32>
      %c0_35 = arith.constant 0 : index
      %c0_36 = arith.constant 0 : index
      %49 = vector.load %arg11[%c0_35, %c0_36] : memref<128x128xf32, #tpu.memory_space<vmem>>, vector<128x128xf32>
      %cst_37 = arith.constant dense<0.000000e+00> : vector<256x128xf32>
      %50 = tpu.matmul %47, %49, %cst_37 {dimension_numbers = #tpu.dot_dimension_numbers<[1], [0], [0], [1], [0, 0, 1, 1], [], []>} : vector<256x128xf32>, vector<128x128xf32>, vector<256x128xf32> -> vector<256x128xf32>
      %51 = vector.broadcast %48 : vector<1x128xf32> to vector<256x128xf32>
      %52 = arith.addf %50, %51 : vector<256x128xf32>
      %53 = arith.addf %35, %52 : vector<256x128xf32>
      %54 = vector.extract_strided_slice %14 {offsets = [5, 0], sizes = [1, 128], strides = [1, 1]} : vector<8x128xf32> to vector<1x128xf32>
      %c0_38 = arith.constant 0 : index
      %c0_39 = arith.constant 0 : index
      %55 = vector.load %arg12[%c0_38, %c0_39] : memref<128x128xf32, #tpu.memory_space<vmem>>, vector<128x128xf32>
      %cst_40 = arith.constant dense<0.000000e+00> : vector<256x128xf32>
      %56 = tpu.matmul %53, %55, %cst_40 {dimension_numbers = #tpu.dot_dimension_numbers<[1], [0], [0], [1], [0, 0, 1, 1], [], []>} : vector<256x128xf32>, vector<128x128xf32>, vector<256x128xf32> -> vector<256x128xf32>
      %57 = vector.broadcast %54 : vector<1x128xf32> to vector<256x128xf32>
      %58 = arith.addf %56, %57 : vector<256x128xf32>
      %cst_41 = arith.constant 0.000000e+00 : f32
      %59 = vector.broadcast %cst_41 : f32 to vector<256x128xf32>
      %60 = arith.maximumf %58, %59 : vector<256x128xf32>
      %61 = vector.extract_strided_slice %14 {offsets = [6, 0], sizes = [1, 128], strides = [1, 1]} : vector<8x128xf32> to vector<1x128xf32>
      %62 = vector.broadcast %61 : vector<1x128xf32> to vector<256x128xf32>
      %63 = arith.mulf %60, %62 : vector<256x128xf32>
      %cst_42 = arith.constant dense<0.000000e+00> : vector<256xf32>
      %64 = vector.multi_reduction <add>, %63, %cst_42 [1] : vector<256x128xf32> to vector<256xf32>
      %65 = vector.shape_cast %64 : vector<256xf32> to vector<256x1xf32>
      %c0_43 = arith.constant 0 : index
      %66 = memref.load %arg14[%c0_43] : memref<3xf32, #tpu.memory_space<smem>>
      %67 = vector.broadcast %66 : f32 to vector<256x1xf32>
      %68 = arith.mulf %40, %67 : vector<256x1xf32>
      %69 = arith.addf %65, %68 : vector<256x1xf32>
      %c1 = arith.constant 1 : index
      %70 = memref.load %arg14[%c1] : memref<3xf32, #tpu.memory_space<smem>>
      %71 = vector.broadcast %70 : f32 to vector<256x1xf32>
      %72 = arith.mulf %16, %71 : vector<256x1xf32>
      %73 = arith.addf %69, %72 : vector<256x1xf32>
      %c2 = arith.constant 2 : index
      %74 = memref.load %arg14[%c2] : memref<3xf32, #tpu.memory_space<smem>>
      %75 = vector.broadcast %74 : f32 to vector<256x1xf32>
      %76 = arith.addf %73, %75 : vector<256x1xf32>
      %c0_44 = arith.constant 0 : index
      %c0_45 = arith.constant 0 : index
      %77 = vector.load %arg15[%c0_44, %c0_45] : memref<256x1xf32, #tpu.memory_space<vmem>>, vector<256x1xf32>
      tpu.vector_store %arg15[%c0_44, %c0_45], %76 {strides = array<i32>} : memref<256x1xf32, #tpu.memory_space<vmem>>, vector<256x1xf32>,
    } else {
    }
    return
  }
  func.func @transform_0(%arg0: i32, %arg1: i32) -> (i32, i32) {
    %c0_i32 = arith.constant 0 : i32
    %c0_i32_0 = arith.constant 0 : i32
    return %arg0, %c0_i32 : i32, i32
  }
  func.func @transform_1(%arg0: i32, %arg1: i32) -> (i32, i32) {
    %c0_i32 = arith.constant 0 : i32
    %c0_i32_0 = arith.constant 0 : i32
    return %arg0, %c0_i32 : i32, i32
  }
  func.func @transform_2(%arg0: i32, %arg1: i32) -> (i32, i32) {
    %c0_i32 = arith.constant 0 : i32
    return %arg0, %arg1 : i32, i32
  }
  func.func @transform_3(%arg0: i32, %arg1: i32) -> (i32, i32) {
    %c0_i32 = arith.constant 0 : i32
    return %arg0, %arg1 : i32, i32
  }
  func.func @transform_4(%arg0: i32, %arg1: i32) -> (i32, i32) {
    %c0_i32 = arith.constant 0 : i32
    %c0_i32_0 = arith.constant 0 : i32
    return %arg1, %c0_i32 : i32, i32
  }
  func.func @transform_5(%arg0: i32, %arg1: i32) -> (i32, i32) {
    %c0_i32 = arith.constant 0 : i32
    %c0_i32_0 = arith.constant 0 : i32
    %c0_i32_1 = arith.constant 0 : i32
    return %c0_i32, %c0_i32_0 : i32, i32
  }
  func.func @transform_6(%arg0: i32, %arg1: i32) -> (i32, i32) {
    %c0_i32 = arith.constant 0 : i32
    %c0_i32_0 = arith.constant 0 : i32
    %c0_i32_1 = arith.constant 0 : i32
    return %c0_i32, %c0_i32_0 : i32, i32
  }
  func.func @transform_7(%arg0: i32, %arg1: i32) -> (i32, i32) {
    %c0_i32 = arith.constant 0 : i32
    %c0_i32_0 = arith.constant 0 : i32
    %c0_i32_1 = arith.constant 0 : i32
    return %c0_i32, %c0_i32_0 : i32, i32
  }
  func.func @transform_8(%arg0: i32, %arg1: i32) -> (i32, i32) {
    %c0_i32 = arith.constant 0 : i32
    %c0_i32_0 = arith.constant 0 : i32
    %c0_i32_1 = arith.constant 0 : i32
    return %c0_i32, %c0_i32_0 : i32, i32
  }
  func.func @transform_9(%arg0: i32, %arg1: i32) -> (i32, i32) {
    %c0_i32 = arith.constant 0 : i32
    %c0_i32_0 = arith.constant 0 : i32
    %c0_i32_1 = arith.constant 0 : i32
    return %c0_i32, %c0_i32_0 : i32, i32
  }
  func.func @transform_10(%arg0: i32, %arg1: i32) -> (i32, i32) {
    %c0_i32 = arith.constant 0 : i32
    %c0_i32_0 = arith.constant 0 : i32
    %c0_i32_1 = arith.constant 0 : i32
    return %c0_i32, %c0_i32_0 : i32, i32
  }
  func.func @transform_11(%arg0: i32, %arg1: i32) -> (i32, i32) {
    %c0_i32 = arith.constant 0 : i32
    %c0_i32_0 = arith.constant 0 : i32
    %c0_i32_1 = arith.constant 0 : i32
    return %c0_i32, %c0_i32_0 : i32, i32
  }
  func.func @transform_12(%arg0: i32, %arg1: i32) -> i32 {
    %c0_i32 = arith.constant 0 : i32
    %c0_i32_0 = arith.constant 0 : i32
    return %c0_i32 : i32
  }
  func.func @transform_13(%arg0: i32, %arg1: i32) -> (i32, i32) {
    %c0_i32 = arith.constant 0 : i32
    %c0_i32_0 = arith.constant 0 : i32
    return %arg0, %c0_i32 : i32, i32
  }
}

</mosaic_0001>

<llo_original>
// kernel: tpu_custom_call.1
$region0: #{tpu_custom_call.1}
  #allocation0 [shape = 'u32[]', space=smem, size = 0x4, offset = 0x4, fixed_abs, tag = 'smem constant byte address 0x4 - core index']
  #allocation1 [shape = 'u32[72,128]{1,0:T(1,128)}', space=vmem, size = 0x9000, scoped, tag = 'internal scratch']
  #allocation2 [shape = 'f32[256,128]{1,0:T(8,128)}', space=vmem, size = 0x20000, scoped, tag = 'scratch operand']
  %s0 = inlined_call_operand.hbm [shape: f32[512,128], index: 0, kind: input, shape index: {}]
  %s1 = inlined_call_operand.hbm [shape: f32[512,128], index: 1, kind: input, shape index: {}]
  %s2 = inlined_call_operand.hbm [shape: f32[512,768], index: 2, kind: input, shape index: {}]
  %s3 = inlined_call_operand.hbm [shape: f32[512,768], index: 3, kind: input, shape index: {}]
  %s4 = inlined_call_operand.hbm [shape: f32[768,128], index: 4, kind: input, shape index: {}]
  %s5 = inlined_call_operand.hbm [shape: f32[128,128], index: 5, kind: input, shape index: {}]
  %s6 = inlined_call_operand.hbm [shape: f32[128,128], index: 6, kind: input, shape index: {}]
  %s7 = inlined_call_operand.hbm [shape: f32[128,128], index: 7, kind: input, shape index: {}]
  %s8 = inlined_call_operand.hbm [shape: f32[128,128], index: 8, kind: input, shape index: {}]
  %s9 = inlined_call_operand.hbm [shape: f32[128,128], index: 9, kind: input, shape index: {}]
  %s10 = inlined_call_operand.hbm [shape: f32[128,128], index: 10, kind: input, shape index: {}]
  %s11 = inlined_call_operand.hbm [shape: f32[8,128], index: 11, kind: input, shape index: {}]
  %s12 = inlined_call_operand.hbm [shape: f32[3], index: 12, kind: input, shape index: {}]
  %s13 = inlined_call_operand.vmem [shape: f32[512,1], index: 13, kind: output, shape index: {}]
  %s14 = sld [smem:[#allocation0]]
  $region145: #{tpu_custom_call.1} parent=0
    _
  %s16 = ssub.s32 1, %s14
  %s17 = scalar_select 0, %s16, %s14
  $region1: #{tpu_custom_call.1} parent=0
    #allocation3 [shape = 'u8[262144]{0}', space=vmem, size = 0x40000, scoped, tag = 'input window, operand 0']
    #allocation4 [shape = 's32[2]{0}', space=sflag, size = 0x8, scoped, tag = 'scoped memory for tpu_custom_call.1']
    #allocation5 [shape = 's32[2]{0}', space=sflag, size = 0x8, scoped, tag = 'scoped memory for tpu_custom_call.1']
    #allocation6 [shape = 'u8[262144]{0}', space=vmem, size = 0x40000, scoped, tag = 'input window, operand 1']
    #allocation7 [shape = 's32[2]{0}', space=sflag, size = 0x8, scoped, tag = 'scoped memory for tpu_custom_call.1']
    #allocation8 [shape = 'u8[524288]{0}', space=vmem, size = 0x80000, scoped, tag = 'input window, operand 2']
    #allocation9 [shape = 'u8[524288]{0}', space=vmem, size = 0x80000, scoped, tag = 'input window, operand 3']
    #allocation10 [shape = 's32[2]{0}', space=sflag, size = 0x8, scoped, tag = 'scoped memory for tpu_custom_call.1']
    #allocation11 [shape = 'u8[262144]{0}', space=vmem, size = 0x40000, scoped, tag = 'input window, operand 4']
    #allocation12 [shape = 'u8[65536]{0}', space=vmem, size = 0x10000, scoped, tag = 'input window, operand 5, single buffered']
    #allocation13 [shape = 's32[1]{0}', space=sflag, size = 0x4, scoped, tag = 'scoped memory for tpu_custom_call.1']
    #allocation14 [shape = 'u8[65536]{0}', space=vmem, size = 0x10000, scoped, tag = 'input window, operand 6, single buffered']
    #allocation15 [shape = 'u8[65536]{0}', space=vmem, size = 0x10000, scoped, tag = 'input window, operand 7, single buffered']
    #allocation16 [shape = 's32[1]{0}', space=sflag, size = 0x4, scoped, tag = 'scoped memory for tpu_custom_call.1']
    #allocation17 [shape = 'u8[65536]{0}', space=vmem, size = 0x10000, scoped, tag = 'input window, operand 8, single buffered']
    #allocation18 [shape = 'u8[65536]{0}', space=vmem, size = 0x10000, scoped, tag = 'input window, operand 9, single buffered']
    #allocation19 [shape = 's32[1]{0}', space=sflag, size = 0x4, scoped, tag = 'scoped memory for tpu_custom_call.1']
    #allocation20 [shape = 'u8[65536]{0}', space=vmem, size = 0x10000, scoped, tag = 'input window, operand 10, single buffered']
    #allocation21 [shape = 'u8[4096]{0}', space=vmem, size = 0x1000, scoped, tag = 'input window, operand 11, single buffered']
    #allocation22 [shape = 's32[1]{0}', space=sflag, size = 0x4, scoped, tag = 'scoped memory for tpu_custom_call.1']
    #allocation23 [shape = 'u8[512]{0}', space=smem, size = 0x200, scoped, tag = 'input window, operand 12, single buffered']
    %18 = vsyncpa [#allocation4], 0
    %s19 = scalar_lea.sflag [#allocation4], 1
    %20 = vsyncpa %s19, 0
    %21 = vsyncpa [#allocation7], 0
    %s22 = scalar_lea.sflag [#allocation7], 1
    %23 = vsyncpa %s22, 0
    %24 = vsyncpa [#allocation10], 0
    %s25 = scalar_lea.sflag [#allocation10], 1
    %26 = vsyncpa %s25, 0
    %27 = vsyncpa [#allocation13], 0
    %28 = vsyncpa [#allocation16], 0
    %29 = vsyncpa [#allocation19], 0
    %30 = vsyncpa [#allocation22], 0
    %31 = vsyncpa [#allocation5], 0
    loop: start=0, step=1, limit=8
    $region2: #{tpu_custom_call.1} parent=1 // loop_pre_header
      _
    $region3: #{tpu_custom_call.1} parent=1 // loop_header
      %s33 = sphi 0, %s37
      %p34 = scmp.ge.s32.totalorder %s33, 8
      %s40 = sphi 0, %s52
      %s41 = sphi 0, %s48
      %s42 = sphi 0, %s40
      %s43 = sphi 0, %s41
      %s44 = sphi 0, %s42
      %s45 = sphi 0, %s43
      %s55 = sphi 0, %s57
      %s58 = sphi 0, %s55
      %s59 = sphi 0, %s58
      %s75 = sphi 0, %s59
      %s81 = sphi 0, %s83
      %s84 = sphi 0, %s81
      %s85 = sphi 0, %s84
      %s101 = sphi 0, %s85
      %s109 = sphi 0, %s111
      %s112 = sphi 0, %s109
      %s113 = sphi 0, %s112
      %s129 = sphi 0, %s113
      %s137 = sphi 0, %s139
      %s140 = sphi 0, %s137
      %s141 = sphi 0, %s140
      %s157 = sphi 0, %s141
      %s163 = sphi 0, %s165
      %s166 = sphi 0, %s163
      %s167 = sphi 0, %s166
      %s183 = sphi 0, %s167
      %s187 = sphi 0, %s187
      %s189 = sphi 0, %s187
      %s190 = sphi 0, %s189
      %s204 = sphi 0, %s190
      %s208 = sphi 0, %s208
      %s210 = sphi 0, %s208
      %s211 = sphi 0, %s210
      %s225 = sphi 0, %s211
      %s229 = sphi 0, %s229
      %s231 = sphi 0, %s229
      %s232 = sphi 0, %s231
      %s246 = sphi 0, %s232
      %s250 = sphi 0, %s250
      %s252 = sphi 0, %s250
      %s253 = sphi 0, %s252
      %s267 = sphi 0, %s253
      %s271 = sphi 0, %s271
      %s273 = sphi 0, %s271
      %s274 = sphi 0, %s273
      %s288 = sphi 0, %s274
      %s292 = sphi 0, %s292
      %s294 = sphi 0, %s292
      %s295 = sphi 0, %s294
      %s309 = sphi 0, %s295
      %s313 = sphi 0, %s313
      %s315 = sphi 0, %s313
      %s316 = sphi 0, %s315
      %s330 = sphi 0, %s316
      %s334 = sphi 0, %s334
      %s336 = sphi 0, %s334
      %s337 = sphi 0, %s336
      %s351 = sphi 0, %s337
      %s357 = sphi 0, %s359
      %s360 = sphi 0, %s357
      %s361 = sphi 0, %s360
      %s377 = sphi 0, %s361
    $region4: #{tpu_custom_call.1} parent=1 // loop_header_branch
      %36 = sbr.rel (%p34) target = $region8
    $region5: #{tpu_custom_call.1} parent=1 // loop_body
      %s38 = ssub.s32 %s33, 1
      %s39 = ssub.s32 %s33, 2
      %s46 = sadd.s32 1, %s41
      %p47 = scmp.ge.s32.totalorder %s46, 3
      %s48 = scalar_select %p47, 0, %s46
      %s49 = sadd.s32 1, %s40
      %s50 = scalar_select %p47, %s49, %s40
      %p51 = scmp.ge.s32.totalorder %s50, 2
      %s52 = scalar_select %p51, 0, %s50
      %s53 = ssub.s32 %s40, %s52
      %p54 = scmp.eq.s32.totalorder %s53, 0
      %s56 = sadd.s32 %s55, 1
      %s57 = scalar_select %p54, %s55, %s56
      %p60 = pneg %p54
      %p61 = scmp.eq.s32.totalorder %s33, 5
      %p62 = por %p60, %p61
      %p63 = scmp.ne.s32.totalorder %s55, %s58
      %p64 = scmp.eq.s32.totalorder %s33, 0
      %p65 = por %p63, %p64
      %p66 = scmp.ne.s32.totalorder %s55, %s58
      %p67 = scmp.eq.s32.totalorder %s38, 5
      %p68 = por %p66, %p67
      %p69 = scmp.ne.s32.totalorder %s58, %s59
      %p70 = scmp.eq.s32.totalorder %s38, 0
      %p71 = por %p69, %p70
      %p72 = scmp.ne.s32.totalorder %s58, %s59
      %p73 = scmp.eq.s32.totalorder %s39, 5
      %p74 = por %p72, %p73
      %p76 = scmp.ne.s32.totalorder %s59, %s75
      %p77 = scmp.eq.s32.totalorder %s39, 0
      %p78 = por %p76, %p77
      %s79 = ssub.s32 %s40, %s52
      %p80 = scmp.eq.s32.totalorder %s79, 0
      %s82 = sadd.s32 %s81, 1
      %s83 = scalar_select %p80, %s81, %s82
      %p86 = pneg %p80
      %p87 = scmp.eq.s32.totalorder %s33, 5
      %p88 = por %p86, %p87
      %p89 = scmp.ne.s32.totalorder %s81, %s84
      %p90 = scmp.eq.s32.totalorder %s33, 0
      %p91 = por %p89, %p90
      %p92 = scmp.ne.s32.totalorder %s81, %s84
      %p93 = scmp.eq.s32.totalorder %s38, 5
      %p94 = por %p92, %p93
      %p95 = scmp.ne.s32.totalorder %s84, %s85
      %p96 = scmp.eq.s32.totalorder %s38, 0
      %p97 = por %p95, %p96
      %p98 = scmp.ne.s32.totalorder %s84, %s85
      %p99 = scmp.eq.s32.totalorder %s39, 5
      %p100 = por %p98, %p99
      %p102 = scmp.ne.s32.totalorder %s85, %s101
      %p103 = scmp.eq.s32.totalorder %s39, 0
      %p104 = por %p102, %p103
      %s105 = ssub.s32 %s40, %s52
      %s106 = ssub.s32 %s41, %s48
      %s107 = sor.u32 %s105, %s106
      %p108 = scmp.eq.s32.totalorder %s107, 0
      %s110 = sadd.s32 %s109, 1
      %s111 = scalar_select %p108, %s109, %s110
      %p114 = pneg %p108
      %p115 = scmp.eq.s32.totalorder %s33, 5
      %p116 = por %p114, %p115
      %p117 = scmp.ne.s32.totalorder %s109, %s112
      %p118 = scmp.eq.s32.totalorder %s33, 0
      %p119 = por %p117, %p118
      %p120 = scmp.ne.s32.totalorder %s109, %s112
      %p121 = scmp.eq.s32.totalorder %s38, 5
      %p122 = por %p120, %p121
      %p123 = scmp.ne.s32.totalorder %s112, %s113
      %p124 = scmp.eq.s32.totalorder %s38, 0
      %p125 = por %p123, %p124
      %p126 = scmp.ne.s32.totalorder %s112, %s113
      %p127 = scmp.eq.s32.totalorder %s39, 5
      %p128 = por %p126, %p127
      %p130 = scmp.ne.s32.totalorder %s113, %s129
      %p131 = scmp.eq.s32.totalorder %s39, 0
      %p132 = por %p130, %p131
      %s133 = ssub.s32 %s40, %s52
      %s134 = ssub.s32 %s41, %s48
      %s135 = sor.u32 %s133, %s134
      %p136 = scmp.eq.s32.totalorder %s135, 0
      %s138 = sadd.s32 %s137, 1
      %s139 = scalar_select %p136, %s137, %s138
      %p142 = pneg %p136
      %p143 = scmp.eq.s32.totalorder %s33, 5
      %p144 = por %p142, %p143
      %p145 = scmp.ne.s32.totalorder %s137, %s140
      %p146 = scmp.eq.s32.totalorder %s33, 0
      %p147 = por %p145, %p146
      %p148 = scmp.ne.s32.totalorder %s137, %s140
      %p149 = scmp.eq.s32.totalorder %s38, 5
      %p150 = por %p148, %p149
      %p151 = scmp.ne.s32.totalorder %s140, %s141
      %p152 = scmp.eq.s32.totalorder %s38, 0
      %p153 = por %p151, %p152
      %p154 = scmp.ne.s32.totalorder %s140, %s141
      %p155 = scmp.eq.s32.totalorder %s39, 5
      %p156 = por %p154, %p155
      %p158 = scmp.ne.s32.totalorder %s141, %s157
      %p159 = scmp.eq.s32.totalorder %s39, 0
      %p160 = por %p158, %p159
      %s161 = ssub.s32 %s41, %s48
      %p162 = scmp.eq.s32.totalorder %s161, 0
      %s164 = sadd.s32 %s163, 1
      %s165 = scalar_select %p162, %s163, %s164
      %p168 = pneg %p162
      %p169 = scmp.eq.s32.totalorder %s33, 5
      %p170 = por %p168, %p169
      %p171 = scmp.ne.s32.totalorder %s163, %s166
      %p172 = scmp.eq.s32.totalorder %s33, 0
      %p173 = por %p171, %p172
      %p174 = scmp.ne.s32.totalorder %s163, %s166
      %p175 = scmp.eq.s32.totalorder %s38, 5
      %p176 = por %p174, %p175
      %p177 = scmp.ne.s32.totalorder %s166, %s167
      %p178 = scmp.eq.s32.totalorder %s38, 0
      %p179 = por %p177, %p178
      %p180 = scmp.ne.s32.totalorder %s166, %s167
      %p181 = scmp.eq.s32.totalorder %s39, 5
      %p182 = por %p180, %p181
      %p184 = scmp.ne.s32.totalorder %s167, %s183
      %p185 = scmp.eq.s32.totalorder %s39, 0
      %p186 = por %p184, %p185
      %s188 = sadd.s32 %s187, 1
      %p191 = scmp.eq.s32.totalorder %s33, 5
      %p192 = scmp.ne.s32.totalorder %s187, %s189
      %p193 = scmp.eq.s32.totalorder %s33, 0
      %p194 = por %p192, %p193
      %p195 = scmp.ne.s32.totalorder %s187, %s189
      %p196 = scmp.eq.s32.totalorder %s38, 5
      %p197 = por %p195, %p196
      %p198 = scmp.ne.s32.totalorder %s189, %s190
      %p199 = scmp.eq.s32.totalorder %s38, 0
      %p200 = por %p198, %p199
      %p201 = scmp.ne.s32.totalorder %s189, %s190
      %p202 = scmp.eq.s32.totalorder %s39, 5
      %p203 = por %p201, %p202
      %p205 = scmp.ne.s32.totalorder %s190, %s204
      %p206 = scmp.eq.s32.totalorder %s39, 0
      %p207 = por %p205, %p206
      %s209 = sadd.s32 %s208, 1
      %p212 = scmp.eq.s32.totalorder %s33, 5
      %p213 = scmp.ne.s32.totalorder %s208, %s210
      %p214 = scmp.eq.s32.totalorder %s33, 0
      %p215 = por %p213, %p214
      %p216 = scmp.ne.s32.totalorder %s208, %s210
      %p217 = scmp.eq.s32.totalorder %s38, 5
      %p218 = por %p216, %p217
      %p219 = scmp.ne.s32.totalorder %s210, %s211
      %p220 = scmp.eq.s32.totalorder %s38, 0
      %p221 = por %p219, %p220
      %p222 = scmp.ne.s32.totalorder %s210, %s211
      %p223 = scmp.eq.s32.totalorder %s39, 5
      %p224 = por %p222, %p223
      %p226 = scmp.ne.s32.totalorder %s211, %s225
      %p227 = scmp.eq.s32.totalorder %s39, 0
      %p228 = por %p226, %p227
      %s230 = sadd.s32 %s229, 1
      %p233 = scmp.eq.s32.totalorder %s33, 5
      %p234 = scmp.ne.s32.totalorder %s229, %s231
      %p235 = scmp.eq.s32.totalorder %s33, 0
      %p236 = por %p234, %p235
      %p237 = scmp.ne.s32.totalorder %s229, %s231
      %p238 = scmp.eq.s32.totalorder %s38, 5
      %p239 = por %p237, %p238
      %p240 = scmp.ne.s32.totalorder %s231, %s232
      %p241 = scmp.eq.s32.totalorder %s38, 0
      %p242 = por %p240, %p241
      %p243 = scmp.ne.s32.totalorder %s231, %s232
      %p244 = scmp.eq.s32.totalorder %s39, 5
      %p245 = por %p243, %p244
      %p247 = scmp.ne.s32.totalorder %s232, %s246
      %p248 = scmp.eq.s32.totalorder %s39, 0
      %p249 = por %p247, %p248
      %s251 = sadd.s32 %s250, 1
      %p254 = scmp.eq.s32.totalorder %s33, 5
      %p255 = scmp.ne.s32.totalorder %s250, %s252
      %p256 = scmp.eq.s32.totalorder %s33, 0
      %p257 = por %p255, %p256
      %p258 = scmp.ne.s32.totalorder %s250, %s252
      %p259 = scmp.eq.s32.totalorder %s38, 5
      %p260 = por %p258, %p259
      %p261 = scmp.ne.s32.totalorder %s252, %s253
      %p262 = scmp.eq.s32.totalorder %s38, 0
      %p263 = por %p261, %p262
      %p264 = scmp.ne.s32.totalorder %s252, %s253
      %p265 = scmp.eq.s32.totalorder %s39, 5
      %p266 = por %p264, %p265
      %p268 = scmp.ne.s32.totalorder %s253, %s267
      %p269 = scmp.eq.s32.totalorder %s39, 0
      %p270 = por %p268, %p269
      %s272 = sadd.s32 %s271, 1
      %p275 = scmp.eq.s32.totalorder %s33, 5
      %p276 = scmp.ne.s32.totalorder %s271, %s273
      %p277 = scmp.eq.s32.totalorder %s33, 0
      %p278 = por %p276, %p277
      %p279 = scmp.ne.s32.totalorder %s271, %s273
      %p280 = scmp.eq.s32.totalorder %s38, 5
      %p281 = por %p279, %p280
      %p282 = scmp.ne.s32.totalorder %s273, %s274
      %p283 = scmp.eq.s32.totalorder %s38, 0
      %p284 = por %p282, %p283
      %p285 = scmp.ne.s32.totalorder %s273, %s274
      %p286 = scmp.eq.s32.totalorder %s39, 5
      %p287 = por %p285, %p286
      %p289 = scmp.ne.s32.totalorder %s274, %s288
      %p290 = scmp.eq.s32.totalorder %s39, 0
      %p291 = por %p289, %p290
      %s293 = sadd.s32 %s292, 1
      %p296 = scmp.eq.s32.totalorder %s33, 5
      %p297 = scmp.ne.s32.totalorder %s292, %s294
      %p298 = scmp.eq.s32.totalorder %s33, 0
      %p299 = por %p297, %p298
      %p300 = scmp.ne.s32.totalorder %s292, %s294
      %p301 = scmp.eq.s32.totalorder %s38, 5
      %p302 = por %p300, %p301
      %p303 = scmp.ne.s32.totalorder %s294, %s295
      %p304 = scmp.eq.s32.totalorder %s38, 0
      %p305 = por %p303, %p304
      %p306 = scmp.ne.s32.totalorder %s294, %s295
      %p307 = scmp.eq.s32.totalorder %s39, 5
      %p308 = por %p306, %p307
      %p310 = scmp.ne.s32.totalorder %s295, %s309
      %p311 = scmp.eq.s32.totalorder %s39, 0
      %p312 = por %p310, %p311
      %s314 = sadd.s32 %s313, 1
      %p317 = scmp.eq.s32.totalorder %s33, 5
      %p318 = scmp.ne.s32.totalorder %s313, %s315
      %p319 = scmp.eq.s32.totalorder %s33, 0
      %p320 = por %p318, %p319
      %p321 = scmp.ne.s32.totalorder %s313, %s315
      %p322 = scmp.eq.s32.totalorder %s38, 5
      %p323 = por %p321, %p322
      %p324 = scmp.ne.s32.totalorder %s315, %s316
      %p325 = scmp.eq.s32.totalorder %s38, 0
      %p326 = por %p324, %p325
      %p327 = scmp.ne.s32.totalorder %s315, %s316
      %p328 = scmp.eq.s32.totalorder %s39, 5
      %p329 = por %p327, %p328
      %p331 = scmp.ne.s32.totalorder %s316, %s330
      %p332 = scmp.eq.s32.totalorder %s39, 0
      %p333 = por %p331, %p332
      %s335 = sadd.s32 %s334, 1
      %p338 = scmp.eq.s32.totalorder %s33, 5
      %p339 = scmp.ne.s32.totalorder %s334, %s336
      %p340 = scmp.eq.s32.totalorder %s33, 0
      %p341 = por %p339, %p340
      %p342 = scmp.ne.s32.totalorder %s334, %s336
      %p343 = scmp.eq.s32.totalorder %s38, 5
      %p344 = por %p342, %p343
      %p345 = scmp.ne.s32.totalorder %s336, %s337
      %p346 = scmp.eq.s32.totalorder %s38, 0
      %p347 = por %p345, %p346
      %p348 = scmp.ne.s32.totalorder %s336, %s337
      %p349 = scmp.eq.s32.totalorder %s39, 5
      %p350 = por %p348, %p349
      %p352 = scmp.ne.s32.totalorder %s337, %s351
      %p353 = scmp.eq.s32.totalorder %s39, 0
      %p354 = por %p352, %p353
      %s355 = ssub.s32 %s40, %s52
      %p356 = scmp.eq.s32.totalorder %s355, 0
      %s358 = sadd.s32 %s357, 1
      %s359 = scalar_select %p356, %s357, %s358
      %p362 = pneg %p356
      %p363 = scmp.eq.s32.totalorder %s33, 5
      %p364 = por %p362, %p363
      %p365 = scmp.ne.s32.totalorder %s357, %s360
      %p366 = scmp.eq.s32.totalorder %s33, 0
      %p367 = por %p365, %p366
      %p368 = scmp.ne.s32.totalorder %s357, %s360
      %p369 = scmp.eq.s32.totalorder %s38, 5
      %p370 = por %p368, %p369
      %p371 = scmp.ne.s32.totalorder %s360, %s361
      %p372 = scmp.eq.s32.totalorder %s38, 0
      %p373 = por %p371, %p372
      %p374 = scmp.ne.s32.totalorder %s360, %s361
      %p375 = scmp.eq.s32.totalorder %s39, 5
      %p376 = por %p374, %p375
      %p378 = scmp.ne.s32.totalorder %s361, %s377
      %p379 = scmp.eq.s32.totalorder %s39, 0
      %p380 = por %p378, %p379
      %p381 = scmp.le.s32.totalorder 1, %s33
      %p382 = scmp.lt.s32.totalorder %s33, 7
      %p383 = pnand %p381, %p382
      %p384 = pneg %p383
      // Predicated region
      $region9: #{tpu_custom_call.1} parent=5 // pred_check
        _
      $region10: #{tpu_custom_call.1} parent=5 // pred_check_branch
        %386 = sbr.rel (%p383) target = $region12
      $region11: #{tpu_custom_call.1} parent=5 // pred_region
        %s387 = ssub.s32 %s33, 1
        // Predicated region
        $region13: #{tpu_custom_call.1} parent=11 // pred_check
          %p388 = pneg %p200
        $region14: #{tpu_custom_call.1} parent=11 // pred_check_branch
          %390 = sbr.rel (%p388) target = $region16
        $region15: #{tpu_custom_call.1} parent=11 // pred_region
          %392 = vsyncadd [#allocation13], 0
          %s393 = sshll.u32 %s5, 4
          %s394 = int_to_ptr.hbm [resolvable:$true] %s393
          %s395 = sshll.u32 [#allocation12], 4
          %s396 = int_to_ptr.vmem [resolvable:$true] %s395
          %401 = dma.hbm_to_vmem [thread:$0]  %s394, 2048, %s396, [#allocation13], 128, 128, 8
        $region16: #{tpu_custom_call.1} parent=11 // pred_fallthru
          _
        // Predicated region
        $region17: #{tpu_custom_call.1} parent=11 // pred_check
          %p402 = pneg %p221
        $region18: #{tpu_custom_call.1} parent=11 // pred_check_branch
          %404 = sbr.rel (%p402) target = $region20
        $region19: #{tpu_custom_call.1} parent=11 // pred_region
          %406 = vsyncadd [#allocation13], 0
          %s407 = sshll.u32 %s6, 4
          %s408 = int_to_ptr.hbm [resolvable:$true] %s407
          %s409 = sshll.u32 [#allocation14], 4
          %s410 = int_to_ptr.vmem [resolvable:$true] %s409
          %415 = dma.hbm_to_vmem [thread:$0]  %s408, 2048, %s410, [#allocation13], 128, 128, 8
        $region20: #{tpu_custom_call.1} parent=11 // pred_fallthru
          _
        // Predicated region
        $region21: #{tpu_custom_call.1} parent=11 // pred_check
          %p416 = pneg %p242
        $region22: #{tpu_custom_call.1} parent=11 // pred_check_branch
          %418 = sbr.rel (%p416) target = $region24
        $region23: #{tpu_custom_call.1} parent=11 // pred_region
          %420 = vsyncadd [#allocation16], 0
          %s421 = sshll.u32 %s7, 4
          %s422 = int_to_ptr.hbm [resolvable:$true] %s421
          %s423 = sshll.u32 [#allocation15], 4
          %s424 = int_to_ptr.vmem [resolvable:$true] %s423
          %429 = dma.hbm_to_vmem [thread:$0]  %s422, 2048, %s424, [#allocation16], 128, 128, 8
        $region24: #{tpu_custom_call.1} parent=11 // pred_fallthru
          _
        // Predicated region
        $region25: #{tpu_custom_call.1} parent=11 // pred_check
          %p430 = pneg %p263
        $region26: #{tpu_custom_call.1} parent=11 // pred_check_branch
          %432 = sbr.rel (%p430) target = $region28
        $region27: #{tpu_custom_call.1} parent=11 // pred_region
          %434 = vsyncadd [#allocation16], 0
          %s435 = sshll.u32 %s8, 4
          %s436 = int_to_ptr.hbm [resolvable:$true] %s435
          %s437 = sshll.u32 [#allocation17], 4
          %s438 = int_to_ptr.vmem [resolvable:$true] %s437
          %443 = dma.hbm_to_vmem [thread:$0]  %s436, 2048, %s438, [#allocation16], 128, 128, 8
        $region28: #{tpu_custom_call.1} parent=11 // pred_fallthru
          _
        // Predicated region
        $region29: #{tpu_custom_call.1} parent=11 // pred_check
          %p444 = pneg %p284
        $region30: #{tpu_custom_call.1} parent=11 // pred_check_branch
          %446 = sbr.rel (%p444) target = $region32
        $region31: #{tpu_custom_call.1} parent=11 // pred_region
          %448 = vsyncadd [#allocation19], 0
          %s449 = sshll.u32 %s9, 4
          %s450 = int_to_ptr.hbm [resolvable:$true] %s449
          %s451 = sshll.u32 [#allocation18], 4
          %s452 = int_to_ptr.vmem [resolvable:$true] %s451
          %457 = dma.hbm_to_vmem [thread:$0]  %s450, 2048, %s452, [#allocation19], 128, 128, 8
        $region32: #{tpu_custom_call.1} parent=11 // pred_fallthru
          _
        // Predicated region
        $region33: #{tpu_custom_call.1} parent=11 // pred_check
          %p458 = pneg %p305
        $region34: #{tpu_custom_call.1} parent=11 // pred_check_branch
          %460 = sbr.rel (%p458) target = $region36
        $region35: #{tpu_custom_call.1} parent=11 // pred_region
          %462 = vsyncadd [#allocation19], 0
          %s463 = sshll.u32 %s10, 4
          %s464 = int_to_ptr.hbm [resolvable:$true] %s463
          %s465 = sshll.u32 [#allocation20], 4
          %s466 = int_to_ptr.vmem [resolvable:$true] %s465
          %471 = dma.hbm_to_vmem [thread:$0]  %s464, 2048, %s466, [#allocation19], 128, 128, 8
        $region36: #{tpu_custom_call.1} parent=11 // pred_fallthru
          _
        // Predicated region
        $region37: #{tpu_custom_call.1} parent=11 // pred_check
          %p472 = pneg %p326
        $region38: #{tpu_custom_call.1} parent=11 // pred_check_branch
          %474 = sbr.rel (%p472) target = $region40
        $region39: #{tpu_custom_call.1} parent=11 // pred_region
          %476 = vsyncadd [#allocation22], 0
          %s478 = sshll.u32 %s11, 4
          %s479 = int_to_ptr.hbm [resolvable:$true] %s478
          %s480 = sshll.u32 [#allocation21], 4
          %s481 = int_to_ptr.vmem [resolvable:$true] %s480
          %483 = dma.hbm_to_vmem [thread:$0]  %s479, 128, %s481, [#allocation22]
        $region40: #{tpu_custom_call.1} parent=11 // pred_fallthru
          _
        // Predicated region
        $region41: #{tpu_custom_call.1} parent=11 // pred_check
          %p484 = pneg %p347
        $region42: #{tpu_custom_call.1} parent=11 // pred_check_branch
          %486 = sbr.rel (%p484) target = $region44
        $region43: #{tpu_custom_call.1} parent=11 // pred_region
          %488 = vsyncadd [#allocation5], 0
          %s490 = sshll.u32 %s12, 4
          %s491 = int_to_ptr.hbm [resolvable:$true] %s490
          %493 = dma.hbm_to_smem %s491, 16, [#allocation23], [#allocation5]
        $region44: #{tpu_custom_call.1} parent=11 // pred_fallthru
          _
      $region12: #{tpu_custom_call.1} parent=5 // pred_fallthru
        _
      %p494 = scmp.lt.s32.totalorder %s33, 6
      // Predicated region
      $region45: #{tpu_custom_call.1} parent=5 // pred_check
        %p495 = pneg %p494
      $region46: #{tpu_custom_call.1} parent=5 // pred_check_branch
        %497 = sbr.rel (%p495) target = $region48
      $region47: #{tpu_custom_call.1} parent=5 // pred_region
        // Predicated region
        $region49: #{tpu_custom_call.1} parent=47 // pred_check
          %p498 = pneg %p65
        $region50: #{tpu_custom_call.1} parent=47 // pred_check_branch
          %500 = sbr.rel (%p498) target = $region52
        $region51: #{tpu_custom_call.1} parent=47 // pred_region
          %s501 = sand.u32 %s55, 1
          %s502 = scalar_lea.sflag [#allocation4], %s501
          %s503 = sand.u32 %s55, 1
          %s504 = smul.addr %s503, 256
          %s505 = scalar_lea.vmem [#allocation3], %s504
          %s506 = smul.u32 32, %s40
          %508 = vsyncadd %s502, 0
          %s509 = smul.addr %s506, 8
          %s510 = scalar_lea.hbm %s0, %s509
          %s511 = sshll.u32 %s510, 4
          %s512 = int_to_ptr.hbm [resolvable:$true] %s511
          %s513 = sshll.u32 %s505, 4
          %s514 = int_to_ptr.vmem [resolvable:$true] %s513
          %519 = dma.hbm_to_vmem [thread:$0]  %s512, 4096, %s514, %s502, 128, 128, 8
        $region52: #{tpu_custom_call.1} parent=47 // pred_fallthru
          _
        // Predicated region
        $region53: #{tpu_custom_call.1} parent=47 // pred_check
          %p520 = pneg %p91
        $region54: #{tpu_custom_call.1} parent=47 // pred_check_branch
          %522 = sbr.rel (%p520) target = $region56
        $region55: #{tpu_custom_call.1} parent=47 // pred_region
          %s523 = sand.u32 %s33, 1
          %s524 = scalar_lea.sflag [#allocation7], %s523
          %s525 = sand.u32 %s81, 1
          %s526 = smul.addr %s525, 256
          %s527 = scalar_lea.vmem [#allocation6], %s526
          %s528 = smul.u32 32, %s40
          %530 = vsyncadd %s524, 0
          %s531 = smul.addr %s528, 8
          %s532 = scalar_lea.hbm %s1, %s531
          %s533 = sshll.u32 %s532, 4
          %s534 = int_to_ptr.hbm [resolvable:$true] %s533
          %s535 = sshll.u32 %s527, 4
          %s536 = int_to_ptr.vmem [resolvable:$true] %s535
          %541 = dma.hbm_to_vmem [thread:$0]  %s534, 4096, %s536, %s524, 128, 128, 8
        $region56: #{tpu_custom_call.1} parent=47 // pred_fallthru
          _
        // Predicated region
        $region57: #{tpu_custom_call.1} parent=47 // pred_check
          %p542 = pneg %p119
        $region58: #{tpu_custom_call.1} parent=47 // pred_check_branch
          %544 = sbr.rel (%p542) target = $region60
        $region59: #{tpu_custom_call.1} parent=47 // pred_region
          %s545 = sand.u32 %s33, 1
          %s546 = scalar_lea.sflag [#allocation7], %s545
          %s547 = sand.u32 %s109, 1
          %s548 = smul.addr %s547, 512
          %s549 = scalar_lea.vmem [#allocation8], %s548
          %s550 = smul.u32 32, %s40
          %s551 = smul.u32 2, %s41
          %553 = vsyncadd %s546, 0
          %s554 = smul.addr %s550, 6
          %s555 = sadd.s32 %s551, %s554
          %s556 = smul.addr %s555, 8
          %s557 = scalar_lea.hbm %s2, %s556
          %s558 = sshll.u32 %s557, 4
          %s559 = int_to_ptr.hbm [resolvable:$true] %s558
          %s560 = sshll.u32 %s549, 4
          %s561 = int_to_ptr.vmem [resolvable:$true] %s560
          %566 = dma.hbm_to_vmem [thread:$0]  %s559, 8192, %s561, %s546, 768, 256, 16
        $region60: #{tpu_custom_call.1} parent=47 // pred_fallthru
          _
        // Predicated region
        $region61: #{tpu_custom_call.1} parent=47 // pred_check
          %p567 = pneg %p147
        $region62: #{tpu_custom_call.1} parent=47 // pred_check_branch
          %569 = sbr.rel (%p567) target = $region64
        $region63: #{tpu_custom_call.1} parent=47 // pred_region
          %s570 = sand.u32 %s33, 1
          %s571 = scalar_lea.sflag [#allocation10], %s570
          %s572 = sand.u32 %s137, 1
          %s573 = smul.addr %s572, 512
          %s574 = scalar_lea.vmem [#allocation9], %s573
          %s575 = smul.u32 32, %s40
          %s576 = smul.u32 2, %s41
          %578 = vsyncadd %s571, 0
          %s579 = smul.addr %s575, 6
          %s580 = sadd.s32 %s576, %s579
          %s581 = smul.addr %s580, 8
          %s582 = scalar_lea.hbm %s3, %s581
          %s583 = sshll.u32 %s582, 4
          %s584 = int_to_ptr.hbm [resolvable:$true] %s583
          %s585 = sshll.u32 %s574, 4
          %s586 = int_to_ptr.vmem [resolvable:$true] %s585
          %591 = dma.hbm_to_vmem [thread:$0]  %s584, 8192, %s586, %s571, 768, 256, 16
        $region64: #{tpu_custom_call.1} parent=47 // pred_fallthru
          _
        // Predicated region
        $region65: #{tpu_custom_call.1} parent=47 // pred_check
          %p592 = pneg %p173
        $region66: #{tpu_custom_call.1} parent=47 // pred_check_branch
          %594 = sbr.rel (%p592) target = $region68
        $region67: #{tpu_custom_call.1} parent=47 // pred_region
          %s595 = sand.u32 %s33, 1
          %s596 = scalar_lea.sflag [#allocation10], %s595
          %s597 = sand.u32 %s163, 1
          %s598 = smul.addr %s597, 256
          %s599 = scalar_lea.vmem [#allocation11], %s598
          %s600 = smul.u32 32, %s41
          %602 = vsyncadd %s596, 0
          %s603 = smul.addr %s600, 8
          %s604 = scalar_lea.hbm %s4, %s603
          %s605 = sshll.u32 %s604, 4
          %s606 = int_to_ptr.hbm [resolvable:$true] %s605
          %s607 = sshll.u32 %s599, 4
          %s608 = int_to_ptr.vmem [resolvable:$true] %s607
          %613 = dma.hbm_to_vmem [thread:$0]  %s606, 4096, %s608, %s596, 128, 128, 8
        $region68: #{tpu_custom_call.1} parent=47 // pred_fallthru
          _
      $region48: #{tpu_custom_call.1} parent=5 // pred_fallthru
        _
      %p614 = scmp.le.s32.totalorder 1, %s33
      %p615 = scmp.lt.s32.totalorder %s33, 7
      %p616 = pnand %p614, %p615
      %p617 = pneg %p616
      // Predicated region
      $region69: #{tpu_custom_call.1} parent=5 // pred_check
        _
      $region70: #{tpu_custom_call.1} parent=5 // pred_check_branch
        %619 = sbr.rel (%p616) target = $region72
      $region71: #{tpu_custom_call.1} parent=5 // pred_region
        %s620 = ssub.s32 %s33, 1
        %s621 = sand.u32 %s58, 1
        %s622 = scalar_lea.sflag [#allocation4], %s621
        %s623 = sand.u32 %s58, 1
        %s624 = smul.addr %s623, 256
        %s625 = scalar_lea.vmem [#allocation3], %s624
        // Predicated region
        $region73: #{tpu_custom_call.1} parent=71 // pred_check
          %p626 = pneg %p71
        $region74: #{tpu_custom_call.1} parent=71 // pred_check_branch
          %628 = sbr.rel (%p626) target = $region76
        $region75: #{tpu_custom_call.1} parent=71 // pred_region
          %630 = dma.done %s622, 4096
        $region76: #{tpu_custom_call.1} parent=71 // pred_fallthru
          _
        %s631 = sand.u32 %s38, 1
        %s632 = scalar_lea.sflag [#allocation7], %s631
        %s633 = sand.u32 %s84, 1
        %s634 = smul.addr %s633, 256
        %s635 = scalar_lea.vmem [#allocation6], %s634
        // Predicated region
        $region77: #{tpu_custom_call.1} parent=71 // pred_check
          %p636 = pneg %p97
        $region78: #{tpu_custom_call.1} parent=71 // pred_check_branch
          %638 = sbr.rel (%p636) target = $region80
        $region79: #{tpu_custom_call.1} parent=71 // pred_region
          %640 = dma.done %s632, 4096
        $region80: #{tpu_custom_call.1} parent=71 // pred_fallthru
          _
        %s641 = sand.u32 %s38, 1
        %s642 = scalar_lea.sflag [#allocation7], %s641
        %s643 = sand.u32 %s112, 1
        %s644 = smul.addr %s643, 512
        %s645 = scalar_lea.vmem [#allocation8], %s644
        // Predicated region
        $region81: #{tpu_custom_call.1} parent=71 // pred_check
          %p646 = pneg %p125
        $region82: #{tpu_custom_call.1} parent=71 // pred_check_branch
          %648 = sbr.rel (%p646) target = $region84
        $region83: #{tpu_custom_call.1} parent=71 // pred_region
          %650 = dma.done %s642, 8192
        $region84: #{tpu_custom_call.1} parent=71 // pred_fallthru
          _
        %s651 = sand.u32 %s38, 1
        %s652 = scalar_lea.sflag [#allocation10], %s651
        %s653 = sand.u32 %s140, 1
        %s654 = smul.addr %s653, 512
        %s655 = scalar_lea.vmem [#allocation9], %s654
        // Predicated region
        $region85: #{tpu_custom_call.1} parent=71 // pred_check
          %p656 = pneg %p153
        $region86: #{tpu_custom_call.1} parent=71 // pred_check_branch
          %658 = sbr.rel (%p656) target = $region88
        $region87: #{tpu_custom_call.1} parent=71 // pred_region
          %660 = dma.done %s652, 8192
        $region88: #{tpu_custom_call.1} parent=71 // pred_fallthru
          _
        %s661 = sand.u32 %s38, 1
        %s662 = scalar_lea.sflag [#allocation10], %s661
        %s663 = sand.u32 %s166, 1
        %s664 = smul.addr %s663, 256
        %s665 = scalar_lea.vmem [#allocation11], %s664
        // Predicated region
        $region89: #{tpu_custom_call.1} parent=71 // pred_check
          %p666 = pneg %p179
        $region90: #{tpu_custom_call.1} parent=71 // pred_check_branch
          %668 = sbr.rel (%p666) target = $region92
        $region91: #{tpu_custom_call.1} parent=71 // pred_region
          %670 = dma.done %s662, 4096
        $region92: #{tpu_custom_call.1} parent=71 // pred_fallthru
          _
        // Predicated region
        $region93: #{tpu_custom_call.1} parent=71 // pred_check
          %p671 = pneg %p200
        $region94: #{tpu_custom_call.1} parent=71 // pred_check_branch
          %673 = sbr.rel (%p671) target = $region96
        $region95: #{tpu_custom_call.1} parent=71 // pred_region
          %675 = dma.done [#allocation13], 2048
        $region96: #{tpu_custom_call.1} parent=71 // pred_fallthru
          _
        // Predicated region
        $region97: #{tpu_custom_call.1} parent=71 // pred_check
          %p676 = pneg %p221
        $region98: #{tpu_custom_call.1} parent=71 // pred_check_branch
          %678 = sbr.rel (%p676) target = $region100
        $region99: #{tpu_custom_call.1} parent=71 // pred_region
          %680 = dma.done [#allocation13], 2048
        $region100: #{tpu_custom_call.1} parent=71 // pred_fallthru
          _
        // Predicated region
        $region101: #{tpu_custom_call.1} parent=71 // pred_check
          %p681 = pneg %p242
        $region102: #{tpu_custom_call.1} parent=71 // pred_check_branch
          %683 = sbr.rel (%p681) target = $region104
        $region103: #{tpu_custom_call.1} parent=71 // pred_region
          %685 = dma.done [#allocation16], 2048
        $region104: #{tpu_custom_call.1} parent=71 // pred_fallthru
          _
        // Predicated region
        $region105: #{tpu_custom_call.1} parent=71 // pred_check
          %p686 = pneg %p263
        $region106: #{tpu_custom_call.1} parent=71 // pred_check_branch
          %688 = sbr.rel (%p686) target = $region108
        $region107: #{tpu_custom_call.1} parent=71 // pred_region
          %690 = dma.done [#allocation16], 2048
        $region108: #{tpu_custom_call.1} parent=71 // pred_fallthru
          _
        // Predicated region
        $region109: #{tpu_custom_call.1} parent=71 // pred_check
          %p691 = pneg %p284
        $region110: #{tpu_custom_call.1} parent=71 // pred_check_branch
          %693 = sbr.rel (%p691) target = $region112
        $region111: #{tpu_custom_call.1} parent=71 // pred_region
          %695 = dma.done [#allocation19], 2048
        $region112: #{tpu_custom_call.1} parent=71 // pred_fallthru
          _
        // Predicated region
        $region113: #{tpu_custom_call.1} parent=71 // pred_check
          %p696 = pneg %p305
        $region114: #{tpu_custom_call.1} parent=71 // pred_check_branch
          %698 = sbr.rel (%p696) target = $region116
        $region115: #{tpu_custom_call.1} parent=71 // pred_region
          %700 = dma.done [#allocation19], 2048
        $region116: #{tpu_custom_call.1} parent=71 // pred_fallthru
          _
        // Predicated region
        $region117: #{tpu_custom_call.1} parent=71 // pred_check
          %p701 = pneg %p326
        $region118: #{tpu_custom_call.1} parent=71 // pred_check_branch
          %703 = sbr.rel (%p701) target = $region120
        $region119: #{tpu_custom_call.1} parent=71 // pred_region
          %705 = dma.done [#allocation22], 128
        $region120: #{tpu_custom_call.1} parent=71 // pred_fallthru
          _
        // Predicated region
        $region121: #{tpu_custom_call.1} parent=71 // pred_check
          %p706 = pneg %p347
        $region122: #{tpu_custom_call.1} parent=71 // pred_check_branch
          %708 = sbr.rel (%p706) target = $region124
        $region123: #{tpu_custom_call.1} parent=71 // pred_region
          %710 = dma.done [#allocation5], 16
        $region124: #{tpu_custom_call.1} parent=71 // pred_fallthru
          _
        %711 = sfence
        %s712 = sand.u32 %s58, 1
        %s713 = scalar_lea.sflag [#allocation4], %s712
        %s714 = sand.u32 %s58, 1
        %s715 = smul.addr %s714, 256
        %s716 = scalar_lea.vmem [#allocation3], %s715
        %p717 = pneg %p71
        %p718 = pneg %p68
        %s719 = sand.u32 %s38, 1
        %s720 = scalar_lea.sflag [#allocation7], %s719
        %s721 = sand.u32 %s84, 1
        %s722 = smul.addr %s721, 256
        %s723 = scalar_lea.vmem [#allocation6], %s722
        %p724 = pneg %p97
        %p725 = pneg %p94
        %s726 = sand.u32 %s38, 1
        %s727 = scalar_lea.sflag [#allocation7], %s726
        %s728 = sand.u32 %s112, 1
        %s729 = smul.addr %s728, 512
        %s730 = scalar_lea.vmem [#allocation8], %s729
        %p731 = pneg %p125
        %p732 = pneg %p122
        %s733 = sand.u32 %s38, 1
        %s734 = scalar_lea.sflag [#allocation10], %s733
        %s735 = sand.u32 %s140, 1
        %s736 = smul.addr %s735, 512
        %s737 = scalar_lea.vmem [#allocation9], %s736
        %p738 = pneg %p153
        %p739 = pneg %p150
        %s740 = sand.u32 %s38, 1
        %s741 = scalar_lea.sflag [#allocation10], %s740
        %s742 = sand.u32 %s166, 1
        %s743 = smul.addr %s742, 256
        %s744 = scalar_lea.vmem [#allocation11], %s743
        %p745 = pneg %p179
        %p746 = pneg %p176
        %p747 = pneg %p200
        %p748 = pneg %p197
        %p749 = pneg %p221
        %p750 = pneg %p218
        %p751 = pneg %p242
        %p752 = pneg %p239
        %p753 = pneg %p263
        %p754 = pneg %p260
        %p755 = pneg %p284
        %p756 = pneg %p281
        %p757 = pneg %p305
        %p758 = pneg %p302
        %p759 = pneg %p326
        %p760 = pneg %p323
        %p761 = pneg %p347
        %p762 = pneg %p344
        %p763 = pneg %p373
        %p764 = pneg %p370
        %s765 = smul.u32 32, %s42
        %p766 = scmp.lt.s32.totalorder %s765, 63
        %s767 = scalar_select %p766, %s765, 63
        %s768 = smul.addr %s767, 8
        %s769 = scalar_lea.vmem %s13, %s768
        %s770 = smul.u32 32, %s42
        %s771 = smul.u32 32, %s42
        %s772 = smul.u32 32, %s42
        %s773 = smul.u32 2, %s43
        %s774 = smul.u32 32, %s42
        %s775 = smul.u32 2, %s43
        %s776 = smul.u32 32, %s43
        %s777 = smul.u32 32, %s42
        %p778 = scmp.lt.s32.totalorder %s777, 63
        %s779 = scalar_select %p778, %s777, 63
        %s780 = smul.addr %s779, 8
        %s781 = scalar_lea.vmem %s13, %s780
        %s782 = smul.u32 32, %s42
        %p783 = scmp.eq.s32.totalorder %s43, 0
        // Predicated region
        $region125: #{tpu_custom_call.1} parent=71 // pred_check
          %p784 = pneg %p783
        $region126: #{tpu_custom_call.1} parent=71 // pred_check_branch
          %786 = sbr.rel (%p784) target = $region128
        $region127: #{tpu_custom_call.1} parent=71 // pred_region
          %787 = vst [vmem:[#allocation2] sm:$0xff] 0.0
          %788 = vst [vmem:[#allocation2 + $0x8] sm:$0xff] 0.0
          %789 = vst [vmem:[#allocation2 + $0x10] sm:$0xff] 0.0
          %790 = vst [vmem:[#allocation2 + $0x18] sm:$0xff] 0.0
          %791 = vst [vmem:[#allocation2 + $0x20] sm:$0xff] 0.0
          %792 = vst [vmem:[#allocation2 + $0x28] sm:$0xff] 0.0
          %793 = vst [vmem:[#allocation2 + $0x30] sm:$0xff] 0.0
          %794 = vst [vmem:[#allocation2 + $0x38] sm:$0xff] 0.0
          %795 = vst [vmem:[#allocation2 + $0x40] sm:$0xff] 0.0
          %796 = vst [vmem:[#allocation2 + $0x48] sm:$0xff] 0.0
          %797 = vst [vmem:[#allocation2 + $0x50] sm:$0xff] 0.0
          %798 = vst [vmem:[#allocation2 + $0x58] sm:$0xff] 0.0
          %799 = vst [vmem:[#allocation2 + $0x60] sm:$0xff] 0.0
          %800 = vst [vmem:[#allocation2 + $0x68] sm:$0xff] 0.0
          %801 = vst [vmem:[#allocation2 + $0x70] sm:$0xff] 0.0
          %802 = vst [vmem:[#allocation2 + $0x78] sm:$0xff] 0.0
          %803 = vst [vmem:[#allocation2 + $0x80] sm:$0xff] 0.0
          %804 = vst [vmem:[#allocation2 + $0x88] sm:$0xff] 0.0
          %805 = vst [vmem:[#allocation2 + $0x90] sm:$0xff] 0.0
          %806 = vst [vmem:[#allocation2 + $0x98] sm:$0xff] 0.0
          %807 = vst [vmem:[#allocation2 + $0xa0] sm:$0xff] 0.0
          %808 = vst [vmem:[#allocation2 + $0xa8] sm:$0xff] 0.0
          %809 = vst [vmem:[#allocation2 + $0xb0] sm:$0xff] 0.0
          %810 = vst [vmem:[#allocation2 + $0xb8] sm:$0xff] 0.0
          %811 = vst [vmem:[#allocation2 + $0xc0] sm:$0xff] 0.0
          %812 = vst [vmem:[#allocation2 + $0xc8] sm:$0xff] 0.0
          %813 = vst [vmem:[#allocation2 + $0xd0] sm:$0xff] 0.0
          %814 = vst [vmem:[#allocation2 + $0xd8] sm:$0xff] 0.0
          %815 = vst [vmem:[#allocation2 + $0xe0] sm:$0xff] 0.0
          %816 = vst [vmem:[#allocation2 + $0xe8] sm:$0xff] 0.0
          %817 = vst [vmem:[#allocation2 + $0xf0] sm:$0xff] 0.0
          %818 = vst [vmem:[#allocation2 + $0xf8] sm:$0xff] 0.0
        $region128: #{tpu_custom_call.1} parent=71 // pred_fallthru
          _
        %v819 = vld [vmem:[%s645] sm:$0xff]
        %v820 = vld [vmem:[%s645 + $0x8] sm:$0xff]
        %v821 = vld [vmem:[%s645 + $0x10] sm:$0xff]
        %v822 = vld [vmem:[%s645 + $0x18] sm:$0xff]
        %v823 = vld [vmem:[%s645 + $0x20] sm:$0xff]
        %v824 = vld [vmem:[%s645 + $0x28] sm:$0xff]
        %v825 = vld [vmem:[%s645 + $0x30] sm:$0xff]
        %v826 = vld [vmem:[%s645 + $0x38] sm:$0xff]
        %v827 = vld [vmem:[%s645 + $0x40] sm:$0xff]
        %v828 = vld [vmem:[%s645 + $0x48] sm:$0xff]
        %v829 = vld [vmem:[%s645 + $0x50] sm:$0xff]
        %v830 = vld [vmem:[%s645 + $0x58] sm:$0xff]
        %v831 = vld [vmem:[%s645 + $0x60] sm:$0xff]
        %v832 = vld [vmem:[%s645 + $0x68] sm:$0xff]
        %v833 = vld [vmem:[%s645 + $0x70] sm:$0xff]
        %v834 = vld [vmem:[%s645 + $0x78] sm:$0xff]
        %v835 = vld [vmem:[%s645 + $0x80] sm:$0xff]
        %v836 = vld [vmem:[%s645 + $0x88] sm:$0xff]
        %v837 = vld [vmem:[%s645 + $0x90] sm:$0xff]
        %v838 = vld [vmem:[%s645 + $0x98] sm:$0xff]
        %v839 = vld [vmem:[%s645 + $0xa0] sm:$0xff]
        %v840 = vld [vmem:[%s645 + $0xa8] sm:$0xff]
        %v841 = vld [vmem:[%s645 + $0xb0] sm:$0xff]
        %v842 = vld [vmem:[%s645 + $0xb8] sm:$0xff]
        %v843 = vld [vmem:[%s645 + $0xc0] sm:$0xff]
        %v844 = vld [vmem:[%s645 + $0xc8] sm:$0xff]
        %v845 = vld [vmem:[%s645 + $0xd0] sm:$0xff]
        %v846 = vld [vmem:[%s645 + $0xd8] sm:$0xff]
        %v847 = vld [vmem:[%s645 + $0xe0] sm:$0xff]
        %v848 = vld [vmem:[%s645 + $0xe8] sm:$0xff]
        %v849 = vld [vmem:[%s645 + $0xf0] sm:$0xff]
        %v850 = vld [vmem:[%s645 + $0xf8] sm:$0xff]
        %v851 = vld [vmem:[%s645 + $0x100] sm:$0xff]
        %v852 = vld [vmem:[%s645 + $0x108] sm:$0xff]
        %v853 = vld [vmem:[%s645 + $0x110] sm:$0xff]
        %v854 = vld [vmem:[%s645 + $0x118] sm:$0xff]
        %v855 = vld [vmem:[%s645 + $0x120] sm:$0xff]
        %v856 = vld [vmem:[%s645 + $0x128] sm:$0xff]
        %v857 = vld [vmem:[%s645 + $0x130] sm:$0xff]
        %v858 = vld [vmem:[%s645 + $0x138] sm:$0xff]
        %v859 = vld [vmem:[%s645 + $0x140] sm:$0xff]
        %v860 = vld [vmem:[%s645 + $0x148] sm:$0xff]
        %v861 = vld [vmem:[%s645 + $0x150] sm:$0xff]
        %v862 = vld [vmem:[%s645 + $0x158] sm:$0xff]
        %v863 = vld [vmem:[%s645 + $0x160] sm:$0xff]
        %v864 = vld [vmem:[%s645 + $0x168] sm:$0xff]
        %v865 = vld [vmem:[%s645 + $0x170] sm:$0xff]
        %v866 = vld [vmem:[%s645 + $0x178] sm:$0xff]
        %v867 = vld [vmem:[%s645 + $0x180] sm:$0xff]
        %v868 = vld [vmem:[%s645 + $0x188] sm:$0xff]
        %v869 = vld [vmem:[%s645 + $0x190] sm:$0xff]
        %v870 = vld [vmem:[%s645 + $0x198] sm:$0xff]
        %v871 = vld [vmem:[%s645 + $0x1a0] sm:$0xff]
        %v872 = vld [vmem:[%s645 + $0x1a8] sm:$0xff]
        %v873 = vld [vmem:[%s645 + $0x1b0] sm:$0xff]
        %v874 = vld [vmem:[%s645 + $0x1b8] sm:$0xff]
        %v875 = vld [vmem:[%s645 + $0x1c0] sm:$0xff]
        %v876 = vld [vmem:[%s645 + $0x1c8] sm:$0xff]
        %v877 = vld [vmem:[%s645 + $0x1d0] sm:$0xff]
        %v878 = vld [vmem:[%s645 + $0x1d8] sm:$0xff]
        %v879 = vld [vmem:[%s645 + $0x1e0] sm:$0xff]
        %v880 = vld [vmem:[%s645 + $0x1e8] sm:$0xff]
        %v881 = vld [vmem:[%s645 + $0x1f0] sm:$0xff]
        %v882 = vld [vmem:[%s645 + $0x1f8] sm:$0xff]
        %v883 = vld [vmem:[%s655] sm:$0xff]
        %v884 = vld [vmem:[%s655 + $0x8] sm:$0xff]
        %v885 = vld [vmem:[%s655 + $0x10] sm:$0xff]
        %v886 = vld [vmem:[%s655 + $0x18] sm:$0xff]
        %v887 = vld [vmem:[%s655 + $0x20] sm:$0xff]
        %v888 = vld [vmem:[%s655 + $0x28] sm:$0xff]
        %v889 = vld [vmem:[%s655 + $0x30] sm:$0xff]
        %v890 = vld [vmem:[%s655 + $0x38] sm:$0xff]
        %v891 = vld [vmem:[%s655 + $0x40] sm:$0xff]
        %v892 = vld [vmem:[%s655 + $0x48] sm:$0xff]
        %v893 = vld [vmem:[%s655 + $0x50] sm:$0xff]
        %v894 = vld [vmem:[%s655 + $0x58] sm:$0xff]
        %v895 = vld [vmem:[%s655 + $0x60] sm:$0xff]
        %v896 = vld [vmem:[%s655 + $0x68] sm:$0xff]
        %v897 = vld [vmem:[%s655 + $0x70] sm:$0xff]
        %v898 = vld [vmem:[%s655 + $0x78] sm:$0xff]
        %v899 = vld [vmem:[%s655 + $0x80] sm:$0xff]
        %v900 = vld [vmem:[%s655 + $0x88] sm:$0xff]
        %v901 = vld [vmem:[%s655 + $0x90] sm:$0xff]
        %v902 = vld [vmem:[%s655 + $0x98] sm:$0xff]
        %v903 = vld [vmem:[%s655 + $0xa0] sm:$0xff]
        %v904 = vld [vmem:[%s655 + $0xa8] sm:$0xff]
        %v905 = vld [vmem:[%s655 + $0xb0] sm:$0xff]
        %v906 = vld [vmem:[%s655 + $0xb8] sm:$0xff]
        %v907 = vld [vmem:[%s655 + $0xc0] sm:$0xff]
        %v908 = vld [vmem:[%s655 + $0xc8] sm:$0xff]
        %v909 = vld [vmem:[%s655 + $0xd0] sm:$0xff]
        %v910 = vld [vmem:[%s655 + $0xd8] sm:$0xff]
        %v911 = vld [vmem:[%s655 + $0xe0] sm:$0xff]
        %v912 = vld [vmem:[%s655 + $0xe8] sm:$0xff]
        %v913 = vld [vmem:[%s655 + $0xf0] sm:$0xff]
        %v914 = vld [vmem:[%s655 + $0xf8] sm:$0xff]
        %v915 = vld [vmem:[%s655 + $0x100] sm:$0xff]
        %v916 = vld [vmem:[%s655 + $0x108] sm:$0xff]
        %v917 = vld [vmem:[%s655 + $0x110] sm:$0xff]
        %v918 = vld [vmem:[%s655 + $0x118] sm:$0xff]
        %v919 = vld [vmem:[%s655 + $0x120] sm:$0xff]
        %v920 = vld [vmem:[%s655 + $0x128] sm:$0xff]
        %v921 = vld [vmem:[%s655 + $0x130] sm:$0xff]
        %v922 = vld [vmem:[%s655 + $0x138] sm:$0xff]
        %v923 = vld [vmem:[%s655 + $0x140] sm:$0xff]
        %v924 = vld [vmem:[%s655 + $0x148] sm:$0xff]
        %v925 = vld [vmem:[%s655 + $0x150] sm:$0xff]
        %v926 = vld [vmem:[%s655 + $0x158] sm:$0xff]
        %v927 = vld [vmem:[%s655 + $0x160] sm:$0xff]
        %v928 = vld [vmem:[%s655 + $0x168] sm:$0xff]
        %v929 = vld [vmem:[%s655 + $0x170] sm:$0xff]
        %v930 = vld [vmem:[%s655 + $0x178] sm:$0xff]
        %v931 = vld [vmem:[%s655 + $0x180] sm:$0xff]
        %v932 = vld [vmem:[%s655 + $0x188] sm:$0xff]
        %v933 = vld [vmem:[%s655 + $0x190] sm:$0xff]
        %v934 = vld [vmem:[%s655 + $0x198] sm:$0xff]
        %v935 = vld [vmem:[%s655 + $0x1a0] sm:$0xff]
        %v936 = vld [vmem:[%s655 + $0x1a8] sm:$0xff]
        %v937 = vld [vmem:[%s655 + $0x1b0] sm:$0xff]
        %v938 = vld [vmem:[%s655 + $0x1b8] sm:$0xff]
        %v939 = vld [vmem:[%s655 + $0x1c0] sm:$0xff]
        %v940 = vld [vmem:[%s655 + $0x1c8] sm:$0xff]
        %v941 = vld [vmem:[%s655 + $0x1d0] sm:$0xff]
        %v942 = vld [vmem:[%s655 + $0x1d8] sm:$0xff]
        %v943 = vld [vmem:[%s655 + $0x1e0] sm:$0xff]
        %v944 = vld [vmem:[%s655 + $0x1e8] sm:$0xff]
        %v945 = vld [vmem:[%s655 + $0x1f0] sm:$0xff]
        %v946 = vld [vmem:[%s655 + $0x1f8] sm:$0xff]
        %v947 = vmul.f32 %v819, %v883
        %v948 = vmul.f32 %v820, %v884
        %v949 = vmul.f32 %v821, %v885
        %v950 = vmul.f32 %v822, %v886
        %v951 = vmul.f32 %v823, %v887
        %v952 = vmul.f32 %v824, %v888
        %v953 = vmul.f32 %v825, %v889
        %v954 = vmul.f32 %v826, %v890
        %v955 = vmul.f32 %v827, %v891
        %v956 = vmul.f32 %v828, %v892
        %v957 = vmul.f32 %v829, %v893
        %v958 = vmul.f32 %v830, %v894
        %v959 = vmul.f32 %v831, %v895
        %v960 = vmul.f32 %v832, %v896
        %v961 = vmul.f32 %v833, %v897
        %v962 = vmul.f32 %v834, %v898
        %v963 = vmul.f32 %v835, %v899
        %v964 = vmul.f32 %v836, %v900
        %v965 = vmul.f32 %v837, %v901
        %v966 = vmul.f32 %v838, %v902
        %v967 = vmul.f32 %v839, %v903
        %v968 = vmul.f32 %v840, %v904
        %v969 = vmul.f32 %v841, %v905
        %v970 = vmul.f32 %v842, %v906
        %v971 = vmul.f32 %v843, %v907
        %v972 = vmul.f32 %v844, %v908
        %v973 = vmul.f32 %v845, %v909
        %v974 = vmul.f32 %v846, %v910
        %v975 = vmul.f32 %v847, %v911
        %v976 = vmul.f32 %v848, %v912
        %v977 = vmul.f32 %v849, %v913
        %v978 = vmul.f32 %v850, %v914
        %v979 = vmul.f32 %v851, %v915
        %v980 = vmul.f32 %v852, %v916
        %v981 = vmul.f32 %v853, %v917
        %v982 = vmul.f32 %v854, %v918
        %v983 = vmul.f32 %v855, %v919
        %v984 = vmul.f32 %v856, %v920
        %v985 = vmul.f32 %v857, %v921
        %v986 = vmul.f32 %v858, %v922
        %v987 = vmul.f32 %v859, %v923
        %v988 = vmul.f32 %v860, %v924
        %v989 = vmul.f32 %v861, %v925
        %v990 = vmul.f32 %v862, %v926
        %v991 = vmul.f32 %v863, %v927
        %v992 = vmul.f32 %v864, %v928
        %v993 = vmul.f32 %v865, %v929
        %v994 = vmul.f32 %v866, %v930
        %v995 = vmul.f32 %v867, %v931
        %v996 = vmul.f32 %v868, %v932
        %v997 = vmul.f32 %v869, %v933
        %v998 = vmul.f32 %v870, %v934
        %v999 = vmul.f32 %v871, %v935
        %v1000 = vmul.f32 %v872, %v936
        %v1001 = vmul.f32 %v873, %v937
        %v1002 = vmul.f32 %v874, %v938
        %v1003 = vmul.f32 %v875, %v939
        %v1004 = vmul.f32 %v876, %v940
        %v1005 = vmul.f32 %v877, %v941
        %v1006 = vmul.f32 %v878, %v942
        %v1007 = vmul.f32 %v879, %v943
        %v1008 = vmul.f32 %v880, %v944
        %v1009 = vmul.f32 %v881, %v945
        %v1010 = vmul.f32 %v882, %v946
        %v1011 = vld [vmem:[#allocation2] sm:$0xff]
        %v1012 = vld [vmem:[#allocation2 + $0x8] sm:$0xff]
        %v1013 = vld [vmem:[#allocation2 + $0x10] sm:$0xff]
        %v1014 = vld [vmem:[#allocation2 + $0x18] sm:$0xff]
        %v1015 = vld [vmem:[#allocation2 + $0x20] sm:$0xff]
        %v1016 = vld [vmem:[#allocation2 + $0x28] sm:$0xff]
        %v1017 = vld [vmem:[#allocation2 + $0x30] sm:$0xff]
        %v1018 = vld [vmem:[#allocation2 + $0x38] sm:$0xff]
        %v1019 = vld [vmem:[#allocation2 + $0x40] sm:$0xff]
        %v1020 = vld [vmem:[#allocation2 + $0x48] sm:$0xff]
        %v1021 = vld [vmem:[#allocation2 + $0x50] sm:$0xff]
        %v1022 = vld [vmem:[#allocation2 + $0x58] sm:$0xff]
        %v1023 = vld [vmem:[#allocation2 + $0x60] sm:$0xff]
        %v1024 = vld [vmem:[#allocation2 + $0x68] sm:$0xff]
        %v1025 = vld [vmem:[#allocation2 + $0x70] sm:$0xff]
        %v1026 = vld [vmem:[#allocation2 + $0x78] sm:$0xff]
        %v1027 = vld [vmem:[#allocation2 + $0x80] sm:$0xff]
        %v1028 = vld [vmem:[#allocation2 + $0x88] sm:$0xff]
        %v1029 = vld [vmem:[#allocation2 + $0x90] sm:$0xff]
        %v1030 = vld [vmem:[#allocation2 + $0x98] sm:$0xff]
        %v1031 = vld [vmem:[#allocation2 + $0xa0] sm:$0xff]
        %v1032 = vld [vmem:[#allocation2 + $0xa8] sm:$0xff]
        %v1033 = vld [vmem:[#allocation2 + $0xb0] sm:$0xff]
        %v1034 = vld [vmem:[#allocation2 + $0xb8] sm:$0xff]
        %v1035 = vld [vmem:[#allocation2 + $0xc0] sm:$0xff]
        %v1036 = vld [vmem:[#allocation2 + $0xc8] sm:$0xff]
        %v1037 = vld [vmem:[#allocation2 + $0xd0] sm:$0xff]
        %v1038 = vld [vmem:[#allocation2 + $0xd8] sm:$0xff]
        %v1039 = vld [vmem:[#allocation2 + $0xe0] sm:$0xff]
        %v1040 = vld [vmem:[#allocation2 + $0xe8] sm:$0xff]
        %v1041 = vld [vmem:[#allocation2 + $0xf0] sm:$0xff]
        %v1042 = vld [vmem:[#allocation2 + $0xf8] sm:$0xff]
        %v1043 = vld [vmem:[%s665] sm:$0xff]
        %v1044 = vld [vmem:[%s665 + $0x8] sm:$0xff]
        %v1045 = vld [vmem:[%s665 + $0x10] sm:$0xff]
        %v1046 = vld [vmem:[%s665 + $0x18] sm:$0xff]
        %v1047 = vld [vmem:[%s665 + $0x20] sm:$0xff]
        %v1048 = vld [vmem:[%s665 + $0x28] sm:$0xff]
        %v1049 = vld [vmem:[%s665 + $0x30] sm:$0xff]
        %v1050 = vld [vmem:[%s665 + $0x38] sm:$0xff]
        %v1051 = vld [vmem:[%s665 + $0x40] sm:$0xff]
        %v1052 = vld [vmem:[%s665 + $0x48] sm:$0xff]
        %v1053 = vld [vmem:[%s665 + $0x50] sm:$0xff]
        %v1054 = vld [vmem:[%s665 + $0x58] sm:$0xff]
        %v1055 = vld [vmem:[%s665 + $0x60] sm:$0xff]
        %v1056 = vld [vmem:[%s665 + $0x68] sm:$0xff]
        %v1057 = vld [vmem:[%s665 + $0x70] sm:$0xff]
        %v1058 = vld [vmem:[%s665 + $0x78] sm:$0xff]
        %v1059 = vld [vmem:[%s665 + $0x80] sm:$0xff]
        %v1060 = vld [vmem:[%s665 + $0x88] sm:$0xff]
        %v1061 = vld [vmem:[%s665 + $0x90] sm:$0xff]
        %v1062 = vld [vmem:[%s665 + $0x98] sm:$0xff]
        %v1063 = vld [vmem:[%s665 + $0xa0] sm:$0xff]
        %v1064 = vld [vmem:[%s665 + $0xa8] sm:$0xff]
        %v1065 = vld [vmem:[%s665 + $0xb0] sm:$0xff]
        %v1066 = vld [vmem:[%s665 + $0xb8] sm:$0xff]
        %v1067 = vld [vmem:[%s665 + $0xc0] sm:$0xff]
        %v1068 = vld [vmem:[%s665 + $0xc8] sm:$0xff]
        %v1069 = vld [vmem:[%s665 + $0xd0] sm:$0xff]
        %v1070 = vld [vmem:[%s665 + $0xd8] sm:$0xff]
        %v1071 = vld [vmem:[%s665 + $0xe0] sm:$0xff]
        %v1072 = vld [vmem:[%s665 + $0xe8] sm:$0xff]
        %v1073 = vld [vmem:[%s665 + $0xf0] sm:$0xff]
        %v1074 = vld [vmem:[%s665 + $0xf8] sm:$0xff]
        %1075 = vmatpush.msra.mxu0 %v1058
        %1076 = vmatpush.msra.mxu0 %v1057
        %1077 = vmatpush.msra.mxu0 %v1056
        %1078 = vmatpush.msra.mxu0 %v1055
        %1079 = vmatpush.msra.mxu0 %v1054
        %1080 = vmatpush.msra.mxu0 %v1053
        %1081 = vmatpush.msra.mxu0 %v1052
        %1082 = vmatpush.msra.mxu0 %v1051
        %1083 = vmatpush.msra.mxu0 %v1050
        %1084 = vmatpush.msra.mxu0 %v1049
        %1085 = vmatpush.msra.mxu0 %v1048
        %1086 = vmatpush.msra.mxu0 %v1047
        %1087 = vmatpush.msra.mxu0 %v1046
        %1088 = vmatpush.msra.mxu0 %v1045
        %1089 = vmatpush.msra.mxu0 %v1044
        %1090 = vmatpush.msra.mxu0 %v1043
        %1091 = vmatmul.f32.gmra.mxu0 %v947
        %v1092 = vpop.f32.mrf.mxu0
        %v1093 = vadd.f32 0.0, %v1092
        %1094 = vmatmul.f32.gmra.mxu0 %v949
        %v1095 = vpop.f32.mrf.mxu0
        %v1096 = vadd.f32 0.0, %v1095
        %1097 = vmatmul.f32.gmra.mxu0 %v951
        %v1098 = vpop.f32.mrf.mxu0
        %v1099 = vadd.f32 0.0, %v1098
        %1100 = vmatmul.f32.gmra.mxu0 %v953
        %v1101 = vpop.f32.mrf.mxu0
        %v1102 = vadd.f32 0.0, %v1101
        %1103 = vmatmul.f32.gmra.mxu0 %v955
        %v1104 = vpop.f32.mrf.mxu0
        %v1105 = vadd.f32 0.0, %v1104
        %1106 = vmatmul.f32.gmra.mxu0 %v957
        %v1107 = vpop.f32.mrf.mxu0
        %v1108 = vadd.f32 0.0, %v1107
        %1109 = vmatmul.f32.gmra.mxu0 %v959
        %v1110 = vpop.f32.mrf.mxu0
        %v1111 = vadd.f32 0.0, %v1110
        %1112 = vmatmul.f32.gmra.mxu0 %v961
        %v1113 = vpop.f32.mrf.mxu0
        %v1114 = vadd.f32 0.0, %v1113
        %1115 = vmatmul.f32.gmra.mxu0 %v963
        %v1116 = vpop.f32.mrf.mxu0
        %v1117 = vadd.f32 0.0, %v1116
        %1118 = vmatmul.f32.gmra.mxu0 %v965
        %v1119 = vpop.f32.mrf.mxu0
        %v1120 = vadd.f32 0.0, %v1119
        %1121 = vmatmul.f32.gmra.mxu0 %v967
        %v1122 = vpop.f32.mrf.mxu0
        %v1123 = vadd.f32 0.0, %v1122
        %1124 = vmatmul.f32.gmra.mxu0 %v969
        %v1125 = vpop.f32.mrf.mxu0
        %v1126 = vadd.f32 0.0, %v1125
        %1127 = vmatmul.f32.gmra.mxu0 %v971
        %v1128 = vpop.f32.mrf.mxu0
        %v1129 = vadd.f32 0.0, %v1128
        %1130 = vmatmul.f32.gmra.mxu0 %v973
        %v1131 = vpop.f32.mrf.mxu0
        %v1132 = vadd.f32 0.0, %v1131
        %1133 = vmatmul.f32.gmra.mxu0 %v975
        %v1134 = vpop.f32.mrf.mxu0
        %v1135 = vadd.f32 0.0, %v1134
        %1136 = vmatmul.f32.gmra.mxu0 %v977
        %v1137 = vpop.f32.mrf.mxu0
        %v1138 = vadd.f32 0.0, %v1137
        %1139 = vmatmul.f32.gmra.mxu0 %v979
        %v1140 = vpop.f32.mrf.mxu0
        %v1141 = vadd.f32 0.0, %v1140
        %1142 = vmatmul.f32.gmra.mxu0 %v981
        %v1143 = vpop.f32.mrf.mxu0
        %v1144 = vadd.f32 0.0, %v1143
        %1145 = vmatmul.f32.gmra.mxu0 %v983
        %v1146 = vpop.f32.mrf.mxu0
        %v1147 = vadd.f32 0.0, %v1146
        %1148 = vmatmul.f32.gmra.mxu0 %v985
        %v1149 = vpop.f32.mrf.mxu0
        %v1150 = vadd.f32 0.0, %v1149
        %1151 = vmatmul.f32.gmra.mxu0 %v987
        %v1152 = vpop.f32.mrf.mxu0
        %v1153 = vadd.f32 0.0, %v1152
        %1154 = vmatmul.f32.gmra.mxu0 %v989
        %v1155 = vpop.f32.mrf.mxu0
        %v1156 = vadd.f32 0.0, %v1155
        %1157 = vmatmul.f32.gmra.mxu0 %v991
        %v1158 = vpop.f32.mrf.mxu0
        %v1159 = vadd.f32 0.0, %v1158
        %1160 = vmatmul.f32.gmra.mxu0 %v993
        %v1161 = vpop.f32.mrf.mxu0
        %v1162 = vadd.f32 0.0, %v1161
        %1163 = vmatmul.f32.gmra.mxu0 %v995
        %v1164 = vpop.f32.mrf.mxu0
        %v1165 = vadd.f32 0.0, %v1164
        %1166 = vmatmul.f32.gmra.mxu0 %v997
        %v1167 = vpop.f32.mrf.mxu0
        %v1168 = vadd.f32 0.0, %v1167
        %1169 = vmatmul.f32.gmra.mxu0 %v999
        %v1170 = vpop.f32.mrf.mxu0
        %v1171 = vadd.f32 0.0, %v1170
        %1172 = vmatmul.f32.gmra.mxu0 %v1001
        %v1173 = vpop.f32.mrf.mxu0
        %v1174 = vadd.f32 0.0, %v1173
        %1175 = vmatmul.f32.gmra.mxu0 %v1003
        %v1176 = vpop.f32.mrf.mxu0
        %v1177 = vadd.f32 0.0, %v1176
        %1178 = vmatmul.f32.gmra.mxu0 %v1005
        %v1179 = vpop.f32.mrf.mxu0
        %v1180 = vadd.f32 0.0, %v1179
        %1181 = vmatmul.f32.gmra.mxu0 %v1007
        %v1182 = vpop.f32.mrf.mxu0
        %v1183 = vadd.f32 0.0, %v1182
        %1184 = vmatmul.f32.gmra.mxu0 %v1009
        %v1185 = vpop.f32.mrf.mxu0
        %v1186 = vadd.f32 0.0, %v1185
        %1187 = vdwg.mxu0
        %1188 = vmatpush.msra.mxu0 %v1074
        %1189 = vmatpush.msra.mxu0 %v1073
        %1190 = vmatpush.msra.mxu0 %v1072
        %1191 = vmatpush.msra.mxu0 %v1071
        %1192 = vmatpush.msra.mxu0 %v1070
        %1193 = vmatpush.msra.mxu0 %v1069
        %1194 = vmatpush.msra.mxu0 %v1068
        %1195 = vmatpush.msra.mxu0 %v1067
        %1196 = vmatpush.msra.mxu0 %v1066
        %1197 = vmatpush.msra.mxu0 %v1065
        %1198 = vmatpush.msra.mxu0 %v1064
        %1199 = vmatpush.msra.mxu0 %v1063
        %1200 = vmatpush.msra.mxu0 %v1062
        %1201 = vmatpush.msra.mxu0 %v1061
        %1202 = vmatpush.msra.mxu0 %v1060
        %1203 = vmatpush.msra.mxu0 %v1059
        %1204 = vmatmul.f32.gmra.mxu0 %v948
        %v1205 = vpop.f32.mrf.mxu0
        %v1206 = vadd.f32 %v1093, %v1205
        %1207 = vmatmul.f32.gmra.mxu0 %v950
        %v1208 = vpop.f32.mrf.mxu0
        %v1209 = vadd.f32 %v1096, %v1208
        %1210 = vmatmul.f32.gmra.mxu0 %v952
        %v1211 = vpop.f32.mrf.mxu0
        %v1212 = vadd.f32 %v1099, %v1211
        %1213 = vmatmul.f32.gmra.mxu0 %v954
        %v1214 = vpop.f32.mrf.mxu0
        %v1215 = vadd.f32 %v1102, %v1214
        %1216 = vmatmul.f32.gmra.mxu0 %v956
        %v1217 = vpop.f32.mrf.mxu0
        %v1218 = vadd.f32 %v1105, %v1217
        %1219 = vmatmul.f32.gmra.mxu0 %v958
        %v1220 = vpop.f32.mrf.mxu0
        %v1221 = vadd.f32 %v1108, %v1220
        %1222 = vmatmul.f32.gmra.mxu0 %v960
        %v1223 = vpop.f32.mrf.mxu0
        %v1224 = vadd.f32 %v1111, %v1223
        %1225 = vmatmul.f32.gmra.mxu0 %v962
        %v1226 = vpop.f32.mrf.mxu0
        %v1227 = vadd.f32 %v1114, %v1226
        %1228 = vmatmul.f32.gmra.mxu0 %v964
        %v1229 = vpop.f32.mrf.mxu0
        %v1230 = vadd.f32 %v1117, %v1229
        %1231 = vmatmul.f32.gmra.mxu0 %v966
        %v1232 = vpop.f32.mrf.mxu0
        %v1233 = vadd.f32 %v1120, %v1232
        %1234 = vmatmul.f32.gmra.mxu0 %v968
        %v1235 = vpop.f32.mrf.mxu0
        %v1236 = vadd.f32 %v1123, %v1235
        %1237 = vmatmul.f32.gmra.mxu0 %v970
        %v1238 = vpop.f32.mrf.mxu0
        %v1239 = vadd.f32 %v1126, %v1238
        %1240 = vmatmul.f32.gmra.mxu0 %v972
        %v1241 = vpop.f32.mrf.mxu0
        %v1242 = vadd.f32 %v1129, %v1241
        %1243 = vmatmul.f32.gmra.mxu0 %v974
        %v1244 = vpop.f32.mrf.mxu0
        %v1245 = vadd.f32 %v1132, %v1244
        %1246 = vmatmul.f32.gmra.mxu0 %v976
        %v1247 = vpop.f32.mrf.mxu0
        %v1248 = vadd.f32 %v1135, %v1247
        %1249 = vmatmul.f32.gmra.mxu0 %v978
        %v1250 = vpop.f32.mrf.mxu0
        %v1251 = vadd.f32 %v1138, %v1250
        %1252 = vmatmul.f32.gmra.mxu0 %v980
        %v1253 = vpop.f32.mrf.mxu0
        %v1254 = vadd.f32 %v1141, %v1253
        %1255 = vmatmul.f32.gmra.mxu0 %v982
        %v1256 = vpop.f32.mrf.mxu0
        %v1257 = vadd.f32 %v1144, %v1256
        %1258 = vmatmul.f32.gmra.mxu0 %v984
        %v1259 = vpop.f32.mrf.mxu0
        %v1260 = vadd.f32 %v1147, %v1259
        %1261 = vmatmul.f32.gmra.mxu0 %v986
        %v1262 = vpop.f32.mrf.mxu0
        %v1263 = vadd.f32 %v1150, %v1262
        %1264 = vmatmul.f32.gmra.mxu0 %v988
        %v1265 = vpop.f32.mrf.mxu0
        %v1266 = vadd.f32 %v1153, %v1265
        %1267 = vmatmul.f32.gmra.mxu0 %v990
        %v1268 = vpop.f32.mrf.mxu0
        %v1269 = vadd.f32 %v1156, %v1268
        %1270 = vmatmul.f32.gmra.mxu0 %v992
        %v1271 = vpop.f32.mrf.mxu0
        %v1272 = vadd.f32 %v1159, %v1271
        %1273 = vmatmul.f32.gmra.mxu0 %v994
        %v1274 = vpop.f32.mrf.mxu0
        %v1275 = vadd.f32 %v1162, %v1274
        %1276 = vmatmul.f32.gmra.mxu0 %v996
        %v1277 = vpop.f32.mrf.mxu0
        %v1278 = vadd.f32 %v1165, %v1277
        %1279 = vmatmul.f32.gmra.mxu0 %v998
        %v1280 = vpop.f32.mrf.mxu0
        %v1281 = vadd.f32 %v1168, %v1280
        %1282 = vmatmul.f32.gmra.mxu0 %v1000
        %v1283 = vpop.f32.mrf.mxu0
        %v1284 = vadd.f32 %v1171, %v1283
        %1285 = vmatmul.f32.gmra.mxu0 %v1002
        %v1286 = vpop.f32.mrf.mxu0
        %v1287 = vadd.f32 %v1174, %v1286
        %1288 = vmatmul.f32.gmra.mxu0 %v1004
        %v1289 = vpop.f32.mrf.mxu0
        %v1290 = vadd.f32 %v1177, %v1289
        %1291 = vmatmul.f32.gmra.mxu0 %v1006
        %v1292 = vpop.f32.mrf.mxu0
        %v1293 = vadd.f32 %v1180, %v1292
        %1294 = vmatmul.f32.gmra.mxu0 %v1008
        %v1295 = vpop.f32.mrf.mxu0
        %v1296 = vadd.f32 %v1183, %v1295
        %1297 = vmatmul.f32.gmra.mxu0 %v1010
        %v1298 = vpop.f32.mrf.mxu0
        %v1299 = vadd.f32 %v1186, %v1298
        %1300 = vdwg.mxu0
        %v1301 = vadd.f32 %v1011, %v1206
        %v1302 = vadd.f32 %v1012, %v1209
        %v1303 = vadd.f32 %v1013, %v1212
        %v1304 = vadd.f32 %v1014, %v1215
        %v1305 = vadd.f32 %v1015, %v1218
        %v1306 = vadd.f32 %v1016, %v1221
        %v1307 = vadd.f32 %v1017, %v1224
        %v1308 = vadd.f32 %v1018, %v1227
        %v1309 = vadd.f32 %v1019, %v1230
        %v1310 = vadd.f32 %v1020, %v1233
        %v1311 = vadd.f32 %v1021, %v1236
        %v1312 = vadd.f32 %v1022, %v1239
        %v1313 = vadd.f32 %v1023, %v1242
        %v1314 = vadd.f32 %v1024, %v1245
        %v1315 = vadd.f32 %v1025, %v1248
        %v1316 = vadd.f32 %v1026, %v1251
        %v1317 = vadd.f32 %v1027, %v1254
        %v1318 = vadd.f32 %v1028, %v1257
        %v1319 = vadd.f32 %v1029, %v1260
        %v1320 = vadd.f32 %v1030, %v1263
        %v1321 = vadd.f32 %v1031, %v1266
        %v1322 = vadd.f32 %v1032, %v1269
        %v1323 = vadd.f32 %v1033, %v1272
        %v1324 = vadd.f32 %v1034, %v1275
        %v1325 = vadd.f32 %v1035, %v1278
        %v1326 = vadd.f32 %v1036, %v1281
        %v1327 = vadd.f32 %v1037, %v1284
        %v1328 = vadd.f32 %v1038, %v1287
        %v1329 = vadd.f32 %v1039, %v1290
        %v1330 = vadd.f32 %v1040, %v1293
        %v1331 = vadd.f32 %v1041, %v1296
        %v1332 = vadd.f32 %v1042, %v1299
        %1333 = vst [vmem:[#allocation2] sm:$0xff] %v1301
        %1334 = vst [vmem:[#allocation2 + $0x8] sm:$0xff] %v1302
        %1335 = vst [vmem:[#allocation2 + $0x10] sm:$0xff] %v1303
        %1336 = vst [vmem:[#allocation2 + $0x18] sm:$0xff] %v1304
        %1337 = vst [vmem:[#allocation2 + $0x20] sm:$0xff] %v1305
        %1338 = vst [vmem:[#allocation2 + $0x28] sm:$0xff] %v1306
        %1339 = vst [vmem:[#allocation2 + $0x30] sm:$0xff] %v1307
        %1340 = vst [vmem:[#allocation2 + $0x38] sm:$0xff] %v1308
        %1341 = vst [vmem:[#allocation2 + $0x40] sm:$0xff] %v1309
        %1342 = vst [vmem:[#allocation2 + $0x48] sm:$0xff] %v1310
        %1343 = vst [vmem:[#allocation2 + $0x50] sm:$0xff] %v1311
        %1344 = vst [vmem:[#allocation2 + $0x58] sm:$0xff] %v1312
        %1345 = vst [vmem:[#allocation2 + $0x60] sm:$0xff] %v1313
        %1346 = vst [vmem:[#allocation2 + $0x68] sm:$0xff] %v1314
        %1347 = vst [vmem:[#allocation2 + $0x70] sm:$0xff] %v1315
        %1348 = vst [vmem:[#allocation2 + $0x78] sm:$0xff] %v1316
        %1349 = vst [vmem:[#allocation2 + $0x80] sm:$0xff] %v1317
        %1350 = vst [vmem:[#allocation2 + $0x88] sm:$0xff] %v1318
        %1351 = vst [vmem:[#allocation2 + $0x90] sm:$0xff] %v1319
        %1352 = vst [vmem:[#allocation2 + $0x98] sm:$0xff] %v1320
        %1353 = vst [vmem:[#allocation2 + $0xa0] sm:$0xff] %v1321
        %1354 = vst [vmem:[#allocation2 + $0xa8] sm:$0xff] %v1322
        %1355 = vst [vmem:[#allocation2 + $0xb0] sm:$0xff] %v1323
        %1356 = vst [vmem:[#allocation2 + $0xb8] sm:$0xff] %v1324
        %1357 = vst [vmem:[#allocation2 + $0xc0] sm:$0xff] %v1325
        %1358 = vst [vmem:[#allocation2 + $0xc8] sm:$0xff] %v1326
        %1359 = vst [vmem:[#allocation2 + $0xd0] sm:$0xff] %v1327
        %1360 = vst [vmem:[#allocation2 + $0xd8] sm:$0xff] %v1328
        %1361 = vst [vmem:[#allocation2 + $0xe0] sm:$0xff] %v1329
        %1362 = vst [vmem:[#allocation2 + $0xe8] sm:$0xff] %v1330
        %1363 = vst [vmem:[#allocation2 + $0xf0] sm:$0xff] %v1331
        %1364 = vst [vmem:[#allocation2 + $0xf8] sm:$0xff] %v1332
        %p1365 = scmp.eq.s32.totalorder %s43, 2
        // Predicated region
        $region129: #{tpu_custom_call.1} parent=71 // pred_check
          %p1366 = pneg %p1365
        $region130: #{tpu_custom_call.1} parent=71 // pred_check_branch
          %1368 = sbr.rel (%p1366) target = $region132
        $region131: #{tpu_custom_call.1} parent=71 // pred_region
          %v1369 = vld [vmem:[#allocation21] sm:$0xff]
          %v1370 = vld [vmem:[#allocation2] sm:$0xff]
          %v1371 = vld [vmem:[#allocation2 + $0x8] sm:$0xff]
          %v1372 = vld [vmem:[#allocation2 + $0x10] sm:$0xff]
          %v1373 = vld [vmem:[#allocation2 + $0x18] sm:$0xff]
          %v1374 = vld [vmem:[#allocation2 + $0x20] sm:$0xff]
          %v1375 = vld [vmem:[#allocation2 + $0x28] sm:$0xff]
          %v1376 = vld [vmem:[#allocation2 + $0x30] sm:$0xff]
          %v1377 = vld [vmem:[#allocation2 + $0x38] sm:$0xff]
          %v1378 = vld [vmem:[#allocation2 + $0x40] sm:$0xff]
          %v1379 = vld [vmem:[#allocation2 + $0x48] sm:$0xff]
          %v1380 = vld [vmem:[#allocation2 + $0x50] sm:$0xff]
          %v1381 = vld [vmem:[#allocation2 + $0x58] sm:$0xff]
          %v1382 = vld [vmem:[#allocation2 + $0x60] sm:$0xff]
          %v1383 = vld [vmem:[#allocation2 + $0x68] sm:$0xff]
          %v1384 = vld [vmem:[#allocation2 + $0x70] sm:$0xff]
          %v1385 = vld [vmem:[#allocation2 + $0x78] sm:$0xff]
          %v1386 = vld [vmem:[#allocation2 + $0x80] sm:$0xff]
          %v1387 = vld [vmem:[#allocation2 + $0x88] sm:$0xff]
          %v1388 = vld [vmem:[#allocation2 + $0x90] sm:$0xff]
          %v1389 = vld [vmem:[#allocation2 + $0x98] sm:$0xff]
          %v1390 = vld [vmem:[#allocation2 + $0xa0] sm:$0xff]
          %v1391 = vld [vmem:[#allocation2 + $0xa8] sm:$0xff]
          %v1392 = vld [vmem:[#allocation2 + $0xb0] sm:$0xff]
          %v1393 = vld [vmem:[#allocation2 + $0xb8] sm:$0xff]
          %v1394 = vld [vmem:[#allocation2 + $0xc0] sm:$0xff]
          %v1395 = vld [vmem:[#allocation2 + $0xc8] sm:$0xff]
          %v1396 = vld [vmem:[#allocation2 + $0xd0] sm:$0xff]
          %v1397 = vld [vmem:[#allocation2 + $0xd8] sm:$0xff]
          %v1398 = vld [vmem:[#allocation2 + $0xe0] sm:$0xff]
          %v1399 = vld [vmem:[#allocation2 + $0xe8] sm:$0xff]
          %v1400 = vld [vmem:[#allocation2 + $0xf0] sm:$0xff]
          %v1401 = vld [vmem:[#allocation2 + $0xf8] sm:$0xff]
          %v1402 = vld [vmem:[#allocation12] sm:$0xff]
          %v1403 = vld [vmem:[#allocation12 + $0x8] sm:$0xff]
          %v1404 = vld [vmem:[#allocation12 + $0x10] sm:$0xff]
          %v1405 = vld [vmem:[#allocation12 + $0x18] sm:$0xff]
          %v1406 = vld [vmem:[#allocation12 + $0x20] sm:$0xff]
          %v1407 = vld [vmem:[#allocation12 + $0x28] sm:$0xff]
          %v1408 = vld [vmem:[#allocation12 + $0x30] sm:$0xff]
          %v1409 = vld [vmem:[#allocation12 + $0x38] sm:$0xff]
          %v1410 = vld [vmem:[#allocation12 + $0x40] sm:$0xff]
          %v1411 = vld [vmem:[#allocation12 + $0x48] sm:$0xff]
          %v1412 = vld [vmem:[#allocation12 + $0x50] sm:$0xff]
          %v1413 = vld [vmem:[#allocation12 + $0x58] sm:$0xff]
          %v1414 = vld [vmem:[#allocation12 + $0x60] sm:$0xff]
          %v1415 = vld [vmem:[#allocation12 + $0x68] sm:$0xff]
          %v1416 = vld [vmem:[#allocation12 + $0x70] sm:$0xff]
          %v1417 = vld [vmem:[#allocation12 + $0x78] sm:$0xff]
          %v1418 = vperm.slane %v1369, 0
          %1419 = vmatpush.msra.mxu0 %v1417
          %1420 = vmatpush.msra.mxu0 %v1416
          %1421 = vmatpush.msra.mxu0 %v1415
          %1422 = vmatpush.msra.mxu0 %v1414
          %1423 = vmatpush.msra.mxu0 %v1413
          %1424 = vmatpush.msra.mxu0 %v1412
          %1425 = vmatpush.msra.mxu0 %v1411
          %1426 = vmatpush.msra.mxu0 %v1410
          %1427 = vmatpush.msra.mxu0 %v1409
          %1428 = vmatpush.msra.mxu0 %v1408
          %1429 = vmatpush.msra.mxu0 %v1407
          %1430 = vmatpush.msra.mxu0 %v1406
          %1431 = vmatpush.msra.mxu0 %v1405
          %1432 = vmatpush.msra.mxu0 %v1404
          %1433 = vmatpush.msra.mxu0 %v1403
          %1434 = vmatpush.msra.mxu0 %v1402
          %1435 = vmatmul.f32.gmra.mxu0 %v1370
          %v1436 = vpop.f32.mrf.mxu0
          %v1437 = vadd.f32 %v1418, %v1436
          %1438 = vmatmul.f32.gmra.mxu0 %v1371
          %v1439 = vpop.f32.mrf.mxu0
          %v1440 = vadd.f32 %v1418, %v1439
          %1441 = vmatmul.f32.gmra.mxu0 %v1372
          %v1442 = vpop.f32.mrf.mxu0
          %v1443 = vadd.f32 %v1418, %v1442
          %1444 = vmatmul.f32.gmra.mxu0 %v1373
          %v1445 = vpop.f32.mrf.mxu0
          %v1446 = vadd.f32 %v1418, %v1445
          %1447 = vmatmul.f32.gmra.mxu0 %v1374
          %v1448 = vpop.f32.mrf.mxu0
          %v1449 = vadd.f32 %v1418, %v1448
          %1450 = vmatmul.f32.gmra.mxu0 %v1375
          %v1451 = vpop.f32.mrf.mxu0
          %v1452 = vadd.f32 %v1418, %v1451
          %1453 = vmatmul.f32.gmra.mxu0 %v1376
          %v1454 = vpop.f32.mrf.mxu0
          %v1455 = vadd.f32 %v1418, %v1454
          %1456 = vmatmul.f32.gmra.mxu0 %v1377
          %v1457 = vpop.f32.mrf.mxu0
          %v1458 = vadd.f32 %v1418, %v1457
          %1459 = vmatmul.f32.gmra.mxu0 %v1378
          %v1460 = vpop.f32.mrf.mxu0
          %v1461 = vadd.f32 %v1418, %v1460
          %1462 = vmatmul.f32.gmra.mxu0 %v1379
          %v1463 = vpop.f32.mrf.mxu0
          %v1464 = vadd.f32 %v1418, %v1463
          %1465 = vmatmul.f32.gmra.mxu0 %v1380
          %v1466 = vpop.f32.mrf.mxu0
          %v1467 = vadd.f32 %v1418, %v1466
          %1468 = vmatmul.f32.gmra.mxu0 %v1381
          %v1469 = vpop.f32.mrf.mxu0
          %v1470 = vadd.f32 %v1418, %v1469
          %1471 = vmatmul.f32.gmra.mxu0 %v1382
          %v1472 = vpop.f32.mrf.mxu0
          %v1473 = vadd.f32 %v1418, %v1472
          %1474 = vmatmul.f32.gmra.mxu0 %v1383
          %v1475 = vpop.f32.mrf.mxu0
          %v1476 = vadd.f32 %v1418, %v1475
          %1477 = vmatmul.f32.gmra.mxu0 %v1384
          %v1478 = vpop.f32.mrf.mxu0
          %v1479 = vadd.f32 %v1418, %v1478
          %1480 = vmatmul.f32.gmra.mxu0 %v1385
          %v1481 = vpop.f32.mrf.mxu0
          %v1482 = vadd.f32 %v1418, %v1481
          %1483 = vmatmul.f32.gmra.mxu0 %v1386
          %v1484 = vpop.f32.mrf.mxu0
          %v1485 = vadd.f32 %v1418, %v1484
          %1486 = vmatmul.f32.gmra.mxu0 %v1387
          %v1487 = vpop.f32.mrf.mxu0
          %v1488 = vadd.f32 %v1418, %v1487
          %1489 = vmatmul.f32.gmra.mxu0 %v1388
          %v1490 = vpop.f32.mrf.mxu0
          %v1491 = vadd.f32 %v1418, %v1490
          %1492 = vmatmul.f32.gmra.mxu0 %v1389
          %v1493 = vpop.f32.mrf.mxu0
          %v1494 = vadd.f32 %v1418, %v1493
          %1495 = vmatmul.f32.gmra.mxu0 %v1390
          %v1496 = vpop.f32.mrf.mxu0
          %v1497 = vadd.f32 %v1418, %v1496
          %1498 = vmatmul.f32.gmra.mxu0 %v1391
          %v1499 = vpop.f32.mrf.mxu0
          %v1500 = vadd.f32 %v1418, %v1499
          %1501 = vmatmul.f32.gmra.mxu0 %v1392
          %v1502 = vpop.f32.mrf.mxu0
          %v1503 = vadd.f32 %v1418, %v1502
          %1504 = vmatmul.f32.gmra.mxu0 %v1393
          %v1505 = vpop.f32.mrf.mxu0
          %v1506 = vadd.f32 %v1418, %v1505
          %1507 = vmatmul.f32.gmra.mxu0 %v1394
          %v1508 = vpop.f32.mrf.mxu0
          %v1509 = vadd.f32 %v1418, %v1508
          %1510 = vmatmul.f32.gmra.mxu0 %v1395
          %v1511 = vpop.f32.mrf.mxu0
          %v1512 = vadd.f32 %v1418, %v1511
          %1513 = vmatmul.f32.gmra.mxu0 %v1396
          %v1514 = vpop.f32.mrf.mxu0
          %v1515 = vadd.f32 %v1418, %v1514
          %1516 = vmatmul.f32.gmra.mxu0 %v1397
          %v1517 = vpop.f32.mrf.mxu0
          %v1518 = vadd.f32 %v1418, %v1517
          %1519 = vmatmul.f32.gmra.mxu0 %v1398
          %v1520 = vpop.f32.mrf.mxu0
          %v1521 = vadd.f32 %v1418, %v1520
          %1522 = vmatmul.f32.gmra.mxu0 %v1399
          %v1523 = vpop.f32.mrf.mxu0
          %v1524 = vadd.f32 %v1418, %v1523
          %1525 = vmatmul.f32.gmra.mxu0 %v1400
          %v1526 = vpop.f32.mrf.mxu0
          %v1527 = vadd.f32 %v1418, %v1526
          %1528 = vmatmul.f32.gmra.mxu0 %v1401
          %v1529 = vpop.f32.mrf.mxu0
          %v1530 = vadd.f32 %v1418, %v1529
          %1531 = vdwg.mxu0
          %v1532 = vmax.f32 %v1437, 0.0
          %v1533 = vmax.f32 %v1440, 0.0
          %v1534 = vmax.f32 %v1443, 0.0
          %v1535 = vmax.f32 %v1446, 0.0
          %v1536 = vmax.f32 %v1449, 0.0
          %v1537 = vmax.f32 %v1452, 0.0
          %v1538 = vmax.f32 %v1455, 0.0
          %v1539 = vmax.f32 %v1458, 0.0
          %v1540 = vmax.f32 %v1461, 0.0
          %v1541 = vmax.f32 %v1464, 0.0
          %v1542 = vmax.f32 %v1467, 0.0
          %v1543 = vmax.f32 %v1470, 0.0
          %v1544 = vmax.f32 %v1473, 0.0
          %v1545 = vmax.f32 %v1476, 0.0
          %v1546 = vmax.f32 %v1479, 0.0
          %v1547 = vmax.f32 %v1482, 0.0
          %v1548 = vmax.f32 %v1485, 0.0
          %v1549 = vmax.f32 %v1488, 0.0
          %v1550 = vmax.f32 %v1491, 0.0
          %v1551 = vmax.f32 %v1494, 0.0
          %v1552 = vmax.f32 %v1497, 0.0
          %v1553 = vmax.f32 %v1500, 0.0
          %v1554 = vmax.f32 %v1503, 0.0
          %v1555 = vmax.f32 %v1506, 0.0
          %v1556 = vmax.f32 %v1509, 0.0
          %v1557 = vmax.f32 %v1512, 0.0
          %v1558 = vmax.f32 %v1515, 0.0
          %v1559 = vmax.f32 %v1518, 0.0
          %v1560 = vmax.f32 %v1521, 0.0
          %v1561 = vmax.f32 %v1524, 0.0
          %v1562 = vmax.f32 %v1527, 0.0
          %v1563 = vmax.f32 %v1530, 0.0
          %v1564 = vld [vmem:[#allocation14] sm:$0xff]
          %v1565 = vld [vmem:[#allocation14 + $0x8] sm:$0xff]
          %v1566 = vld [vmem:[#allocation14 + $0x10] sm:$0xff]
          %v1567 = vld [vmem:[#allocation14 + $0x18] sm:$0xff]
          %v1568 = vld [vmem:[#allocation14 + $0x20] sm:$0xff]
          %v1569 = vld [vmem:[#allocation14 + $0x28] sm:$0xff]
          %v1570 = vld [vmem:[#allocation14 + $0x30] sm:$0xff]
          %v1571 = vld [vmem:[#allocation14 + $0x38] sm:$0xff]
          %v1572 = vld [vmem:[#allocation14 + $0x40] sm:$0xff]
          %v1573 = vld [vmem:[#allocation14 + $0x48] sm:$0xff]
          %v1574 = vld [vmem:[#allocation14 + $0x50] sm:$0xff]
          %v1575 = vld [vmem:[#allocation14 + $0x58] sm:$0xff]
          %v1576 = vld [vmem:[#allocation14 + $0x60] sm:$0xff]
          %v1577 = vld [vmem:[#allocation14 + $0x68] sm:$0xff]
          %v1578 = vld [vmem:[#allocation14 + $0x70] sm:$0xff]
          %v1579 = vld [vmem:[#allocation14 + $0x78] sm:$0xff]
          %v1580 = vperm.slane %v1369, 1
          %1581 = vmatpush.msra.mxu0 %v1579
          %1582 = vmatpush.msra.mxu0 %v1578
          %1583 = vmatpush.msra.mxu0 %v1577
          %1584 = vmatpush.msra.mxu0 %v1576
          %1585 = vmatpush.msra.mxu0 %v1575
          %1586 = vmatpush.msra.mxu0 %v1574
          %1587 = vmatpush.msra.mxu0 %v1573
          %1588 = vmatpush.msra.mxu0 %v1572
          %1589 = vmatpush.msra.mxu0 %v1571
          %1590 = vmatpush.msra.mxu0 %v1570
          %1591 = vmatpush.msra.mxu0 %v1569
          %1592 = vmatpush.msra.mxu0 %v1568
          %1593 = vmatpush.msra.mxu0 %v1567
          %1594 = vmatpush.msra.mxu0 %v1566
          %1595 = vmatpush.msra.mxu0 %v1565
          %1596 = vmatpush.msra.mxu0 %v1564
          %1597 = vmatmul.f32.gmra.mxu0 %v1532
          %v1598 = vpop.f32.mrf.mxu0
          %v1599 = vadd.f32 %v1580, %v1598
          %1600 = vmatmul.f32.gmra.mxu0 %v1533
          %v1601 = vpop.f32.mrf.mxu0
          %v1602 = vadd.f32 %v1580, %v1601
          %1603 = vmatmul.f32.gmra.mxu0 %v1534
          %v1604 = vpop.f32.mrf.mxu0
          %v1605 = vadd.f32 %v1580, %v1604
          %1606 = vmatmul.f32.gmra.mxu0 %v1535
          %v1607 = vpop.f32.mrf.mxu0
          %v1608 = vadd.f32 %v1580, %v1607
          %1609 = vmatmul.f32.gmra.mxu0 %v1536
          %v1610 = vpop.f32.mrf.mxu0
          %v1611 = vadd.f32 %v1580, %v1610
          %1612 = vmatmul.f32.gmra.mxu0 %v1537
          %v1613 = vpop.f32.mrf.mxu0
          %v1614 = vadd.f32 %v1580, %v1613
          %1615 = vmatmul.f32.gmra.mxu0 %v1538
          %v1616 = vpop.f32.mrf.mxu0
          %v1617 = vadd.f32 %v1580, %v1616
          %1618 = vmatmul.f32.gmra.mxu0 %v1539
          %v1619 = vpop.f32.mrf.mxu0
          %v1620 = vadd.f32 %v1580, %v1619
          %1621 = vmatmul.f32.gmra.mxu0 %v1540
          %v1622 = vpop.f32.mrf.mxu0
          %v1623 = vadd.f32 %v1580, %v1622
          %1624 = vmatmul.f32.gmra.mxu0 %v1541
          %v1625 = vpop.f32.mrf.mxu0
          %v1626 = vadd.f32 %v1580, %v1625
          %1627 = vmatmul.f32.gmra.mxu0 %v1542
          %v1628 = vpop.f32.mrf.mxu0
          %v1629 = vadd.f32 %v1580, %v1628
          %1630 = vmatmul.f32.gmra.mxu0 %v1543
          %v1631 = vpop.f32.mrf.mxu0
          %v1632 = vadd.f32 %v1580, %v1631
          %1633 = vmatmul.f32.gmra.mxu0 %v1544
          %v1634 = vpop.f32.mrf.mxu0
          %v1635 = vadd.f32 %v1580, %v1634
          %1636 = vmatmul.f32.gmra.mxu0 %v1545
          %v1637 = vpop.f32.mrf.mxu0
          %v1638 = vadd.f32 %v1580, %v1637
          %1639 = vmatmul.f32.gmra.mxu0 %v1546
          %v1640 = vpop.f32.mrf.mxu0
          %v1641 = vadd.f32 %v1580, %v1640
          %1642 = vmatmul.f32.gmra.mxu0 %v1547
          %v1643 = vpop.f32.mrf.mxu0
          %v1644 = vadd.f32 %v1580, %v1643
          %1645 = vmatmul.f32.gmra.mxu0 %v1548
          %v1646 = vpop.f32.mrf.mxu0
          %v1647 = vadd.f32 %v1580, %v1646
          %1648 = vmatmul.f32.gmra.mxu0 %v1549
          %v1649 = vpop.f32.mrf.mxu0
          %v1650 = vadd.f32 %v1580, %v1649
          %1651 = vmatmul.f32.gmra.mxu0 %v1550
          %v1652 = vpop.f32.mrf.mxu0
          %v1653 = vadd.f32 %v1580, %v1652
          %1654 = vmatmul.f32.gmra.mxu0 %v1551
          %v1655 = vpop.f32.mrf.mxu0
          %v1656 = vadd.f32 %v1580, %v1655
          %1657 = vmatmul.f32.gmra.mxu0 %v1552
          %v1658 = vpop.f32.mrf.mxu0
          %v1659 = vadd.f32 %v1580, %v1658
          %1660 = vmatmul.f32.gmra.mxu0 %v1553
          %v1661 = vpop.f32.mrf.mxu0
          %v1662 = vadd.f32 %v1580, %v1661
          %1663 = vmatmul.f32.gmra.mxu0 %v1554
          %v1664 = vpop.f32.mrf.mxu0
          %v1665 = vadd.f32 %v1580, %v1664
          %1666 = vmatmul.f32.gmra.mxu0 %v1555
          %v1667 = vpop.f32.mrf.mxu0
          %v1668 = vadd.f32 %v1580, %v1667
          %1669 = vmatmul.f32.gmra.mxu0 %v1556
          %v1670 = vpop.f32.mrf.mxu0
          %v1671 = vadd.f32 %v1580, %v1670
          %1672 = vmatmul.f32.gmra.mxu0 %v1557
          %v1673 = vpop.f32.mrf.mxu0
          %v1674 = vadd.f32 %v1580, %v1673
          %1675 = vmatmul.f32.gmra.mxu0 %v1558
          %v1676 = vpop.f32.mrf.mxu0
          %v1677 = vadd.f32 %v1580, %v1676
          %1678 = vmatmul.f32.gmra.mxu0 %v1559
          %v1679 = vpop.f32.mrf.mxu0
          %v1680 = vadd.f32 %v1580, %v1679
          %1681 = vmatmul.f32.gmra.mxu0 %v1560
          %v1682 = vpop.f32.mrf.mxu0
          %v1683 = vadd.f32 %v1580, %v1682
          %1684 = vmatmul.f32.gmra.mxu0 %v1561
          %v1685 = vpop.f32.mrf.mxu0
          %v1686 = vadd.f32 %v1580, %v1685
          %1687 = vmatmul.f32.gmra.mxu0 %v1562
          %v1688 = vpop.f32.mrf.mxu0
          %v1689 = vadd.f32 %v1580, %v1688
          %1690 = vmatmul.f32.gmra.mxu0 %v1563
          %v1691 = vpop.f32.mrf.mxu0
          %v1692 = vadd.f32 %v1580, %v1691
          %1693 = vdwg.mxu0
          %v1694 = vmax.f32 %v1599, 0.0
          %v1695 = vmax.f32 %v1602, 0.0
          %v1696 = vmax.f32 %v1605, 0.0
          %v1697 = vmax.f32 %v1608, 0.0
          %v1698 = vmax.f32 %v1611, 0.0
          %v1699 = vmax.f32 %v1614, 0.0
          %v1700 = vmax.f32 %v1617, 0.0
          %v1701 = vmax.f32 %v1620, 0.0
          %v1702 = vmax.f32 %v1623, 0.0
          %v1703 = vmax.f32 %v1626, 0.0
          %v1704 = vmax.f32 %v1629, 0.0
          %v1705 = vmax.f32 %v1632, 0.0
          %v1706 = vmax.f32 %v1635, 0.0
          %v1707 = vmax.f32 %v1638, 0.0
          %v1708 = vmax.f32 %v1641, 0.0
          %v1709 = vmax.f32 %v1644, 0.0
          %v1710 = vmax.f32 %v1647, 0.0
          %v1711 = vmax.f32 %v1650, 0.0
          %v1712 = vmax.f32 %v1653, 0.0
          %v1713 = vmax.f32 %v1656, 0.0
          %v1714 = vmax.f32 %v1659, 0.0
          %v1715 = vmax.f32 %v1662, 0.0
          %v1716 = vmax.f32 %v1665, 0.0
          %v1717 = vmax.f32 %v1668, 0.0
          %v1718 = vmax.f32 %v1671, 0.0
          %v1719 = vmax.f32 %v1674, 0.0
          %v1720 = vmax.f32 %v1677, 0.0
          %v1721 = vmax.f32 %v1680, 0.0
          %v1722 = vmax.f32 %v1683, 0.0
          %v1723 = vmax.f32 %v1686, 0.0
          %v1724 = vmax.f32 %v1689, 0.0
          %v1725 = vmax.f32 %v1692, 0.0
          %v1726 = vld [vmem:[#allocation15] sm:$0xff]
          %v1727 = vld [vmem:[#allocation15 + $0x8] sm:$0xff]
          %v1728 = vld [vmem:[#allocation15 + $0x10] sm:$0xff]
          %v1729 = vld [vmem:[#allocation15 + $0x18] sm:$0xff]
          %v1730 = vld [vmem:[#allocation15 + $0x20] sm:$0xff]
          %v1731 = vld [vmem:[#allocation15 + $0x28] sm:$0xff]
          %v1732 = vld [vmem:[#allocation15 + $0x30] sm:$0xff]
          %v1733 = vld [vmem:[#allocation15 + $0x38] sm:$0xff]
          %v1734 = vld [vmem:[#allocation15 + $0x40] sm:$0xff]
          %v1735 = vld [vmem:[#allocation15 + $0x48] sm:$0xff]
          %v1736 = vld [vmem:[#allocation15 + $0x50] sm:$0xff]
          %v1737 = vld [vmem:[#allocation15 + $0x58] sm:$0xff]
          %v1738 = vld [vmem:[#allocation15 + $0x60] sm:$0xff]
          %v1739 = vld [vmem:[#allocation15 + $0x68] sm:$0xff]
          %v1740 = vld [vmem:[#allocation15 + $0x70] sm:$0xff]
          %v1741 = vld [vmem:[#allocation15 + $0x78] sm:$0xff]
          %v1742 = vperm.slane %v1369, 2
          %1743 = vmatpush.msra.mxu0 %v1741
          %1744 = vmatpush.msra.mxu0 %v1740
          %1745 = vmatpush.msra.mxu0 %v1739
          %1746 = vmatpush.msra.mxu0 %v1738
          %1747 = vmatpush.msra.mxu0 %v1737
          %1748 = vmatpush.msra.mxu0 %v1736
          %1749 = vmatpush.msra.mxu0 %v1735
          %1750 = vmatpush.msra.mxu0 %v1734
          %1751 = vmatpush.msra.mxu0 %v1733
          %1752 = vmatpush.msra.mxu0 %v1732
          %1753 = vmatpush.msra.mxu0 %v1731
          %1754 = vmatpush.msra.mxu0 %v1730
          %1755 = vmatpush.msra.mxu0 %v1729
          %1756 = vmatpush.msra.mxu0 %v1728
          %1757 = vmatpush.msra.mxu0 %v1727
          %1758 = vmatpush.msra.mxu0 %v1726
          %1759 = vmatmul.f32.gmra.mxu0 %v1694
          %v1760 = vpop.f32.mrf.mxu0
          %v1761 = vadd.f32 %v1742, %v1760
          %1762 = vmatmul.f32.gmra.mxu0 %v1695
          %v1763 = vpop.f32.mrf.mxu0
          %v1764 = vadd.f32 %v1742, %v1763
          %1765 = vmatmul.f32.gmra.mxu0 %v1696
          %v1766 = vpop.f32.mrf.mxu0
          %v1767 = vadd.f32 %v1742, %v1766
          %1768 = vmatmul.f32.gmra.mxu0 %v1697
          %v1769 = vpop.f32.mrf.mxu0
          %v1770 = vadd.f32 %v1742, %v1769
          %1771 = vmatmul.f32.gmra.mxu0 %v1698
          %v1772 = vpop.f32.mrf.mxu0
          %v1773 = vadd.f32 %v1742, %v1772
          %1774 = vmatmul.f32.gmra.mxu0 %v1699
          %v1775 = vpop.f32.mrf.mxu0
          %v1776 = vadd.f32 %v1742, %v1775
          %1777 = vmatmul.f32.gmra.mxu0 %v1700
          %v1778 = vpop.f32.mrf.mxu0
          %v1779 = vadd.f32 %v1742, %v1778
          %1780 = vmatmul.f32.gmra.mxu0 %v1701
          %v1781 = vpop.f32.mrf.mxu0
          %v1782 = vadd.f32 %v1742, %v1781
          %1783 = vmatmul.f32.gmra.mxu0 %v1702
          %v1784 = vpop.f32.mrf.mxu0
          %v1785 = vadd.f32 %v1742, %v1784
          %1786 = vmatmul.f32.gmra.mxu0 %v1703
          %v1787 = vpop.f32.mrf.mxu0
          %v1788 = vadd.f32 %v1742, %v1787
          %1789 = vmatmul.f32.gmra.mxu0 %v1704
          %v1790 = vpop.f32.mrf.mxu0
          %v1791 = vadd.f32 %v1742, %v1790
          %1792 = vmatmul.f32.gmra.mxu0 %v1705
          %v1793 = vpop.f32.mrf.mxu0
          %v1794 = vadd.f32 %v1742, %v1793
          %1795 = vmatmul.f32.gmra.mxu0 %v1706
          %v1796 = vpop.f32.mrf.mxu0
          %v1797 = vadd.f32 %v1742, %v1796
          %1798 = vmatmul.f32.gmra.mxu0 %v1707
          %v1799 = vpop.f32.mrf.mxu0
          %v1800 = vadd.f32 %v1742, %v1799
          %1801 = vmatmul.f32.gmra.mxu0 %v1708
          %v1802 = vpop.f32.mrf.mxu0
          %v1803 = vadd.f32 %v1742, %v1802
          %1804 = vmatmul.f32.gmra.mxu0 %v1709
          %v1805 = vpop.f32.mrf.mxu0
          %v1806 = vadd.f32 %v1742, %v1805
          %1807 = vmatmul.f32.gmra.mxu0 %v1710
          %v1808 = vpop.f32.mrf.mxu0
          %v1809 = vadd.f32 %v1742, %v1808
          %1810 = vmatmul.f32.gmra.mxu0 %v1711
          %v1811 = vpop.f32.mrf.mxu0
          %v1812 = vadd.f32 %v1742, %v1811
          %1813 = vmatmul.f32.gmra.mxu0 %v1712
          %v1814 = vpop.f32.mrf.mxu0
          %v1815 = vadd.f32 %v1742, %v1814
          %1816 = vmatmul.f32.gmra.mxu0 %v1713
          %v1817 = vpop.f32.mrf.mxu0
          %v1818 = vadd.f32 %v1742, %v1817
          %1819 = vmatmul.f32.gmra.mxu0 %v1714
          %v1820 = vpop.f32.mrf.mxu0
          %v1821 = vadd.f32 %v1742, %v1820
          %1822 = vmatmul.f32.gmra.mxu0 %v1715
          %v1823 = vpop.f32.mrf.mxu0
          %v1824 = vadd.f32 %v1742, %v1823
          %1825 = vmatmul.f32.gmra.mxu0 %v1716
          %v1826 = vpop.f32.mrf.mxu0
          %v1827 = vadd.f32 %v1742, %v1826
          %1828 = vmatmul.f32.gmra.mxu0 %v1717
          %v1829 = vpop.f32.mrf.mxu0
          %v1830 = vadd.f32 %v1742, %v1829
          %1831 = vmatmul.f32.gmra.mxu0 %v1718
          %v1832 = vpop.f32.mrf.mxu0
          %v1833 = vadd.f32 %v1742, %v1832
          %1834 = vmatmul.f32.gmra.mxu0 %v1719
          %v1835 = vpop.f32.mrf.mxu0
          %v1836 = vadd.f32 %v1742, %v1835
          %1837 = vmatmul.f32.gmra.mxu0 %v1720
          %v1838 = vpop.f32.mrf.mxu0
          %v1839 = vadd.f32 %v1742, %v1838
          %1840 = vmatmul.f32.gmra.mxu0 %v1721
          %v1841 = vpop.f32.mrf.mxu0
          %v1842 = vadd.f32 %v1742, %v1841
          %1843 = vmatmul.f32.gmra.mxu0 %v1722
          %v1844 = vpop.f32.mrf.mxu0
          %v1845 = vadd.f32 %v1742, %v1844
          %1846 = vmatmul.f32.gmra.mxu0 %v1723
          %v1847 = vpop.f32.mrf.mxu0
          %v1848 = vadd.f32 %v1742, %v1847
          %1849 = vmatmul.f32.gmra.mxu0 %v1724
          %v1850 = vpop.f32.mrf.mxu0
          %v1851 = vadd.f32 %v1742, %v1850
          %1852 = vmatmul.f32.gmra.mxu0 %v1725
          %v1853 = vpop.f32.mrf.mxu0
          %v1854 = vadd.f32 %v1742, %v1853
          %1855 = vdwg.mxu0
          %v1856 = vld [vmem:[%s625] sm:$0xff]
          %v1857 = vld [vmem:[%s625 + $0x8] sm:$0xff]
          %v1858 = vld [vmem:[%s625 + $0x10] sm:$0xff]
          %v1859 = vld [vmem:[%s625 + $0x18] sm:$0xff]
          %v1860 = vld [vmem:[%s625 + $0x20] sm:$0xff]
          %v1861 = vld [vmem:[%s625 + $0x28] sm:$0xff]
          %v1862 = vld [vmem:[%s625 + $0x30] sm:$0xff]
          %v1863 = vld [vmem:[%s625 + $0x38] sm:$0xff]
          %v1864 = vld [vmem:[%s625 + $0x40] sm:$0xff]
          %v1865 = vld [vmem:[%s625 + $0x48] sm:$0xff]
          %v1866 = vld [vmem:[%s625 + $0x50] sm:$0xff]
          %v1867 = vld [vmem:[%s625 + $0x58] sm:$0xff]
          %v1868 = vld [vmem:[%s625 + $0x60] sm:$0xff]
          %v1869 = vld [vmem:[%s625 + $0x68] sm:$0xff]
          %v1870 = vld [vmem:[%s625 + $0x70] sm:$0xff]
          %v1871 = vld [vmem:[%s625 + $0x78] sm:$0xff]
          %v1872 = vld [vmem:[%s625 + $0x80] sm:$0xff]
          %v1873 = vld [vmem:[%s625 + $0x88] sm:$0xff]
          %v1874 = vld [vmem:[%s625 + $0x90] sm:$0xff]
          %v1875 = vld [vmem:[%s625 + $0x98] sm:$0xff]
          %v1876 = vld [vmem:[%s625 + $0xa0] sm:$0xff]
          %v1877 = vld [vmem:[%s625 + $0xa8] sm:$0xff]
          %v1878 = vld [vmem:[%s625 + $0xb0] sm:$0xff]
          %v1879 = vld [vmem:[%s625 + $0xb8] sm:$0xff]
          %v1880 = vld [vmem:[%s625 + $0xc0] sm:$0xff]
          %v1881 = vld [vmem:[%s625 + $0xc8] sm:$0xff]
          %v1882 = vld [vmem:[%s625 + $0xd0] sm:$0xff]
          %v1883 = vld [vmem:[%s625 + $0xd8] sm:$0xff]
          %v1884 = vld [vmem:[%s625 + $0xe0] sm:$0xff]
          %v1885 = vld [vmem:[%s625 + $0xe8] sm:$0xff]
          %v1886 = vld [vmem:[%s625 + $0xf0] sm:$0xff]
          %v1887 = vld [vmem:[%s625 + $0xf8] sm:$0xff]
          %v1888 = vld [vmem:[%s635] sm:$0xff]
          %v1889 = vld [vmem:[%s635 + $0x8] sm:$0xff]
          %v1890 = vld [vmem:[%s635 + $0x10] sm:$0xff]
          %v1891 = vld [vmem:[%s635 + $0x18] sm:$0xff]
          %v1892 = vld [vmem:[%s635 + $0x20] sm:$0xff]
          %v1893 = vld [vmem:[%s635 + $0x28] sm:$0xff]
          %v1894 = vld [vmem:[%s635 + $0x30] sm:$0xff]
          %v1895 = vld [vmem:[%s635 + $0x38] sm:$0xff]
          %v1896 = vld [vmem:[%s635 + $0x40] sm:$0xff]
          %v1897 = vld [vmem:[%s635 + $0x48] sm:$0xff]
          %v1898 = vld [vmem:[%s635 + $0x50] sm:$0xff]
          %v1899 = vld [vmem:[%s635 + $0x58] sm:$0xff]
          %v1900 = vld [vmem:[%s635 + $0x60] sm:$0xff]
          %v1901 = vld [vmem:[%s635 + $0x68] sm:$0xff]
          %v1902 = vld [vmem:[%s635 + $0x70] sm:$0xff]
          %v1903 = vld [vmem:[%s635 + $0x78] sm:$0xff]
          %v1904 = vld [vmem:[%s635 + $0x80] sm:$0xff]
          %v1905 = vld [vmem:[%s635 + $0x88] sm:$0xff]
          %v1906 = vld [vmem:[%s635 + $0x90] sm:$0xff]
          %v1907 = vld [vmem:[%s635 + $0x98] sm:$0xff]
          %v1908 = vld [vmem:[%s635 + $0xa0] sm:$0xff]
          %v1909 = vld [vmem:[%s635 + $0xa8] sm:$0xff]
          %v1910 = vld [vmem:[%s635 + $0xb0] sm:$0xff]
          %v1911 = vld [vmem:[%s635 + $0xb8] sm:$0xff]
          %v1912 = vld [vmem:[%s635 + $0xc0] sm:$0xff]
          %v1913 = vld [vmem:[%s635 + $0xc8] sm:$0xff]
          %v1914 = vld [vmem:[%s635 + $0xd0] sm:$0xff]
          %v1915 = vld [vmem:[%s635 + $0xd8] sm:$0xff]
          %v1916 = vld [vmem:[%s635 + $0xe0] sm:$0xff]
          %v1917 = vld [vmem:[%s635 + $0xe8] sm:$0xff]
          %v1918 = vld [vmem:[%s635 + $0xf0] sm:$0xff]
          %v1919 = vld [vmem:[%s635 + $0xf8] sm:$0xff]
          %v1920 = vmul.f32 %v1856, %v1888
          %v1921 = vmul.f32 %v1857, %v1889
          %v1922 = vmul.f32 %v1858, %v1890
          %v1923 = vmul.f32 %v1859, %v1891
          %v1924 = vmul.f32 %v1860, %v1892
          %v1925 = vmul.f32 %v1861, %v1893
          %v1926 = vmul.f32 %v1862, %v1894
          %v1927 = vmul.f32 %v1863, %v1895
          %v1928 = vmul.f32 %v1864, %v1896
          %v1929 = vmul.f32 %v1865, %v1897
          %v1930 = vmul.f32 %v1866, %v1898
          %v1931 = vmul.f32 %v1867, %v1899
          %v1932 = vmul.f32 %v1868, %v1900
          %v1933 = vmul.f32 %v1869, %v1901
          %v1934 = vmul.f32 %v1870, %v1902
          %v1935 = vmul.f32 %v1871, %v1903
          %v1936 = vmul.f32 %v1872, %v1904
          %v1937 = vmul.f32 %v1873, %v1905
          %v1938 = vmul.f32 %v1874, %v1906
          %v1939 = vmul.f32 %v1875, %v1907
          %v1940 = vmul.f32 %v1876, %v1908
          %v1941 = vmul.f32 %v1877, %v1909
          %v1942 = vmul.f32 %v1878, %v1910
          %v1943 = vmul.f32 %v1879, %v1911
          %v1944 = vmul.f32 %v1880, %v1912
          %v1945 = vmul.f32 %v1881, %v1913
          %v1946 = vmul.f32 %v1882, %v1914
          %v1947 = vmul.f32 %v1883, %v1915
          %v1948 = vmul.f32 %v1884, %v1916
          %v1949 = vmul.f32 %v1885, %v1917
          %v1950 = vmul.f32 %v1886, %v1918
          %v1951 = vmul.f32 %v1887, %v1919
          %1952 = vadd.xlane.f32.xlu0 %v1920
          %v1953 = vpop.xlane.xlu0 %1952
          %1954 = vadd.xlane.f32.xlu0 %v1921
          %v1955 = vpop.xlane.xlu0 %1954
          %1956 = vadd.xlane.f32.xlu0 %v1922
          %v1957 = vpop.xlane.xlu0 %1956
          %1958 = vadd.xlane.f32.xlu0 %v1923
          %v1959 = vpop.xlane.xlu0 %1958
          %1960 = vadd.xlane.f32.xlu0 %v1924
          %v1961 = vpop.xlane.xlu0 %1960
          %1962 = vadd.xlane.f32.xlu0 %v1925
          %v1963 = vpop.xlane.xlu0 %1962
          %1964 = vadd.xlane.f32.xlu0 %v1926
          %v1965 = vpop.xlane.xlu0 %1964
          %1966 = vadd.xlane.f32.xlu0 %v1927
          %v1967 = vpop.xlane.xlu0 %1966
          %1968 = vadd.xlane.f32.xlu0 %v1928
          %v1969 = vpop.xlane.xlu0 %1968
          %1970 = vadd.xlane.f32.xlu0 %v1929
          %v1971 = vpop.xlane.xlu0 %1970
          %1972 = vadd.xlane.f32.xlu0 %v1930
          %v1973 = vpop.xlane.xlu0 %1972
          %1974 = vadd.xlane.f32.xlu0 %v1931
          %v1975 = vpop.xlane.xlu0 %1974
          %1976 = vadd.xlane.f32.xlu0 %v1932
          %v1977 = vpop.xlane.xlu0 %1976
          %1978 = vadd.xlane.f32.xlu0 %v1933
          %v1979 = vpop.xlane.xlu0 %1978
          %1980 = vadd.xlane.f32.xlu0 %v1934
          %v1981 = vpop.xlane.xlu0 %1980
          %1982 = vadd.xlane.f32.xlu0 %v1935
          %v1983 = vpop.xlane.xlu0 %1982
          %1984 = vadd.xlane.f32.xlu0 %v1936
          %v1985 = vpop.xlane.xlu0 %1984
          %1986 = vadd.xlane.f32.xlu0 %v1937
          %v1987 = vpop.xlane.xlu0 %1986
          %1988 = vadd.xlane.f32.xlu0 %v1938
          %v1989 = vpop.xlane.xlu0 %1988
          %1990 = vadd.xlane.f32.xlu0 %v1939
          %v1991 = vpop.xlane.xlu0 %1990
          %1992 = vadd.xlane.f32.xlu0 %v1940
          %v1993 = vpop.xlane.xlu0 %1992
          %1994 = vadd.xlane.f32.xlu0 %v1941
          %v1995 = vpop.xlane.xlu0 %1994
          %1996 = vadd.xlane.f32.xlu0 %v1942
          %v1997 = vpop.xlane.xlu0 %1996
          %1998 = vadd.xlane.f32.xlu0 %v1943
          %v1999 = vpop.xlane.xlu0 %1998
          %2000 = vadd.xlane.f32.xlu0 %v1944
          %v2001 = vpop.xlane.xlu0 %2000
          %2002 = vadd.xlane.f32.xlu0 %v1945
          %v2003 = vpop.xlane.xlu0 %2002
          %2004 = vadd.xlane.f32.xlu0 %v1946
          %v2005 = vpop.xlane.xlu0 %2004
          %2006 = vadd.xlane.f32.xlu0 %v1947
          %v2007 = vpop.xlane.xlu0 %2006
          %2008 = vadd.xlane.f32.xlu0 %v1948
          %v2009 = vpop.xlane.xlu0 %2008
          %2010 = vadd.xlane.f32.xlu0 %v1949
          %v2011 = vpop.xlane.xlu0 %2010
          %2012 = vadd.xlane.f32.xlu0 %v1950
          %v2013 = vpop.xlane.xlu0 %2012
          %2014 = vadd.xlane.f32.xlu0 %v1951
          %v2015 = vpop.xlane.xlu0 %2014
          %v2016 = vld [vmem:[#allocation17] sm:$0xff]
          %v2017 = vld [vmem:[#allocation17 + $0x8] sm:$0xff]
          %v2018 = vld [vmem:[#allocation17 + $0x10] sm:$0xff]
          %v2019 = vld [vmem:[#allocation17 + $0x18] sm:$0xff]
          %v2020 = vld [vmem:[#allocation17 + $0x20] sm:$0xff]
          %v2021 = vld [vmem:[#allocation17 + $0x28] sm:$0xff]
          %v2022 = vld [vmem:[#allocation17 + $0x30] sm:$0xff]
          %v2023 = vld [vmem:[#allocation17 + $0x38] sm:$0xff]
          %v2024 = vld [vmem:[#allocation17 + $0x40] sm:$0xff]
          %v2025 = vld [vmem:[#allocation17 + $0x48] sm:$0xff]
          %v2026 = vld [vmem:[#allocation17 + $0x50] sm:$0xff]
          %v2027 = vld [vmem:[#allocation17 + $0x58] sm:$0xff]
          %v2028 = vld [vmem:[#allocation17 + $0x60] sm:$0xff]
          %v2029 = vld [vmem:[#allocation17 + $0x68] sm:$0xff]
          %v2030 = vld [vmem:[#allocation17 + $0x70] sm:$0xff]
          %v2031 = vld [vmem:[#allocation17 + $0x78] sm:$0xff]
          %v2032 = vperm.slane %v1369, 3
          %2033 = vmatpush.msra.mxu0 %v2031
          %2034 = vmatpush.msra.mxu0 %v2030
          %2035 = vmatpush.msra.mxu0 %v2029
          %2036 = vmatpush.msra.mxu0 %v2028
          %2037 = vmatpush.msra.mxu0 %v2027
          %2038 = vmatpush.msra.mxu0 %v2026
          %2039 = vmatpush.msra.mxu0 %v2025
          %2040 = vmatpush.msra.mxu0 %v2024
          %2041 = vmatpush.msra.mxu0 %v2023
          %2042 = vmatpush.msra.mxu0 %v2022
          %2043 = vmatpush.msra.mxu0 %v2021
          %2044 = vmatpush.msra.mxu0 %v2020
          %2045 = vmatpush.msra.mxu0 %v2019
          %2046 = vmatpush.msra.mxu0 %v2018
          %2047 = vmatpush.msra.mxu0 %v2017
          %2048 = vmatpush.msra.mxu0 %v2016
          %2049 = vmatmul.f32.gmra.mxu0 %v1920
          %v2050 = vpop.f32.mrf.mxu0
          %v2051 = vadd.f32 %v2032, %v2050
          %2052 = vmatmul.f32.gmra.mxu0 %v1921
          %v2053 = vpop.f32.mrf.mxu0
          %v2054 = vadd.f32 %v2032, %v2053
          %2055 = vmatmul.f32.gmra.mxu0 %v1922
          %v2056 = vpop.f32.mrf.mxu0
          %v2057 = vadd.f32 %v2032, %v2056
          %2058 = vmatmul.f32.gmra.mxu0 %v1923
          %v2059 = vpop.f32.mrf.mxu0
          %v2060 = vadd.f32 %v2032, %v2059
          %2061 = vmatmul.f32.gmra.mxu0 %v1924
          %v2062 = vpop.f32.mrf.mxu0
          %v2063 = vadd.f32 %v2032, %v2062
          %2064 = vmatmul.f32.gmra.mxu0 %v1925
          %v2065 = vpop.f32.mrf.mxu0
          %v2066 = vadd.f32 %v2032, %v2065
          %2067 = vmatmul.f32.gmra.mxu0 %v1926
          %v2068 = vpop.f32.mrf.mxu0
          %v2069 = vadd.f32 %v2032, %v2068
          %2070 = vmatmul.f32.gmra.mxu0 %v1927
          %v2071 = vpop.f32.mrf.mxu0
          %v2072 = vadd.f32 %v2032, %v2071
          %2073 = vmatmul.f32.gmra.mxu0 %v1928
          %v2074 = vpop.f32.mrf.mxu0
          %v2075 = vadd.f32 %v2032, %v2074
          %2076 = vmatmul.f32.gmra.mxu0 %v1929
          %v2077 = vpop.f32.mrf.mxu0
          %v2078 = vadd.f32 %v2032, %v2077
          %2079 = vmatmul.f32.gmra.mxu0 %v1930
          %v2080 = vpop.f32.mrf.mxu0
          %v2081 = vadd.f32 %v2032, %v2080
          %2082 = vmatmul.f32.gmra.mxu0 %v1931
          %v2083 = vpop.f32.mrf.mxu0
          %v2084 = vadd.f32 %v2032, %v2083
          %2085 = vmatmul.f32.gmra.mxu0 %v1932
          %v2086 = vpop.f32.mrf.mxu0
          %v2087 = vadd.f32 %v2032, %v2086
          %2088 = vmatmul.f32.gmra.mxu0 %v1933
          %v2089 = vpop.f32.mrf.mxu0
          %v2090 = vadd.f32 %v2032, %v2089
          %2091 = vmatmul.f32.gmra.mxu0 %v1934
          %v2092 = vpop.f32.mrf.mxu0
          %v2093 = vadd.f32 %v2032, %v2092
          %2094 = vmatmul.f32.gmra.mxu0 %v1935
          %v2095 = vpop.f32.mrf.mxu0
          %v2096 = vadd.f32 %v2032, %v2095
          %2097 = vmatmul.f32.gmra.mxu0 %v1936
          %v2098 = vpop.f32.mrf.mxu0
          %v2099 = vadd.f32 %v2032, %v2098
          %2100 = vmatmul.f32.gmra.mxu0 %v1937
          %v2101 = vpop.f32.mrf.mxu0
          %v2102 = vadd.f32 %v2032, %v2101
          %2103 = vmatmul.f32.gmra.mxu0 %v1938
          %v2104 = vpop.f32.mrf.mxu0
          %v2105 = vadd.f32 %v2032, %v2104
          %2106 = vmatmul.f32.gmra.mxu0 %v1939
          %v2107 = vpop.f32.mrf.mxu0
          %v2108 = vadd.f32 %v2032, %v2107
          %2109 = vmatmul.f32.gmra.mxu0 %v1940
          %v2110 = vpop.f32.mrf.mxu0
          %v2111 = vadd.f32 %v2032, %v2110
          %2112 = vmatmul.f32.gmra.mxu0 %v1941
          %v2113 = vpop.f32.mrf.mxu0
          %v2114 = vadd.f32 %v2032, %v2113
          %2115 = vmatmul.f32.gmra.mxu0 %v1942
          %v2116 = vpop.f32.mrf.mxu0
          %v2117 = vadd.f32 %v2032, %v2116
          %2118 = vmatmul.f32.gmra.mxu0 %v1943
          %v2119 = vpop.f32.mrf.mxu0
          %v2120 = vadd.f32 %v2032, %v2119
          %2121 = vmatmul.f32.gmra.mxu0 %v1944
          %v2122 = vpop.f32.mrf.mxu0
          %v2123 = vadd.f32 %v2032, %v2122
          %2124 = vmatmul.f32.gmra.mxu0 %v1945
          %v2125 = vpop.f32.mrf.mxu0
          %v2126 = vadd.f32 %v2032, %v2125
          %2127 = vmatmul.f32.gmra.mxu0 %v1946
          %v2128 = vpop.f32.mrf.mxu0
          %v2129 = vadd.f32 %v2032, %v2128
          %2130 = vmatmul.f32.gmra.mxu0 %v1947
          %v2131 = vpop.f32.mrf.mxu0
          %v2132 = vadd.f32 %v2032, %v2131
          %2133 = vmatmul.f32.gmra.mxu0 %v1948
          %v2134 = vpop.f32.mrf.mxu0
          %v2135 = vadd.f32 %v2032, %v2134
          %2136 = vmatmul.f32.gmra.mxu0 %v1949
          %v2137 = vpop.f32.mrf.mxu0
          %v2138 = vadd.f32 %v2032, %v2137
          %2139 = vmatmul.f32.gmra.mxu0 %v1950
          %v2140 = vpop.f32.mrf.mxu0
          %v2141 = vadd.f32 %v2032, %v2140
          %2142 = vmatmul.f32.gmra.mxu0 %v1951
          %v2143 = vpop.f32.mrf.mxu0
          %v2144 = vadd.f32 %v2032, %v2143
          %2145 = vdwg.mxu0
          %v2146 = vmax.f32 %v2051, 0.0
          %v2147 = vmax.f32 %v2054, 0.0
          %v2148 = vmax.f32 %v2057, 0.0
          %v2149 = vmax.f32 %v2060, 0.0
          %v2150 = vmax.f32 %v2063, 0.0
          %v2151 = vmax.f32 %v2066, 0.0
          %v2152 = vmax.f32 %v2069, 0.0
          %v2153 = vmax.f32 %v2072, 0.0
          %v2154 = vmax.f32 %v2075, 0.0
          %v2155 = vmax.f32 %v2078, 0.0
          %v2156 = vmax.f32 %v2081, 0.0
          %v2157 = vmax.f32 %v2084, 0.0
          %v2158 = vmax.f32 %v2087, 0.0
          %v2159 = vmax.f32 %v2090, 0.0
          %v2160 = vmax.f32 %v2093, 0.0
          %v2161 = vmax.f32 %v2096, 0.0
          %v2162 = vmax.f32 %v2099, 0.0
          %v2163 = vmax.f32 %v2102, 0.0
          %v2164 = vmax.f32 %v2105, 0.0
          %v2165 = vmax.f32 %v2108, 0.0
          %v2166 = vmax.f32 %v2111, 0.0
          %v2167 = vmax.f32 %v2114, 0.0
          %v2168 = vmax.f32 %v2117, 0.0
          %v2169 = vmax.f32 %v2120, 0.0
          %v2170 = vmax.f32 %v2123, 0.0
          %v2171 = vmax.f32 %v2126, 0.0
          %v2172 = vmax.f32 %v2129, 0.0
          %v2173 = vmax.f32 %v2132, 0.0
          %v2174 = vmax.f32 %v2135, 0.0
          %v2175 = vmax.f32 %v2138, 0.0
          %v2176 = vmax.f32 %v2141, 0.0
          %v2177 = vmax.f32 %v2144, 0.0
          %v2178 = vld [vmem:[#allocation18] sm:$0xff]
          %v2179 = vld [vmem:[#allocation18 + $0x8] sm:$0xff]
          %v2180 = vld [vmem:[#allocation18 + $0x10] sm:$0xff]
          %v2181 = vld [vmem:[#allocation18 + $0x18] sm:$0xff]
          %v2182 = vld [vmem:[#allocation18 + $0x20] sm:$0xff]
          %v2183 = vld [vmem:[#allocation18 + $0x28] sm:$0xff]
          %v2184 = vld [vmem:[#allocation18 + $0x30] sm:$0xff]
          %v2185 = vld [vmem:[#allocation18 + $0x38] sm:$0xff]
          %v2186 = vld [vmem:[#allocation18 + $0x40] sm:$0xff]
          %v2187 = vld [vmem:[#allocation18 + $0x48] sm:$0xff]
          %v2188 = vld [vmem:[#allocation18 + $0x50] sm:$0xff]
          %v2189 = vld [vmem:[#allocation18 + $0x58] sm:$0xff]
          %v2190 = vld [vmem:[#allocation18 + $0x60] sm:$0xff]
          %v2191 = vld [vmem:[#allocation18 + $0x68] sm:$0xff]
          %v2192 = vld [vmem:[#allocation18 + $0x70] sm:$0xff]
          %v2193 = vld [vmem:[#allocation18 + $0x78] sm:$0xff]
          %v2194 = vperm.slane %v1369, 4
          %2195 = vmatpush.msra.mxu0 %v2193
          %2196 = vmatpush.msra.mxu0 %v2192
          %2197 = vmatpush.msra.mxu0 %v2191
          %2198 = vmatpush.msra.mxu0 %v2190
          %2199 = vmatpush.msra.mxu0 %v2189
          %2200 = vmatpush.msra.mxu0 %v2188
          %2201 = vmatpush.msra.mxu0 %v2187
          %2202 = vmatpush.msra.mxu0 %v2186
          %2203 = vmatpush.msra.mxu0 %v2185
          %2204 = vmatpush.msra.mxu0 %v2184
          %2205 = vmatpush.msra.mxu0 %v2183
          %2206 = vmatpush.msra.mxu0 %v2182
          %2207 = vmatpush.msra.mxu0 %v2181
          %2208 = vmatpush.msra.mxu0 %v2180
          %2209 = vmatpush.msra.mxu0 %v2179
          %2210 = vmatpush.msra.mxu0 %v2178
          %2211 = vmatmul.f32.gmra.mxu0 %v2146
          %v2212 = vpop.f32.mrf.mxu0
          %v2213 = vadd.f32 %v2194, %v2212
          %2214 = vmatmul.f32.gmra.mxu0 %v2147
          %v2215 = vpop.f32.mrf.mxu0
          %v2216 = vadd.f32 %v2194, %v2215
          %2217 = vmatmul.f32.gmra.mxu0 %v2148
          %v2218 = vpop.f32.mrf.mxu0
          %v2219 = vadd.f32 %v2194, %v2218
          %2220 = vmatmul.f32.gmra.mxu0 %v2149
          %v2221 = vpop.f32.mrf.mxu0
          %v2222 = vadd.f32 %v2194, %v2221
          %2223 = vmatmul.f32.gmra.mxu0 %v2150
          %v2224 = vpop.f32.mrf.mxu0
          %v2225 = vadd.f32 %v2194, %v2224
          %2226 = vmatmul.f32.gmra.mxu0 %v2151
          %v2227 = vpop.f32.mrf.mxu0
          %v2228 = vadd.f32 %v2194, %v2227
          %2229 = vmatmul.f32.gmra.mxu0 %v2152
          %v2230 = vpop.f32.mrf.mxu0
          %v2231 = vadd.f32 %v2194, %v2230
          %2232 = vmatmul.f32.gmra.mxu0 %v2153
          %v2233 = vpop.f32.mrf.mxu0
          %v2234 = vadd.f32 %v2194, %v2233
          %2235 = vmatmul.f32.gmra.mxu0 %v2154
          %v2236 = vpop.f32.mrf.mxu0
          %v2237 = vadd.f32 %v2194, %v2236
          %2238 = vmatmul.f32.gmra.mxu0 %v2155
          %v2239 = vpop.f32.mrf.mxu0
          %v2240 = vadd.f32 %v2194, %v2239
          %2241 = vmatmul.f32.gmra.mxu0 %v2156
          %v2242 = vpop.f32.mrf.mxu0
          %v2243 = vadd.f32 %v2194, %v2242
          %2244 = vmatmul.f32.gmra.mxu0 %v2157
          %v2245 = vpop.f32.mrf.mxu0
          %v2246 = vadd.f32 %v2194, %v2245
          %2247 = vmatmul.f32.gmra.mxu0 %v2158
          %v2248 = vpop.f32.mrf.mxu0
          %v2249 = vadd.f32 %v2194, %v2248
          %2250 = vmatmul.f32.gmra.mxu0 %v2159
          %v2251 = vpop.f32.mrf.mxu0
          %v2252 = vadd.f32 %v2194, %v2251
          %2253 = vmatmul.f32.gmra.mxu0 %v2160
          %v2254 = vpop.f32.mrf.mxu0
          %v2255 = vadd.f32 %v2194, %v2254
          %2256 = vmatmul.f32.gmra.mxu0 %v2161
          %v2257 = vpop.f32.mrf.mxu0
          %v2258 = vadd.f32 %v2194, %v2257
          %2259 = vmatmul.f32.gmra.mxu0 %v2162
          %v2260 = vpop.f32.mrf.mxu0
          %v2261 = vadd.f32 %v2194, %v2260
          %2262 = vmatmul.f32.gmra.mxu0 %v2163
          %v2263 = vpop.f32.mrf.mxu0
          %v2264 = vadd.f32 %v2194, %v2263
          %2265 = vmatmul.f32.gmra.mxu0 %v2164
          %v2266 = vpop.f32.mrf.mxu0
          %v2267 = vadd.f32 %v2194, %v2266
          %2268 = vmatmul.f32.gmra.mxu0 %v2165
          %v2269 = vpop.f32.mrf.mxu0
          %v2270 = vadd.f32 %v2194, %v2269
          %2271 = vmatmul.f32.gmra.mxu0 %v2166
          %v2272 = vpop.f32.mrf.mxu0
          %v2273 = vadd.f32 %v2194, %v2272
          %2274 = vmatmul.f32.gmra.mxu0 %v2167
          %v2275 = vpop.f32.mrf.mxu0
          %v2276 = vadd.f32 %v2194, %v2275
          %2277 = vmatmul.f32.gmra.mxu0 %v2168
          %v2278 = vpop.f32.mrf.mxu0
          %v2279 = vadd.f32 %v2194, %v2278
          %2280 = vmatmul.f32.gmra.mxu0 %v2169
          %v2281 = vpop.f32.mrf.mxu0
          %v2282 = vadd.f32 %v2194, %v2281
          %2283 = vmatmul.f32.gmra.mxu0 %v2170
          %v2284 = vpop.f32.mrf.mxu0
          %v2285 = vadd.f32 %v2194, %v2284
          %2286 = vmatmul.f32.gmra.mxu0 %v2171
          %v2287 = vpop.f32.mrf.mxu0
          %v2288 = vadd.f32 %v2194, %v2287
          %2289 = vmatmul.f32.gmra.mxu0 %v2172
          %v2290 = vpop.f32.mrf.mxu0
          %v2291 = vadd.f32 %v2194, %v2290
          %2292 = vmatmul.f32.gmra.mxu0 %v2173
          %v2293 = vpop.f32.mrf.mxu0
          %v2294 = vadd.f32 %v2194, %v2293
          %2295 = vmatmul.f32.gmra.mxu0 %v2174
          %v2296 = vpop.f32.mrf.mxu0
          %v2297 = vadd.f32 %v2194, %v2296
          %2298 = vmatmul.f32.gmra.mxu0 %v2175
          %v2299 = vpop.f32.mrf.mxu0
          %v2300 = vadd.f32 %v2194, %v2299
          %2301 = vmatmul.f32.gmra.mxu0 %v2176
          %v2302 = vpop.f32.mrf.mxu0
          %v2303 = vadd.f32 %v2194, %v2302
          %2304 = vmatmul.f32.gmra.mxu0 %v2177
          %v2305 = vpop.f32.mrf.mxu0
          %v2306 = vadd.f32 %v2194, %v2305
          %2307 = vdwg.mxu0
          %v2308 = vadd.f32 %v1761, %v2213
          %v2309 = vadd.f32 %v1764, %v2216
          %v2310 = vadd.f32 %v1767, %v2219
          %v2311 = vadd.f32 %v1770, %v2222
          %v2312 = vadd.f32 %v1773, %v2225
          %v2313 = vadd.f32 %v1776, %v2228
          %v2314 = vadd.f32 %v1779, %v2231
          %v2315 = vadd.f32 %v1782, %v2234
          %v2316 = vadd.f32 %v1785, %v2237
          %v2317 = vadd.f32 %v1788, %v2240
          %v2318 = vadd.f32 %v1791, %v2243
          %v2319 = vadd.f32 %v1794, %v2246
          %v2320 = vadd.f32 %v1797, %v2249
          %v2321 = vadd.f32 %v1800, %v2252
          %v2322 = vadd.f32 %v1803, %v2255
          %v2323 = vadd.f32 %v1806, %v2258
          %v2324 = vadd.f32 %v1809, %v2261
          %v2325 = vadd.f32 %v1812, %v2264
          %v2326 = vadd.f32 %v1815, %v2267
          %v2327 = vadd.f32 %v1818, %v2270
          %v2328 = vadd.f32 %v1821, %v2273
          %v2329 = vadd.f32 %v1824, %v2276
          %v2330 = vadd.f32 %v1827, %v2279
          %v2331 = vadd.f32 %v1830, %v2282
          %v2332 = vadd.f32 %v1833, %v2285
          %v2333 = vadd.f32 %v1836, %v2288
          %v2334 = vadd.f32 %v1839, %v2291
          %v2335 = vadd.f32 %v1842, %v2294
          %v2336 = vadd.f32 %v1845, %v2297
          %v2337 = vadd.f32 %v1848, %v2300
          %v2338 = vadd.f32 %v1851, %v2303
          %v2339 = vadd.f32 %v1854, %v2306
          %v2340 = vld [vmem:[#allocation20] sm:$0xff]
          %v2341 = vld [vmem:[#allocation20 + $0x8] sm:$0xff]
          %v2342 = vld [vmem:[#allocation20 + $0x10] sm:$0xff]
          %v2343 = vld [vmem:[#allocation20 + $0x18] sm:$0xff]
          %v2344 = vld [vmem:[#allocation20 + $0x20] sm:$0xff]
          %v2345 = vld [vmem:[#allocation20 + $0x28] sm:$0xff]
          %v2346 = vld [vmem:[#allocation20 + $0x30] sm:$0xff]
          %v2347 = vld [vmem:[#allocation20 + $0x38] sm:$0xff]
          %v2348 = vld [vmem:[#allocation20 + $0x40] sm:$0xff]
          %v2349 = vld [vmem:[#allocation20 + $0x48] sm:$0xff]
          %v2350 = vld [vmem:[#allocation20 + $0x50] sm:$0xff]
          %v2351 = vld [vmem:[#allocation20 + $0x58] sm:$0xff]
          %v2352 = vld [vmem:[#allocation20 + $0x60] sm:$0xff]
          %v2353 = vld [vmem:[#allocation20 + $0x68] sm:$0xff]
          %v2354 = vld [vmem:[#allocation20 + $0x70] sm:$0xff]
          %v2355 = vld [vmem:[#allocation20 + $0x78] sm:$0xff]
          %v2356 = vperm.slane %v1369, 5
          %2357 = vmatpush.msra.mxu0 %v2355
          %2358 = vmatpush.msra.mxu0 %v2354
          %2359 = vmatpush.msra.mxu0 %v2353
          %2360 = vmatpush.msra.mxu0 %v2352
          %2361 = vmatpush.msra.mxu0 %v2351
          %2362 = vmatpush.msra.mxu0 %v2350
          %2363 = vmatpush.msra.mxu0 %v2349
          %2364 = vmatpush.msra.mxu0 %v2348
          %2365 = vmatpush.msra.mxu0 %v2347
          %2366 = vmatpush.msra.mxu0 %v2346
          %2367 = vmatpush.msra.mxu0 %v2345
          %2368 = vmatpush.msra.mxu0 %v2344
          %2369 = vmatpush.msra.mxu0 %v2343
          %2370 = vmatpush.msra.mxu0 %v2342
          %2371 = vmatpush.msra.mxu0 %v2341
          %2372 = vmatpush.msra.mxu0 %v2340
          %2373 = vmatmul.f32.gmra.mxu0 %v2308
          %v2374 = vpop.f32.mrf.mxu0
          %v2375 = vadd.f32 %v2356, %v2374
          %2376 = vmatmul.f32.gmra.mxu0 %v2309
          %v2377 = vpop.f32.mrf.mxu0
          %v2378 = vadd.f32 %v2356, %v2377
          %2379 = vmatmul.f32.gmra.mxu0 %v2310
          %v2380 = vpop.f32.mrf.mxu0
          %v2381 = vadd.f32 %v2356, %v2380
          %2382 = vmatmul.f32.gmra.mxu0 %v2311
          %v2383 = vpop.f32.mrf.mxu0
          %v2384 = vadd.f32 %v2356, %v2383
          %2385 = vmatmul.f32.gmra.mxu0 %v2312
          %v2386 = vpop.f32.mrf.mxu0
          %v2387 = vadd.f32 %v2356, %v2386
          %2388 = vmatmul.f32.gmra.mxu0 %v2313
          %v2389 = vpop.f32.mrf.mxu0
          %v2390 = vadd.f32 %v2356, %v2389
          %2391 = vmatmul.f32.gmra.mxu0 %v2314
          %v2392 = vpop.f32.mrf.mxu0
          %v2393 = vadd.f32 %v2356, %v2392
          %2394 = vmatmul.f32.gmra.mxu0 %v2315
          %v2395 = vpop.f32.mrf.mxu0
          %v2396 = vadd.f32 %v2356, %v2395
          %2397 = vmatmul.f32.gmra.mxu0 %v2316
          %v2398 = vpop.f32.mrf.mxu0
          %v2399 = vadd.f32 %v2356, %v2398
          %2400 = vmatmul.f32.gmra.mxu0 %v2317
          %v2401 = vpop.f32.mrf.mxu0
          %v2402 = vadd.f32 %v2356, %v2401
          %2403 = vmatmul.f32.gmra.mxu0 %v2318
          %v2404 = vpop.f32.mrf.mxu0
          %v2405 = vadd.f32 %v2356, %v2404
          %2406 = vmatmul.f32.gmra.mxu0 %v2319
          %v2407 = vpop.f32.mrf.mxu0
          %v2408 = vadd.f32 %v2356, %v2407
          %2409 = vmatmul.f32.gmra.mxu0 %v2320
          %v2410 = vpop.f32.mrf.mxu0
          %v2411 = vadd.f32 %v2356, %v2410
          %2412 = vmatmul.f32.gmra.mxu0 %v2321
          %v2413 = vpop.f32.mrf.mxu0
          %v2414 = vadd.f32 %v2356, %v2413
          %2415 = vmatmul.f32.gmra.mxu0 %v2322
          %v2416 = vpop.f32.mrf.mxu0
          %v2417 = vadd.f32 %v2356, %v2416
          %2418 = vmatmul.f32.gmra.mxu0 %v2323
          %v2419 = vpop.f32.mrf.mxu0
          %v2420 = vadd.f32 %v2356, %v2419
          %2421 = vmatmul.f32.gmra.mxu0 %v2324
          %v2422 = vpop.f32.mrf.mxu0
          %v2423 = vadd.f32 %v2356, %v2422
          %2424 = vmatmul.f32.gmra.mxu0 %v2325
          %v2425 = vpop.f32.mrf.mxu0
          %v2426 = vadd.f32 %v2356, %v2425
          %2427 = vmatmul.f32.gmra.mxu0 %v2326
          %v2428 = vpop.f32.mrf.mxu0
          %v2429 = vadd.f32 %v2356, %v2428
          %2430 = vmatmul.f32.gmra.mxu0 %v2327
          %v2431 = vpop.f32.mrf.mxu0
          %v2432 = vadd.f32 %v2356, %v2431
          %2433 = vmatmul.f32.gmra.mxu0 %v2328
          %v2434 = vpop.f32.mrf.mxu0
          %v2435 = vadd.f32 %v2356, %v2434
          %2436 = vmatmul.f32.gmra.mxu0 %v2329
          %v2437 = vpop.f32.mrf.mxu0
          %v2438 = vadd.f32 %v2356, %v2437
          %2439 = vmatmul.f32.gmra.mxu0 %v2330
          %v2440 = vpop.f32.mrf.mxu0
          %v2441 = vadd.f32 %v2356, %v2440
          %2442 = vmatmul.f32.gmra.mxu0 %v2331
          %v2443 = vpop.f32.mrf.mxu0
          %v2444 = vadd.f32 %v2356, %v2443
          %2445 = vmatmul.f32.gmra.mxu0 %v2332
          %v2446 = vpop.f32.mrf.mxu0
          %v2447 = vadd.f32 %v2356, %v2446
          %2448 = vmatmul.f32.gmra.mxu0 %v2333
          %v2449 = vpop.f32.mrf.mxu0
          %v2450 = vadd.f32 %v2356, %v2449
          %2451 = vmatmul.f32.gmra.mxu0 %v2334
          %v2452 = vpop.f32.mrf.mxu0
          %v2453 = vadd.f32 %v2356, %v2452
          %2454 = vmatmul.f32.gmra.mxu0 %v2335
          %v2455 = vpop.f32.mrf.mxu0
          %v2456 = vadd.f32 %v2356, %v2455
          %2457 = vmatmul.f32.gmra.mxu0 %v2336
          %v2458 = vpop.f32.mrf.mxu0
          %v2459 = vadd.f32 %v2356, %v2458
          %2460 = vmatmul.f32.gmra.mxu0 %v2337
          %v2461 = vpop.f32.mrf.mxu0
          %v2462 = vadd.f32 %v2356, %v2461
          %2463 = vmatmul.f32.gmra.mxu0 %v2338
          %v2464 = vpop.f32.mrf.mxu0
          %v2465 = vadd.f32 %v2356, %v2464
          %2466 = vmatmul.f32.gmra.mxu0 %v2339
          %v2467 = vpop.f32.mrf.mxu0
          %v2468 = vadd.f32 %v2356, %v2467
          %2469 = vdwg.mxu0
          %v2470 = vmax.f32 %v2375, 0.0
          %v2471 = vmax.f32 %v2378, 0.0
          %v2472 = vmax.f32 %v2381, 0.0
          %v2473 = vmax.f32 %v2384, 0.0
          %v2474 = vmax.f32 %v2387, 0.0
          %v2475 = vmax.f32 %v2390, 0.0
          %v2476 = vmax.f32 %v2393, 0.0
          %v2477 = vmax.f32 %v2396, 0.0
          %v2478 = vmax.f32 %v2399, 0.0
          %v2479 = vmax.f32 %v2402, 0.0
          %v2480 = vmax.f32 %v2405, 0.0
          %v2481 = vmax.f32 %v2408, 0.0
          %v2482 = vmax.f32 %v2411, 0.0
          %v2483 = vmax.f32 %v2414, 0.0
          %v2484 = vmax.f32 %v2417, 0.0
          %v2485 = vmax.f32 %v2420, 0.0
          %v2486 = vmax.f32 %v2423, 0.0
          %v2487 = vmax.f32 %v2426, 0.0
          %v2488 = vmax.f32 %v2429, 0.0
          %v2489 = vmax.f32 %v2432, 0.0
          %v2490 = vmax.f32 %v2435, 0.0
          %v2491 = vmax.f32 %v2438, 0.0
          %v2492 = vmax.f32 %v2441, 0.0
          %v2493 = vmax.f32 %v2444, 0.0
          %v2494 = vmax.f32 %v2447, 0.0
          %v2495 = vmax.f32 %v2450, 0.0
          %v2496 = vmax.f32 %v2453, 0.0
          %v2497 = vmax.f32 %v2456, 0.0
          %v2498 = vmax.f32 %v2459, 0.0
          %v2499 = vmax.f32 %v2462, 0.0
          %v2500 = vmax.f32 %v2465, 0.0
          %v2501 = vmax.f32 %v2468, 0.0
          %v2502 = vperm.slane %v1369, 6
          %v2503 = vmul.f32 %v2470, %v2502
          %v2504 = vmul.f32 %v2471, %v2502
          %v2505 = vmul.f32 %v2472, %v2502
          %v2506 = vmul.f32 %v2473, %v2502
          %v2507 = vmul.f32 %v2474, %v2502
          %v2508 = vmul.f32 %v2475, %v2502
          %v2509 = vmul.f32 %v2476, %v2502
          %v2510 = vmul.f32 %v2477, %v2502
          %v2511 = vmul.f32 %v2478, %v2502
          %v2512 = vmul.f32 %v2479, %v2502
          %v2513 = vmul.f32 %v2480, %v2502
          %v2514 = vmul.f32 %v2481, %v2502
          %v2515 = vmul.f32 %v2482, %v2502
          %v2516 = vmul.f32 %v2483, %v2502
          %v2517 = vmul.f32 %v2484, %v2502
          %v2518 = vmul.f32 %v2485, %v2502
          %v2519 = vmul.f32 %v2486, %v2502
          %v2520 = vmul.f32 %v2487, %v2502
          %v2521 = vmul.f32 %v2488, %v2502
          %v2522 = vmul.f32 %v2489, %v2502
          %v2523 = vmul.f32 %v2490, %v2502
          %v2524 = vmul.f32 %v2491, %v2502
          %v2525 = vmul.f32 %v2492, %v2502
          %v2526 = vmul.f32 %v2493, %v2502
          %v2527 = vmul.f32 %v2494, %v2502
          %v2528 = vmul.f32 %v2495, %v2502
          %v2529 = vmul.f32 %v2496, %v2502
          %v2530 = vmul.f32 %v2497, %v2502
          %v2531 = vmul.f32 %v2498, %v2502
          %v2532 = vmul.f32 %v2499, %v2502
          %v2533 = vmul.f32 %v2500, %v2502
          %v2534 = vmul.f32 %v2501, %v2502
          %2535 = vadd.xlane.f32.xlu0 %v2503
          %v2536 = vpop.xlane.xlu0 %2535
          %2537 = vadd.xlane.f32.xlu0 %v2504
          %v2538 = vpop.xlane.xlu0 %2537
          %2539 = vadd.xlane.f32.xlu0 %v2505
          %v2540 = vpop.xlane.xlu0 %2539
          %2541 = vadd.xlane.f32.xlu0 %v2506
          %v2542 = vpop.xlane.xlu0 %2541
          %2543 = vadd.xlane.f32.xlu0 %v2507
          %v2544 = vpop.xlane.xlu0 %2543
          %2545 = vadd.xlane.f32.xlu0 %v2508
          %v2546 = vpop.xlane.xlu0 %2545
          %2547 = vadd.xlane.f32.xlu0 %v2509
          %v2548 = vpop.xlane.xlu0 %2547
          %2549 = vadd.xlane.f32.xlu0 %v2510
          %v2550 = vpop.xlane.xlu0 %2549
          %2551 = vadd.xlane.f32.xlu0 %v2511
          %v2552 = vpop.xlane.xlu0 %2551
          %2553 = vadd.xlane.f32.xlu0 %v2512
          %v2554 = vpop.xlane.xlu0 %2553
          %2555 = vadd.xlane.f32.xlu0 %v2513
          %v2556 = vpop.xlane.xlu0 %2555
          %2557 = vadd.xlane.f32.xlu0 %v2514
          %v2558 = vpop.xlane.xlu0 %2557
          %2559 = vadd.xlane.f32.xlu0 %v2515
          %v2560 = vpop.xlane.xlu0 %2559
          %2561 = vadd.xlane.f32.xlu0 %v2516
          %v2562 = vpop.xlane.xlu0 %2561
          %2563 = vadd.xlane.f32.xlu0 %v2517
          %v2564 = vpop.xlane.xlu0 %2563
          %2565 = vadd.xlane.f32.xlu0 %v2518
          %v2566 = vpop.xlane.xlu0 %2565
          %2567 = vadd.xlane.f32.xlu0 %v2519
          %v2568 = vpop.xlane.xlu0 %2567
          %2569 = vadd.xlane.f32.xlu0 %v2520
          %v2570 = vpop.xlane.xlu0 %2569
          %2571 = vadd.xlane.f32.xlu0 %v2521
          %v2572 = vpop.xlane.xlu0 %2571
          %2573 = vadd.xlane.f32.xlu0 %v2522
          %v2574 = vpop.xlane.xlu0 %2573
          %2575 = vadd.xlane.f32.xlu0 %v2523
          %v2576 = vpop.xlane.xlu0 %2575
          %2577 = vadd.xlane.f32.xlu0 %v2524
          %v2578 = vpop.xlane.xlu0 %2577
          %2579 = vadd.xlane.f32.xlu0 %v2525
          %v2580 = vpop.xlane.xlu0 %2579
          %2581 = vadd.xlane.f32.xlu0 %v2526
          %v2582 = vpop.xlane.xlu0 %2581
          %2583 = vadd.xlane.f32.xlu0 %v2527
          %v2584 = vpop.xlane.xlu0 %2583
          %2585 = vadd.xlane.f32.xlu0 %v2528
          %v2586 = vpop.xlane.xlu0 %2585
          %2587 = vadd.xlane.f32.xlu0 %v2529
          %v2588 = vpop.xlane.xlu0 %2587
          %2589 = vadd.xlane.f32.xlu0 %v2530
          %v2590 = vpop.xlane.xlu0 %2589
          %2591 = vadd.xlane.f32.xlu0 %v2531
          %v2592 = vpop.xlane.xlu0 %2591
          %2593 = vadd.xlane.f32.xlu0 %v2532
          %v2594 = vpop.xlane.xlu0 %2593
          %2595 = vadd.xlane.f32.xlu0 %v2533
          %v2596 = vpop.xlane.xlu0 %2595
          %2597 = vadd.xlane.f32.xlu0 %v2534
          %v2598 = vpop.xlane.xlu0 %2597
          %s2599 = sld [smem:[#allocation23]]
          %v2600 = vstv %s2599
          %v2601 = vmul.f32 %v1953, %v2600
          %v2602 = vmul.f32 %v1955, %v2600
          %v2603 = vmul.f32 %v1957, %v2600
          %v2604 = vmul.f32 %v1959, %v2600
          %v2605 = vmul.f32 %v1961, %v2600
          %v2606 = vmul.f32 %v1963, %v2600
          %v2607 = vmul.f32 %v1965, %v2600
          %v2608 = vmul.f32 %v1967, %v2600
          %v2609 = vmul.f32 %v1969, %v2600
          %v2610 = vmul.f32 %v1971, %v2600
          %v2611 = vmul.f32 %v1973, %v2600
          %v2612 = vmul.f32 %v1975, %v2600
          %v2613 = vmul.f32 %v1977, %v2600
          %v2614 = vmul.f32 %v1979, %v2600
          %v2615 = vmul.f32 %v1981, %v2600
          %v2616 = vmul.f32 %v1983, %v2600
          %v2617 = vmul.f32 %v1985, %v2600
          %v2618 = vmul.f32 %v1987, %v2600
          %v2619 = vmul.f32 %v1989, %v2600
          %v2620 = vmul.f32 %v1991, %v2600
          %v2621 = vmul.f32 %v1993, %v2600
          %v2622 = vmul.f32 %v1995, %v2600
          %v2623 = vmul.f32 %v1997, %v2600
          %v2624 = vmul.f32 %v1999, %v2600
          %v2625 = vmul.f32 %v2001, %v2600
          %v2626 = vmul.f32 %v2003, %v2600
          %v2627 = vmul.f32 %v2005, %v2600
          %v2628 = vmul.f32 %v2007, %v2600
          %v2629 = vmul.f32 %v2009, %v2600
          %v2630 = vmul.f32 %v2011, %v2600
          %v2631 = vmul.f32 %v2013, %v2600
          %v2632 = vmul.f32 %v2015, %v2600
          %v2633 = vadd.f32 %v2536, %v2601
          %v2634 = vadd.f32 %v2538, %v2602
          %v2635 = vadd.f32 %v2540, %v2603
          %v2636 = vadd.f32 %v2542, %v2604
          %v2637 = vadd.f32 %v2544, %v2605
          %v2638 = vadd.f32 %v2546, %v2606
          %v2639 = vadd.f32 %v2548, %v2607
          %v2640 = vadd.f32 %v2550, %v2608
          %v2641 = vadd.f32 %v2552, %v2609
          %v2642 = vadd.f32 %v2554, %v2610
          %v2643 = vadd.f32 %v2556, %v2611
          %v2644 = vadd.f32 %v2558, %v2612
          %v2645 = vadd.f32 %v2560, %v2613
          %v2646 = vadd.f32 %v2562, %v2614
          %v2647 = vadd.f32 %v2564, %v2615
          %v2648 = vadd.f32 %v2566, %v2616
          %v2649 = vadd.f32 %v2568, %v2617
          %v2650 = vadd.f32 %v2570, %v2618
          %v2651 = vadd.f32 %v2572, %v2619
          %v2652 = vadd.f32 %v2574, %v2620
          %v2653 = vadd.f32 %v2576, %v2621
          %v2654 = vadd.f32 %v2578, %v2622
          %v2655 = vadd.f32 %v2580, %v2623
          %v2656 = vadd.f32 %v2582, %v2624
          %v2657 = vadd.f32 %v2584, %v2625
          %v2658 = vadd.f32 %v2586, %v2626
          %v2659 = vadd.f32 %v2588, %v2627
          %v2660 = vadd.f32 %v2590, %v2628
          %v2661 = vadd.f32 %v2592, %v2629
          %v2662 = vadd.f32 %v2594, %v2630
          %v2663 = vadd.f32 %v2596, %v2631
          %v2664 = vadd.f32 %v2598, %v2632
          %s2665 = sld [smem:[#allocation23 + $0x1]]
          %v2666 = vstv %s2665
          %v2667 = vmul.f32 %v1370, %v2666
          %v2668 = vmul.f32 %v1371, %v2666
          %v2669 = vmul.f32 %v1372, %v2666
          %v2670 = vmul.f32 %v1373, %v2666
          %v2671 = vmul.f32 %v1374, %v2666
          %v2672 = vmul.f32 %v1375, %v2666
          %v2673 = vmul.f32 %v1376, %v2666
          %v2674 = vmul.f32 %v1377, %v2666
          %v2675 = vmul.f32 %v1378, %v2666
          %v2676 = vmul.f32 %v1379, %v2666
          %v2677 = vmul.f32 %v1380, %v2666
          %v2678 = vmul.f32 %v1381, %v2666
          %v2679 = vmul.f32 %v1382, %v2666
          %v2680 = vmul.f32 %v1383, %v2666
          %v2681 = vmul.f32 %v1384, %v2666
          %v2682 = vmul.f32 %v1385, %v2666
          %v2683 = vmul.f32 %v1386, %v2666
          %v2684 = vmul.f32 %v1387, %v2666
          %v2685 = vmul.f32 %v1388, %v2666
          %v2686 = vmul.f32 %v1389, %v2666
          %v2687 = vmul.f32 %v1390, %v2666
          %v2688 = vmul.f32 %v1391, %v2666
          %v2689 = vmul.f32 %v1392, %v2666
          %v2690 = vmul.f32 %v1393, %v2666
          %v2691 = vmul.f32 %v1394, %v2666
          %v2692 = vmul.f32 %v1395, %v2666
          %v2693 = vmul.f32 %v1396, %v2666
          %v2694 = vmul.f32 %v1397, %v2666
          %v2695 = vmul.f32 %v1398, %v2666
          %v2696 = vmul.f32 %v1399, %v2666
          %v2697 = vmul.f32 %v1400, %v2666
          %v2698 = vmul.f32 %v1401, %v2666
          %v2699 = vadd.f32 %v2633, %v2667
          %v2700 = vadd.f32 %v2634, %v2668
          %v2701 = vadd.f32 %v2635, %v2669
          %v2702 = vadd.f32 %v2636, %v2670
          %v2703 = vadd.f32 %v2637, %v2671
          %v2704 = vadd.f32 %v2638, %v2672
          %v2705 = vadd.f32 %v2639, %v2673
          %v2706 = vadd.f32 %v2640, %v2674
          %v2707 = vadd.f32 %v2641, %v2675
          %v2708 = vadd.f32 %v2642, %v2676
          %v2709 = vadd.f32 %v2643, %v2677
          %v2710 = vadd.f32 %v2644, %v2678
          %v2711 = vadd.f32 %v2645, %v2679
          %v2712 = vadd.f32 %v2646, %v2680
          %v2713 = vadd.f32 %v2647, %v2681
          %v2714 = vadd.f32 %v2648, %v2682
          %v2715 = vadd.f32 %v2649, %v2683
          %v2716 = vadd.f32 %v2650, %v2684
          %v2717 = vadd.f32 %v2651, %v2685
          %v2718 = vadd.f32 %v2652, %v2686
          %v2719 = vadd.f32 %v2653, %v2687
          %v2720 = vadd.f32 %v2654, %v2688
          %v2721 = vadd.f32 %v2655, %v2689
          %v2722 = vadd.f32 %v2656, %v2690
          %v2723 = vadd.f32 %v2657, %v2691
          %v2724 = vadd.f32 %v2658, %v2692
          %v2725 = vadd.f32 %v2659, %v2693
          %v2726 = vadd.f32 %v2660, %v2694
          %v2727 = vadd.f32 %v2661, %v2695
          %v2728 = vadd.f32 %v2662, %v2696
          %v2729 = vadd.f32 %v2663, %v2697
          %v2730 = vadd.f32 %v2664, %v2698
          %s2731 = sld [smem:[#allocation23 + $0x2]]
          %v2732 = vstv %s2731
          %v2733 = vadd.f32 %v2699, %v2732
          %v2734 = vadd.f32 %v2700, %v2732
          %v2735 = vadd.f32 %v2701, %v2732
          %v2736 = vadd.f32 %v2702, %v2732
          %v2737 = vadd.f32 %v2703, %v2732
          %v2738 = vadd.f32 %v2704, %v2732
          %v2739 = vadd.f32 %v2705, %v2732
          %v2740 = vadd.f32 %v2706, %v2732
          %v2741 = vadd.f32 %v2707, %v2732
          %v2742 = vadd.f32 %v2708, %v2732
          %v2743 = vadd.f32 %v2709, %v2732
          %v2744 = vadd.f32 %v2710, %v2732
          %v2745 = vadd.f32 %v2711, %v2732
          %v2746 = vadd.f32 %v2712, %v2732
          %v2747 = vadd.f32 %v2713, %v2732
          %v2748 = vadd.f32 %v2714, %v2732
          %v2749 = vadd.f32 %v2715, %v2732
          %v2750 = vadd.f32 %v2716, %v2732
          %v2751 = vadd.f32 %v2717, %v2732
          %v2752 = vadd.f32 %v2718, %v2732
          %v2753 = vadd.f32 %v2719, %v2732
          %v2754 = vadd.f32 %v2720, %v2732
          %v2755 = vadd.f32 %v2721, %v2732
          %v2756 = vadd.f32 %v2722, %v2732
          %v2757 = vadd.f32 %v2723, %v2732
          %v2758 = vadd.f32 %v2724, %v2732
          %v2759 = vadd.f32 %v2725, %v2732
          %v2760 = vadd.f32 %v2726, %v2732
          %v2761 = vadd.f32 %v2727, %v2732
          %v2762 = vadd.f32 %v2728, %v2732
          %v2763 = vadd.f32 %v2729, %v2732
          %v2764 = vadd.f32 %v2730, %v2732
          %2797 = vrot.lane.b32.xlu0 %v2733, 108
          %v2798 = vpop.permute.xlu0 %2797
          %2799 = vrot.lane.b32.xlu0 %v2734, 108
          %v2800 = vpop.permute.xlu0 %2799
          %2801 = vrot.lane.b32.xlu0 %v2735, 108
          %v2802 = vpop.permute.xlu0 %2801
          %2803 = vrot.lane.b32.xlu0 %v2736, 108
          %v2804 = vpop.permute.xlu0 %2803
          %2805 = vrot.lane.b32.xlu0 %v2737, 108
          %v2806 = vpop.permute.xlu0 %2805
          %2807 = vrot.lane.b32.xlu0 %v2738, 108
          %v2808 = vpop.permute.xlu0 %2807
          %2809 = vrot.lane.b32.xlu0 %v2739, 108
          %v2810 = vpop.permute.xlu0 %2809
          %2811 = vrot.lane.b32.xlu0 %v2740, 108
          %v2812 = vpop.permute.xlu0 %2811
          %2813 = vrot.lane.b32.xlu0 %v2741, 108
          %v2814 = vpop.permute.xlu0 %2813
          %2815 = vrot.lane.b32.xlu0 %v2742, 108
          %v2816 = vpop.permute.xlu0 %2815
          %2817 = vrot.lane.b32.xlu0 %v2743, 108
          %v2818 = vpop.permute.xlu0 %2817
          %2819 = vrot.lane.b32.xlu0 %v2744, 108
          %v2820 = vpop.permute.xlu0 %2819
          %2821 = vrot.lane.b32.xlu0 %v2745, 108
          %v2822 = vpop.permute.xlu0 %2821
          %2823 = vrot.lane.b32.xlu0 %v2746, 108
          %v2824 = vpop.permute.xlu0 %2823
          %2825 = vrot.lane.b32.xlu0 %v2747, 108
          %v2826 = vpop.permute.xlu0 %2825
          %2827 = vrot.lane.b32.xlu0 %v2748, 108
          %v2828 = vpop.permute.xlu0 %2827
          %2829 = vrot.lane.b32.xlu0 %v2749, 108
          %v2830 = vpop.permute.xlu0 %2829
          %2831 = vrot.lane.b32.xlu0 %v2750, 108
          %v2832 = vpop.permute.xlu0 %2831
          %2833 = vrot.lane.b32.xlu0 %v2751, 108
          %v2834 = vpop.permute.xlu0 %2833
          %2835 = vrot.lane.b32.xlu0 %v2752, 108
          %v2836 = vpop.permute.xlu0 %2835
          %2837 = vrot.lane.b32.xlu0 %v2753, 108
          %v2838 = vpop.permute.xlu0 %2837
          %2839 = vrot.lane.b32.xlu0 %v2754, 108
          %v2840 = vpop.permute.xlu0 %2839
          %2841 = vrot.lane.b32.xlu0 %v2755, 108
          %v2842 = vpop.permute.xlu0 %2841
          %2843 = vrot.lane.b32.xlu0 %v2756, 108
          %v2844 = vpop.permute.xlu0 %2843
          %2845 = vrot.lane.b32.xlu0 %v2757, 108
          %v2846 = vpop.permute.xlu0 %2845
          %2847 = vrot.lane.b32.xlu0 %v2758, 108
          %v2848 = vpop.permute.xlu0 %2847
          %2849 = vrot.lane.b32.xlu0 %v2759, 108
          %v2850 = vpop.permute.xlu0 %2849
          %2851 = vrot.lane.b32.xlu0 %v2760, 108
          %v2852 = vpop.permute.xlu0 %2851
          %2853 = vrot.lane.b32.xlu0 %v2761, 108
          %v2854 = vpop.permute.xlu0 %2853
          %2855 = vrot.lane.b32.xlu0 %v2762, 108
          %v2856 = vpop.permute.xlu0 %2855
          %2857 = vrot.lane.b32.xlu0 %v2763, 108
          %v2858 = vpop.permute.xlu0 %2857
          %2859 = vrot.lane.b32.xlu0 %v2764, 108
          %v2860 = vpop.permute.xlu0 %2859
          %vm2893 = vcmask 7168
          %2894 = vst.msk [vmem:[%s781] sm:$0xff] %vm2893, %v2798
          %2895 = vst.msk [vmem:[%s781 + $0x8] sm:$0xff] %vm2893, %v2800
          %2896 = vst.msk [vmem:[%s781 + $0x10] sm:$0xff] %vm2893, %v2802
          %2897 = vst.msk [vmem:[%s781 + $0x18] sm:$0xff] %vm2893, %v2804
          %2898 = vst.msk [vmem:[%s781 + $0x20] sm:$0xff] %vm2893, %v2806
          %2899 = vst.msk [vmem:[%s781 + $0x28] sm:$0xff] %vm2893, %v2808
          %2900 = vst.msk [vmem:[%s781 + $0x30] sm:$0xff] %vm2893, %v2810
          %2901 = vst.msk [vmem:[%s781 + $0x38] sm:$0xff] %vm2893, %v2812
          %2902 = vst.msk [vmem:[%s781 + $0x40] sm:$0xff] %vm2893, %v2814
          %2903 = vst.msk [vmem:[%s781 + $0x48] sm:$0xff] %vm2893, %v2816
          %2904 = vst.msk [vmem:[%s781 + $0x50] sm:$0xff] %vm2893, %v2818
          %2905 = vst.msk [vmem:[%s781 + $0x58] sm:$0xff] %vm2893, %v2820
          %2906 = vst.msk [vmem:[%s781 + $0x60] sm:$0xff] %vm2893, %v2822
          %2907 = vst.msk [vmem:[%s781 + $0x68] sm:$0xff] %vm2893, %v2824
          %2908 = vst.msk [vmem:[%s781 + $0x70] sm:$0xff] %vm2893, %v2826
          %2909 = vst.msk [vmem:[%s781 + $0x78] sm:$0xff] %vm2893, %v2828
          %2910 = vst.msk [vmem:[%s781 + $0x80] sm:$0xff] %vm2893, %v2830
          %2911 = vst.msk [vmem:[%s781 + $0x88] sm:$0xff] %vm2893, %v2832
          %2912 = vst.msk [vmem:[%s781 + $0x90] sm:$0xff] %vm2893, %v2834
          %2913 = vst.msk [vmem:[%s781 + $0x98] sm:$0xff] %vm2893, %v2836
          %2914 = vst.msk [vmem:[%s781 + $0xa0] sm:$0xff] %vm2893, %v2838
          %2915 = vst.msk [vmem:[%s781 + $0xa8] sm:$0xff] %vm2893, %v2840
          %2916 = vst.msk [vmem:[%s781 + $0xb0] sm:$0xff] %vm2893, %v2842
          %2917 = vst.msk [vmem:[%s781 + $0xb8] sm:$0xff] %vm2893, %v2844
          %2918 = vst.msk [vmem:[%s781 + $0xc0] sm:$0xff] %vm2893, %v2846
          %2919 = vst.msk [vmem:[%s781 + $0xc8] sm:$0xff] %vm2893, %v2848
          %2920 = vst.msk [vmem:[%s781 + $0xd0] sm:$0xff] %vm2893, %v2850
          %2921 = vst.msk [vmem:[%s781 + $0xd8] sm:$0xff] %vm2893, %v2852
          %2922 = vst.msk [vmem:[%s781 + $0xe0] sm:$0xff] %vm2893, %v2854
          %2923 = vst.msk [vmem:[%s781 + $0xe8] sm:$0xff] %vm2893, %v2856
          %2924 = vst.msk [vmem:[%s781 + $0xf0] sm:$0xff] %vm2893, %v2858
          %2925 = vst.msk [vmem:[%s781 + $0xf8] sm:$0xff] %vm2893, %v2860
        $region132: #{tpu_custom_call.1} parent=71 // pred_fallthru
          _
        %s2926 = smul.u32 32, %s42
        %p2927 = scmp.lt.s32.totalorder %s2926, 63
        %s2928 = scalar_select %p2927, %s2926, 63
        %s2929 = smul.addr %s2928, 8
        %s2930 = scalar_lea.vmem %s13, %s2929
        // Predicated region
        $region133: #{tpu_custom_call.1} parent=71 // pred_check
          %p2931 = pneg %p370
        $region134: #{tpu_custom_call.1} parent=71 // pred_check_branch
          %2933 = sbr.rel (%p2931) target = $region136
        $region135: #{tpu_custom_call.1} parent=71 // pred_region
          %s2934 = smul.u32 32, %s42
        $region136: #{tpu_custom_call.1} parent=71 // pred_fallthru
          _
      $region72: #{tpu_custom_call.1} parent=5 // pred_fallthru
        _
      %p2935 = scmp.le.s32.totalorder 2, %s33
      // Predicated region
      $region137: #{tpu_custom_call.1} parent=5 // pred_check
        %p2936 = pneg %p2935
      $region138: #{tpu_custom_call.1} parent=5 // pred_check_branch
        %2938 = sbr.rel (%p2936) target = $region140
      $region139: #{tpu_custom_call.1} parent=5 // pred_region
        %s2939 = ssub.s32 %s33, 2
        // Predicated region
        $region141: #{tpu_custom_call.1} parent=139 // pred_check
          %p2940 = pneg %p376
        $region142: #{tpu_custom_call.1} parent=139 // pred_check_branch
          %2942 = sbr.rel (%p2940) target = $region144
        $region143: #{tpu_custom_call.1} parent=139 // pred_region
          %s2943 = smul.u32 32, %s44
          %p2944 = scmp.lt.s32.totalorder %s2943, 63
          %s2945 = scalar_select %p2944, %s2943, 63
          %s2946 = smul.addr %s2945, 8
          %s2947 = scalar_lea.vmem %s13, %s2946
        $region144: #{tpu_custom_call.1} parent=139 // pred_fallthru
          _
      $region140: #{tpu_custom_call.1} parent=5 // pred_fallthru
        _
    $region6: #{tpu_custom_call.1} parent=1 // loop_footer
      %s37 = sadd.s32 1, %s33
    $region7: #{tpu_custom_call.1} parent=1 // loop_footer_branch
      %32 = sbr.rel target = $region3
    $region8: #{tpu_custom_call.1} parent=1 // loop_exit
      _
    %2948 = vsyncpa [#allocation4], 1
    %s2949 = scalar_lea.sflag [#allocation4], 1
    %2950 = vsyncpa %s2949, 1
    %2951 = vsyncpa [#allocation7], 1
    %s2952 = scalar_lea.sflag [#allocation7], 1
    %2953 = vsyncpa %s2952, 1
    %2954 = vsyncpa [#allocation10], 1
    %s2955 = scalar_lea.sflag [#allocation10], 1
    %2956 = vsyncpa %s2955, 1
    %2957 = vsyncpa [#allocation13], 1
    %2958 = vsyncpa [#allocation16], 1
    %2959 = vsyncpa [#allocation19], 1
    %2960 = vsyncpa [#allocation22], 1
    %2961 = vsyncpa [#allocation5], 1
    %s2962 = scalar_lea.sflag [#allocation5], 1
    %2963 = vsyncpa %s2962, 1

</llo_original>
